<compile_context>
chip_gen: v7x
topology: tpu7x:2x2x1
jax: 0.10.0
libtpu: 0.0.40
codegen_flags: <defaults>
</compile_context>

<pallas_src>
import functools

import jax
import jax.numpy as jnp
from jax import lax
from jax.experimental import pallas as pl
from jax.experimental.pallas import tpu as pltpu


# ----------------------------------------------------------------------------
# Model hyper-parameters (the `params` dict passed to NetConv2D), small shapes.
# ----------------------------------------------------------------------------
PARAMS = dict(
    multi_block=True,
    conv1_ch_in=1, conv1_ch_out=32, conv1_kernel_size=3, conv1_stride=1, conv1_padding=1,
    pool1_kernel_size=2, pool1_stride=2, pool1_padding=0,
    conv2_ch_out=64, conv2_kernel_size=3, conv2_stride=1, conv2_padding=1,
    pool2_kernel_size=2, pool2_stride=2, pool2_padding=0,
)
BN_EPS = 1e-5
_VMEM_LIMIT = 32 * 1024 * 1024   # explicit & portable (v5e scoped default is 16 MiB)


def _conv_out_hw(h, w, k, s, pad):
    return (h + 2 * pad - k) // s + 1, (w + 2 * pad - k) // s + 1


def calculate_conv2d_block_output_size(n_timesteps, n_freq, p):
    # Inline replacement for the external `utils` helper used by the module.
    h, w = _conv_out_hw(n_timesteps, n_freq, p["conv1_kernel_size"],
                        p["conv1_stride"], p["conv1_padding"])
    h, w = _conv_out_hw(h, w, p["pool1_kernel_size"], p["pool1_stride"], p["pool1_padding"])
    ch = p["conv1_ch_out"]
    if p["multi_block"]:
        h, w = _conv_out_hw(h, w, p["conv2_kernel_size"], p["conv2_stride"], p["conv2_padding"])
        h, w = _conv_out_hw(h, w, p["pool2_kernel_size"], p["pool2_stride"], p["pool2_padding"])
        ch = p["conv2_ch_out"]
    return ch * h * w


# ----------------------------------------------------------------------------
# Pallas kernels
# ----------------------------------------------------------------------------

def _conv_bn_relu_kernel(x_ref, w_ref, b_ref, o_ref, *, ksize, h_out, w_out):
    """Fused Conv2d(stride=1) + folded-BatchNorm bias + ReLU for one batch element.

    x_ref: (1, Hp, Wp, Cin)          zero-padded NHWC activation, bf16
    w_ref: (ksize*ksize, Cin, Cout)  BN-folded weights, bf16, tap order (ky, kx)
    b_ref: (1, Cout)                 BN-folded bias, f32
    o_ref: (1, h_out, w_out, Cout)   bf16

    In-kernel im2col: accumulate ksize*ksize shifted-window matmuls in f32.
    """
    cin = w_ref.shape[1]
    cout = w_ref.shape[2]
    x = x_ref[0]                                           # (Hp, Wp, Cin) bf16
    acc = None
    tap = 0
    for dy in range(ksize):
        for dx in range(ksize):
            win = x[dy:dy + h_out, dx:dx + w_out, :]       # (h_out, w_out, Cin)
            a = win.reshape(h_out * w_out, cin)
            w_tap = w_ref[tap]                             # (Cin, Cout)
            if cin == 1:
                # Degenerate K=1 contraction: VPU broadcast-MAC, skip the MXU.
                contrib = a.astype(jnp.float32) * w_tap.astype(jnp.float32)
            else:
                contrib = jnp.dot(a, w_tap, preferred_element_type=jnp.float32)
            acc = contrib if acc is None else acc + contrib
            tap += 1
    y = jnp.maximum(acc + b_ref[...], 0.0)                 # bias (+BN) + ReLU in f32
    o_ref[0] = y.reshape(h_out, w_out, cout).astype(o_ref.dtype)


def _fc_softmax_kernel(x_ref, w_ref, b_ref, o_ref):
    """out = softmax(x @ w + b, axis=-1); single step, everything resident in VMEM."""
    logits = jnp.dot(x_ref[...], w_ref[...],
                     preferred_element_type=jnp.float32) + b_ref[...]
    m = jnp.max(logits, axis=-1, keepdims=True)
    e = jnp.exp(logits - m)
    s = jnp.sum(e, axis=-1, keepdims=True)
    o_ref[...] = (e / s).astype(o_ref.dtype)


# ----------------------------------------------------------------------------
# Pallas wrappers
# ----------------------------------------------------------------------------

def conv_bn_relu(x_nhwc, w_folded, b_folded, *, ksize, stride, padding):
    """x: (B,H,W,Cin) bf16; w: (k*k,Cin,Cout) bf16; b: (1,Cout) f32 -> (B,Ho,Wo,Cout) bf16."""
    # TODO(synk): only stride=1 convolutions implemented (the example params use stride 1).
    assert stride == 1
    B, H, W, Cin = x_nhwc.shape
    Cout = w_folded.shape[-1]
    xp = jnp.pad(x_nhwc, ((0, 0), (padding, padding), (padding, padding), (0, 0)))
    Hp, Wp = H + 2 * padding, W + 2 * padding
    Ho, Wo = Hp - ksize + 1, Wp - ksize + 1

    kernel = functools.partial(_conv_bn_relu_kernel, ksize=ksize, h_out=Ho, w_out=Wo)
    return pl.pallas_call(
        kernel,
        out_shape=jax.ShapeDtypeStruct((B, Ho, Wo, Cout), jnp.bfloat16),
        grid_spec=pltpu.PrefetchScalarGridSpec(
            num_scalar_prefetch=0,
            grid=(B,),
            in_specs=[
                pl.BlockSpec((1, Hp, Wp, Cin), lambda b: (b, 0, 0, 0)),
                pl.BlockSpec(tuple(w_folded.shape), lambda b: (0, 0, 0)),
                pl.BlockSpec(tuple(b_folded.shape), lambda b: (0, 0)),
            ],
            out_specs=pl.BlockSpec((1, Ho, Wo, Cout), lambda b: (b, 0, 0, 0)),
        ),
        compiler_params=pltpu.CompilerParams(
            dimension_semantics=("parallel",),
            vmem_limit_bytes=_VMEM_LIMIT),
    )(xp, w_folded, b_folded)


def fc_softmax(x, w_t, b):
    """x: (B,F) bf16; w_t: (F,N) bf16; b: (1,N) f32 -> softmax probs (B,N) f32."""
    B = x.shape[0]
    N = w_t.shape[1]
    return pl.pallas_call(
        _fc_softmax_kernel,
        out_shape=jax.ShapeDtypeStruct((B, N), jnp.float32),
        compiler_params=pltpu.CompilerParams(vmem_limit_bytes=_VMEM_LIMIT),
    )(x, w_t, b)


def max_pool(x_nhwc, *, ksize, stride, padding):
    # Kept as a tiny XLA reshape+max (activations here are <= 64 KiB).
    # TODO(synk): only kernel==stride, padding==0, divisible spatial dims implemented.
    assert ksize == stride and padding == 0
    B, H, W, C = x_nhwc.shape
    assert H % ksize == 0 and W % ksize == 0
    x = x_nhwc.reshape(B, H // ksize, ksize, W // ksize, ksize, C)
    return jnp.max(x, axis=(2, 4))


# ----------------------------------------------------------------------------
# Parameters (PyTorch layout) + one-time preparation (BN fold, transpose, bf16)
# ----------------------------------------------------------------------------

def init_raw_params(key, n_classes, feat_dim, p):
    ks = jax.random.split(key, 14)

    def conv(kw, kb, cin, cout, ksz, s=0.1):
        return dict(w=s * jax.random.normal(kw, (cout, cin, ksz, ksz), jnp.float32),
                    b=s * jax.random.normal(kb, (cout,), jnp.float32))

    def bn(kg, kbt, km, kv, c):
        return dict(gamma=1.0 + 0.1 * jax.random.normal(kg, (c,), jnp.float32),
                    beta=0.1 * jax.random.normal(kbt, (c,), jnp.float32),
                    mean=0.05 * jax.random.normal(km, (c,), jnp.float32),
                    var=jax.random.uniform(kv, (c,), jnp.float32, minval=0.5, maxval=1.5))

    raw = dict(
        conv1=conv(ks[0], ks[1], p["conv1_ch_in"], p["conv1_ch_out"], p["conv1_kernel_size"]),
        bn1=bn(ks[2], ks[3], ks[4], ks[5], p["conv1_ch_out"]),
        fc=dict(w=0.05 * jax.random.normal(ks[12], (n_classes, feat_dim), jnp.float32),
                b=0.05 * jax.random.normal(ks[13], (n_classes,), jnp.float32)),
    )
    if p["multi_block"]:
        raw["conv2"] = conv(ks[6], ks[7], p["conv1_ch_out"], p["conv2_ch_out"],
                            p["conv2_kernel_size"])
        raw["bn2"] = bn(ks[8], ks[9], ks[10], ks[11], p["conv2_ch_out"])
    return raw


def _fold_conv_bn(conv, bn):
    # Eval-mode BatchNorm folded into the conv weights/bias (exact).
    scale = bn["gamma"] / jnp.sqrt(bn["var"] + BN_EPS)
    w = conv["w"] * scale[:, None, None, None]                     # OIHW, scaled per O
    b = (conv["b"] - bn["mean"]) * scale + bn["beta"]
    cout, cin, kh, kw = w.shape
    # OIHW -> (KH, KW, Cin, Cout) -> (KH*KW, Cin, Cout), tap order (ky, kx)
    w_k = jnp.transpose(w, (2, 3, 1, 0)).reshape(kh * kw, cin, cout).astype(jnp.bfloat16)
    return w_k, b.reshape(1, cout).astype(jnp.float32)


def prepare_params(raw, p):
    w1, b1 = _fold_conv_bn(raw["conv1"], raw["bn1"])
    prepared = dict(conv1_w=w1, conv1_b=b1)
    if p["multi_block"]:
        w2, b2 = _fold_conv_bn(raw["conv2"], raw["bn2"])
        prepared.update(conv2_w=w2, conv2_b=b2)
    prepared["fc_w_t"] = raw["fc"]["w"].T.astype(jnp.bfloat16)     # (F, n_classes)
    prepared["fc_b"] = raw["fc"]["b"].reshape(1, -1).astype(jnp.float32)
    return prepared


# ----------------------------------------------------------------------------
# Forward (eval-mode NetConv2D semantics)
# ----------------------------------------------------------------------------

def netconv2d_forward(prepared, x_nchw, p):
    x = jnp.transpose(x_nchw, (0, 2, 3, 1)).astype(jnp.bfloat16)   # NCHW -> NHWC, bf16
    x = conv_bn_relu(x, prepared["conv1_w"], prepared["conv1_b"],
                     ksize=p["conv1_kernel_size"], stride=p["conv1_stride"],
                     padding=p["conv1_padding"])
    # Dropout(0.2): identity in eval mode.
    x = max_pool(x, ksize=p["pool1_kernel_size"], stride=p["pool1_stride"],
                 padding=p["pool1_padding"])
    if p["multi_block"]:
        x = conv_bn_relu(x, prepared["conv2_w"], prepared["conv2_b"],
                         ksize=p["conv2_kernel_size"], stride=p["conv2_stride"],
                         padding=p["conv2_padding"])
        x = max_pool(x, ksize=p["pool2_kernel_size"], stride=p["pool2_stride"],
                     padding=p["pool2_padding"])
    # nn.Flatten() on NCHW => channel-major flatten.
    B, H, W, C = x.shape
    x = jnp.transpose(x, (0, 3, 1, 2)).reshape(B, C * H * W)
    # fc -> Dropout(0.2) (identity in eval) -> Softmax(dim=1), fused in one kernel.
    return fc_softmax(x, prepared["fc_w_t"], prepared["fc_b"])


# ----------------------------------------------------------------------------
# Pure-JAX f32 reference (PyTorch layouts) for correctness checking
# ----------------------------------------------------------------------------

def reference_forward(raw, x_nchw, p):
    def block(x, conv, bn, stride, padding, pk, ps, pp):
        y = lax.conv_general_dilated(
            x, conv["w"], window_strides=(stride, stride),
            padding=((padding, padding), (padding, padding)),
            dimension_numbers=("NCHW", "OIHW", "NCHW"),
            precision=lax.Precision.HIGHEST)
        y = y + conv["b"][None, :, None, None]
        y = (y - bn["mean"][None, :, None, None]) / jnp.sqrt(bn["var"] + BN_EPS)[None, :, None, None]
        y = y * bn["gamma"][None, :, None, None] + bn["beta"][None, :, None, None]
        y = jnp.maximum(y, 0.0)
        B, C, H, W = y.shape
        y = jnp.max(y.reshape(B, C, H // pk, pk, W // pk, pk), axis=(3, 5))
        return y

    y = block(x_nchw, raw["conv1"], raw["bn1"], p["conv1_stride"], p["conv1_padding"],
              p["pool1_kernel_size"], p["pool1_stride"], p["pool1_padding"])
    if p["multi_block"]:
        y = block(y, raw["conv2"], raw["bn2"], p["conv2_stride"], p["conv2_padding"],
                  p["pool2_kernel_size"], p["pool2_stride"], p["pool2_padding"])
    y = y.reshape(y.shape[0], -1)
    logits = jnp.matmul(y, raw["fc"]["w"].T, precision=lax.Precision.HIGHEST) + raw["fc"]["b"]
    return jax.nn.softmax(logits, axis=1)


if __name__ == "__main__":
    n_timesteps, n_freq, n_classes, batch = 16, 16, 10, 2
    feat_dim = calculate_conv2d_block_output_size(n_timesteps, n_freq, PARAMS)   # 64*4*4 = 1024

    key = jax.random.PRNGKey(0)
    k_params, k_x = jax.random.split(key)
    raw = init_raw_params(k_params, n_classes, feat_dim, PARAMS)
    prepared = prepare_params(raw, PARAMS)      # one-time BN fold / transpose / bf16 cast

    x = jax.random.normal(k_x, (batch, PARAMS["conv1_ch_in"], n_timesteps, n_freq),
                          jnp.float32)          # NCHW, like PyTorch

    fwd = jax.jit(lambda params, inp: netconv2d_forward(params, inp, PARAMS))
    out = jax.block_until_ready(fwd(prepared, x))

    assert out.shape == (batch, n_classes)
    assert bool(jnp.all(jnp.isfinite(out)))
    # Softmax rows must sum to ~1.
    assert bool(jnp.allclose(jnp.sum(out, axis=1), 1.0, atol=1e-4))
    # Compare against the f32 pure-JAX reference (bf16 activations -> loose tol).
    ref = reference_forward(raw, x, PARAMS)
    assert bool(jnp.allclose(out, ref, atol=2e-2, rtol=0.0)), \
        float(jnp.max(jnp.abs(out - ref)))
    print("KERNEL_OK")
</pallas_src>

<mosaic_0001>
module attributes {stable_mosaic.version = 11 : i64} {
  func.func @_conv_bn_relu_kernel(%arg0: i32, %arg1: memref<1x10x10x32xbf16, #tpu.memory_space<vmem>>, %arg2: memref<9x32x64xbf16, #tpu.memory_space<vmem>>, %arg3: memref<1x64xf32, #tpu.memory_space<vmem>>, %arg4: memref<1x8x8x64xbf16, #tpu.memory_space<vmem>>) attributes {dimension_semantics = [#tpu.dimension_semantics<parallel>], iteration_bounds = array<i64: 2>, scalar_prefetch = 0 : i64, scratch_operands = 0 : i64, tpu.core_type = #tpu.core_type<tc>, window_params = [{transform_indices = @transform_0, window_bounds = array<i64: 1, 10, 10, 32>}, {pipeline_mode = #tpu.pipeline_mode<synchronous>, transform_indices = @transform_1, window_bounds = array<i64: 9, 32, 64>}, {pipeline_mode = #tpu.pipeline_mode<synchronous>, transform_indices = @transform_2, window_bounds = array<i64: 1, 64>}, {transform_indices = @transform_3, window_bounds = array<i64: 1, 8, 8, 64>}]} {
    %c0 = arith.constant 0 : index
    %c0_0 = arith.constant 0 : index
    %c0_1 = arith.constant 0 : index
    %c0_2 = arith.constant 0 : index
    %0 = vector.load %arg1[%c0, %c0_0, %c0_1, %c0_2] : memref<1x10x10x32xbf16, #tpu.memory_space<vmem>>, vector<1x10x10x32xbf16>
    %1 = vector.shape_cast %0 : vector<1x10x10x32xbf16> to vector<10x10x32xbf16>
    %2 = vector.extract_strided_slice %1 {offsets = [0, 0, 0], sizes = [8, 8, 32], strides = [1, 1, 1]} : vector<10x10x32xbf16> to vector<8x8x32xbf16>
    %3 = vector.shape_cast %2 : vector<8x8x32xbf16> to vector<64x32xbf16>
    %c0_3 = arith.constant 0 : index
    %c0_4 = arith.constant 0 : index
    %c0_5 = arith.constant 0 : index
    %4 = vector.load %arg2[%c0_3, %c0_4, %c0_5] : memref<9x32x64xbf16, #tpu.memory_space<vmem>>, vector<1x32x64xbf16>
    %5 = vector.shape_cast %4 : vector<1x32x64xbf16> to vector<32x64xbf16>
    %cst = arith.constant dense<0.000000e+00> : vector<64x64xf32>
    %6 = tpu.matmul %3, %5, %cst {dimension_numbers = #tpu.dot_dimension_numbers<[1], [0], [0], [1], [0, 0, 1, 1], [], []>} : vector<64x32xbf16>, vector<32x64xbf16>, vector<64x64xf32> -> vector<64x64xf32>
    %7 = vector.extract_strided_slice %1 {offsets = [0, 1, 0], sizes = [8, 8, 32], strides = [1, 1, 1]} : vector<10x10x32xbf16> to vector<8x8x32xbf16>
    %8 = vector.shape_cast %7 : vector<8x8x32xbf16> to vector<64x32xbf16>
    %c1 = arith.constant 1 : index
    %c0_6 = arith.constant 0 : index
    %c0_7 = arith.constant 0 : index
    %9 = vector.load %arg2[%c1, %c0_6, %c0_7] : memref<9x32x64xbf16, #tpu.memory_space<vmem>>, vector<1x32x64xbf16>
    %10 = vector.shape_cast %9 : vector<1x32x64xbf16> to vector<32x64xbf16>
    %cst_8 = arith.constant dense<0.000000e+00> : vector<64x64xf32>
    %11 = tpu.matmul %8, %10, %cst_8 {dimension_numbers = #tpu.dot_dimension_numbers<[1], [0], [0], [1], [0, 0, 1, 1], [], []>} : vector<64x32xbf16>, vector<32x64xbf16>, vector<64x64xf32> -> vector<64x64xf32>
    %12 = arith.addf %6, %11 : vector<64x64xf32>
    %13 = vector.extract_strided_slice %1 {offsets = [0, 2, 0], sizes = [8, 8, 32], strides = [1, 1, 1]} : vector<10x10x32xbf16> to vector<8x8x32xbf16>
    %14 = vector.shape_cast %13 : vector<8x8x32xbf16> to vector<64x32xbf16>
    %c2 = arith.constant 2 : index
    %c0_9 = arith.constant 0 : index
    %c0_10 = arith.constant 0 : index
    %15 = vector.load %arg2[%c2, %c0_9, %c0_10] : memref<9x32x64xbf16, #tpu.memory_space<vmem>>, vector<1x32x64xbf16>
    %16 = vector.shape_cast %15 : vector<1x32x64xbf16> to vector<32x64xbf16>
    %cst_11 = arith.constant dense<0.000000e+00> : vector<64x64xf32>
    %17 = tpu.matmul %14, %16, %cst_11 {dimension_numbers = #tpu.dot_dimension_numbers<[1], [0], [0], [1], [0, 0, 1, 1], [], []>} : vector<64x32xbf16>, vector<32x64xbf16>, vector<64x64xf32> -> vector<64x64xf32>
    %18 = arith.addf %12, %17 : vector<64x64xf32>
    %19 = vector.extract_strided_slice %1 {offsets = [1, 0, 0], sizes = [8, 8, 32], strides = [1, 1, 1]} : vector<10x10x32xbf16> to vector<8x8x32xbf16>
    %20 = vector.shape_cast %19 : vector<8x8x32xbf16> to vector<64x32xbf16>
    %c3 = arith.constant 3 : index
    %c0_12 = arith.constant 0 : index
    %c0_13 = arith.constant 0 : index
    %21 = vector.load %arg2[%c3, %c0_12, %c0_13] : memref<9x32x64xbf16, #tpu.memory_space<vmem>>, vector<1x32x64xbf16>
    %22 = vector.shape_cast %21 : vector<1x32x64xbf16> to vector<32x64xbf16>
    %cst_14 = arith.constant dense<0.000000e+00> : vector<64x64xf32>
    %23 = tpu.matmul %20, %22, %cst_14 {dimension_numbers = #tpu.dot_dimension_numbers<[1], [0], [0], [1], [0, 0, 1, 1], [], []>} : vector<64x32xbf16>, vector<32x64xbf16>, vector<64x64xf32> -> vector<64x64xf32>
    %24 = arith.addf %18, %23 : vector<64x64xf32>
    %25 = vector.extract_strided_slice %1 {offsets = [1, 1, 0], sizes = [8, 8, 32], strides = [1, 1, 1]} : vector<10x10x32xbf16> to vector<8x8x32xbf16>
    %26 = vector.shape_cast %25 : vector<8x8x32xbf16> to vector<64x32xbf16>
    %c4 = arith.constant 4 : index
    %c0_15 = arith.constant 0 : index
    %c0_16 = arith.constant 0 : index
    %27 = vector.load %arg2[%c4, %c0_15, %c0_16] : memref<9x32x64xbf16, #tpu.memory_space<vmem>>, vector<1x32x64xbf16>
    %28 = vector.shape_cast %27 : vector<1x32x64xbf16> to vector<32x64xbf16>
    %cst_17 = arith.constant dense<0.000000e+00> : vector<64x64xf32>
    %29 = tpu.matmul %26, %28, %cst_17 {dimension_numbers = #tpu.dot_dimension_numbers<[1], [0], [0], [1], [0, 0, 1, 1], [], []>} : vector<64x32xbf16>, vector<32x64xbf16>, vector<64x64xf32> -> vector<64x64xf32>
    %30 = arith.addf %24, %29 : vector<64x64xf32>
    %31 = vector.extract_strided_slice %1 {offsets = [1, 2, 0], sizes = [8, 8, 32], strides = [1, 1, 1]} : vector<10x10x32xbf16> to vector<8x8x32xbf16>
    %32 = vector.shape_cast %31 : vector<8x8x32xbf16> to vector<64x32xbf16>
    %c5 = arith.constant 5 : index
    %c0_18 = arith.constant 0 : index
    %c0_19 = arith.constant 0 : index
    %33 = vector.load %arg2[%c5, %c0_18, %c0_19] : memref<9x32x64xbf16, #tpu.memory_space<vmem>>, vector<1x32x64xbf16>
    %34 = vector.shape_cast %33 : vector<1x32x64xbf16> to vector<32x64xbf16>
    %cst_20 = arith.constant dense<0.000000e+00> : vector<64x64xf32>
    %35 = tpu.matmul %32, %34, %cst_20 {dimension_numbers = #tpu.dot_dimension_numbers<[1], [0], [0], [1], [0, 0, 1, 1], [], []>} : vector<64x32xbf16>, vector<32x64xbf16>, vector<64x64xf32> -> vector<64x64xf32>
    %36 = arith.addf %30, %35 : vector<64x64xf32>
    %37 = vector.extract_strided_slice %1 {offsets = [2, 0, 0], sizes = [8, 8, 32], strides = [1, 1, 1]} : vector<10x10x32xbf16> to vector<8x8x32xbf16>
    %38 = vector.shape_cast %37 : vector<8x8x32xbf16> to vector<64x32xbf16>
    %c6 = arith.constant 6 : index
    %c0_21 = arith.constant 0 : index
    %c0_22 = arith.constant 0 : index
    %39 = vector.load %arg2[%c6, %c0_21, %c0_22] : memref<9x32x64xbf16, #tpu.memory_space<vmem>>, vector<1x32x64xbf16>
    %40 = vector.shape_cast %39 : vector<1x32x64xbf16> to vector<32x64xbf16>
    %cst_23 = arith.constant dense<0.000000e+00> : vector<64x64xf32>
    %41 = tpu.matmul %38, %40, %cst_23 {dimension_numbers = #tpu.dot_dimension_numbers<[1], [0], [0], [1], [0, 0, 1, 1], [], []>} : vector<64x32xbf16>, vector<32x64xbf16>, vector<64x64xf32> -> vector<64x64xf32>
    %42 = arith.addf %36, %41 : vector<64x64xf32>
    %43 = vector.extract_strided_slice %1 {offsets = [2, 1, 0], sizes = [8, 8, 32], strides = [1, 1, 1]} : vector<10x10x32xbf16> to vector<8x8x32xbf16>
    %44 = vector.shape_cast %43 : vector<8x8x32xbf16> to vector<64x32xbf16>
    %c7 = arith.constant 7 : index
    %c0_24 = arith.constant 0 : index
    %c0_25 = arith.constant 0 : index
    %45 = vector.load %arg2[%c7, %c0_24, %c0_25] : memref<9x32x64xbf16, #tpu.memory_space<vmem>>, vector<1x32x64xbf16>
    %46 = vector.shape_cast %45 : vector<1x32x64xbf16> to vector<32x64xbf16>
    %cst_26 = arith.constant dense<0.000000e+00> : vector<64x64xf32>
    %47 = tpu.matmul %44, %46, %cst_26 {dimension_numbers = #tpu.dot_dimension_numbers<[1], [0], [0], [1], [0, 0, 1, 1], [], []>} : vector<64x32xbf16>, vector<32x64xbf16>, vector<64x64xf32> -> vector<64x64xf32>
    %48 = arith.addf %42, %47 : vector<64x64xf32>
    %49 = vector.extract_strided_slice %1 {offsets = [2, 2, 0], sizes = [8, 8, 32], strides = [1, 1, 1]} : vector<10x10x32xbf16> to vector<8x8x32xbf16>
    %50 = vector.shape_cast %49 : vector<8x8x32xbf16> to vector<64x32xbf16>
    %c8 = arith.constant 8 : index
    %c0_27 = arith.constant 0 : index
    %c0_28 = arith.constant 0 : index
    %51 = vector.load %arg2[%c8, %c0_27, %c0_28] : memref<9x32x64xbf16, #tpu.memory_space<vmem>>, vector<1x32x64xbf16>
    %52 = vector.shape_cast %51 : vector<1x32x64xbf16> to vector<32x64xbf16>
    %cst_29 = arith.constant dense<0.000000e+00> : vector<64x64xf32>
    %53 = tpu.matmul %50, %52, %cst_29 {dimension_numbers = #tpu.dot_dimension_numbers<[1], [0], [0], [1], [0, 0, 1, 1], [], []>} : vector<64x32xbf16>, vector<32x64xbf16>, vector<64x64xf32> -> vector<64x64xf32>
    %54 = arith.addf %48, %53 : vector<64x64xf32>
    %c0_30 = arith.constant 0 : index
    %c0_31 = arith.constant 0 : index
    %55 = vector.load %arg3[%c0_30, %c0_31] : memref<1x64xf32, #tpu.memory_space<vmem>>, vector<1x64xf32>
    %56 = vector.broadcast %55 : vector<1x64xf32> to vector<64x64xf32>
    %57 = arith.addf %54, %56 : vector<64x64xf32>
    %cst_32 = arith.constant 0.000000e+00 : f32
    %58 = vector.broadcast %cst_32 : f32 to vector<64x64xf32>
    %59 = arith.maximumf %57, %58 : vector<64x64xf32>
    %60 = vector.shape_cast %59 : vector<64x64xf32> to vector<8x8x64xf32>
    %61 = arith.truncf %60 : vector<8x8x64xf32> to vector<8x8x64xbf16>
    %c0_33 = arith.constant 0 : index
    %c0_34 = arith.constant 0 : index
    %c0_35 = arith.constant 0 : index
    %c0_36 = arith.constant 0 : index
    %62 = vector.load %arg4[%c0_33, %c0_34, %c0_35, %c0_36] : memref<1x8x8x64xbf16, #tpu.memory_space<vmem>>, vector<1x8x8x64xbf16>
    %63 = vector.shape_cast %62 : vector<1x8x8x64xbf16> to vector<8x8x64xbf16>
    %64 = vector.shape_cast %61 : vector<8x8x64xbf16> to vector<1x8x8x64xbf16>
    tpu.vector_store %arg4[%c0_33, %c0_34, %c0_35, %c0_36], %64 {strides = array<i32>} : memref<1x8x8x64xbf16, #tpu.memory_space<vmem>>, vector<1x8x8x64xbf16>,
    return
  }
  func.func @transform_0(%arg0: i32) -> (i32, i32, i32, i32) {
    %c0_i32 = arith.constant 0 : i32
    %c0_i32_0 = arith.constant 0 : i32
    %c0_i32_1 = arith.constant 0 : i32
    %c0_i32_2 = arith.constant 0 : i32
    return %arg0, %c0_i32, %c0_i32_0, %c0_i32_1 : i32, i32, i32, i32
  }
  func.func @transform_1(%arg0: i32) -> (i32, i32, i32) {
    %c0_i32 = arith.constant 0 : i32
    %c0_i32_0 = arith.constant 0 : i32
    %c0_i32_1 = arith.constant 0 : i32
    %c0_i32_2 = arith.constant 0 : i32
    return %c0_i32, %c0_i32_0, %c0_i32_1 : i32, i32, i32
  }
  func.func @transform_2(%arg0: i32) -> (i32, i32) {
    %c0_i32 = arith.constant 0 : i32
    %c0_i32_0 = arith.constant 0 : i32
    %c0_i32_1 = arith.constant 0 : i32
    return %c0_i32, %c0_i32_0 : i32, i32
  }
  func.func @transform_3(%arg0: i32) -> (i32, i32, i32, i32) {
    %c0_i32 = arith.constant 0 : i32
    %c0_i32_0 = arith.constant 0 : i32
    %c0_i32_1 = arith.constant 0 : i32
    %c0_i32_2 = arith.constant 0 : i32
    return %arg0, %c0_i32, %c0_i32_0, %c0_i32_1 : i32, i32, i32, i32
  }
}

module attributes {stable_mosaic.version = 11 : i64} {
  func.func @_conv_bn_relu_kernel(%arg0: i32, %arg1: memref<1x18x18x1xbf16, #tpu.memory_space<vmem>>, %arg2: memref<9x1x32xbf16, #tpu.memory_space<vmem>>, %arg3: memref<1x32xf32, #tpu.memory_space<vmem>>, %arg4: memref<1x16x16x32xbf16, #tpu.memory_space<vmem>>) attributes {dimension_semantics = [#tpu.dimension_semantics<parallel>], iteration_bounds = array<i64: 2>, scalar_prefetch = 0 : i64, scratch_operands = 0 : i64, tpu.core_type = #tpu.core_type<tc>, window_params = [{transform_indices = @transform_0, window_bounds = array<i64: 1, 18, 18, 1>}, {pipeline_mode = #tpu.pipeline_mode<synchronous>, transform_indices = @transform_1, window_bounds = array<i64: 9, 1, 32>}, {pipeline_mode = #tpu.pipeline_mode<synchronous>, transform_indices = @transform_2, window_bounds = array<i64: 1, 32>}, {transform_indices = @transform_3, window_bounds = array<i64: 1, 16, 16, 32>}]} {
    %c0 = arith.constant 0 : index
    %c0_0 = arith.constant 0 : index
    %c0_1 = arith.constant 0 : index
    %c0_2 = arith.constant 0 : index
    %0 = vector.load %arg1[%c0, %c0_0, %c0_1, %c0_2] : memref<1x18x18x1xbf16, #tpu.memory_space<vmem>>, vector<1x18x18x1xbf16>
    %1 = vector.shape_cast %0 : vector<1x18x18x1xbf16> to vector<18x18x1xbf16>
    %2 = vector.extract_strided_slice %1 {offsets = [0, 0, 0], sizes = [16, 16, 1], strides = [1, 1, 1]} : vector<18x18x1xbf16> to vector<16x16x1xbf16>
    %3 = vector.shape_cast %2 : vector<16x16x1xbf16> to vector<256x1xbf16>
    %c0_3 = arith.constant 0 : index
    %c0_4 = arith.constant 0 : index
    %c0_5 = arith.constant 0 : index
    %4 = vector.load %arg2[%c0_3, %c0_4, %c0_5] : memref<9x1x32xbf16, #tpu.memory_space<vmem>>, vector<1x1x32xbf16>
    %5 = vector.shape_cast %4 : vector<1x1x32xbf16> to vector<1x32xbf16>
    %6 = arith.extf %3 : vector<256x1xbf16> to vector<256x1xf32>
    %7 = arith.extf %5 : vector<1x32xbf16> to vector<1x32xf32>
    %8 = vector.broadcast %6 : vector<256x1xf32> to vector<256x32xf32>
    %9 = vector.broadcast %7 : vector<1x32xf32> to vector<256x32xf32>
    %10 = arith.mulf %8, %9 : vector<256x32xf32>
    %11 = vector.extract_strided_slice %1 {offsets = [0, 1, 0], sizes = [16, 16, 1], strides = [1, 1, 1]} : vector<18x18x1xbf16> to vector<16x16x1xbf16>
    %12 = vector.shape_cast %11 : vector<16x16x1xbf16> to vector<256x1xbf16>
    %c1 = arith.constant 1 : index
    %c0_6 = arith.constant 0 : index
    %c0_7 = arith.constant 0 : index
    %13 = vector.load %arg2[%c1, %c0_6, %c0_7] : memref<9x1x32xbf16, #tpu.memory_space<vmem>>, vector<1x1x32xbf16>
    %14 = vector.shape_cast %13 : vector<1x1x32xbf16> to vector<1x32xbf16>
    %15 = arith.extf %12 : vector<256x1xbf16> to vector<256x1xf32>
    %16 = arith.extf %14 : vector<1x32xbf16> to vector<1x32xf32>
    %17 = vector.broadcast %15 : vector<256x1xf32> to vector<256x32xf32>
    %18 = vector.broadcast %16 : vector<1x32xf32> to vector<256x32xf32>
    %19 = arith.mulf %17, %18 : vector<256x32xf32>
    %20 = arith.addf %10, %19 : vector<256x32xf32>
    %21 = vector.extract_strided_slice %1 {offsets = [0, 2, 0], sizes = [16, 16, 1], strides = [1, 1, 1]} : vector<18x18x1xbf16> to vector<16x16x1xbf16>
    %22 = vector.shape_cast %21 : vector<16x16x1xbf16> to vector<256x1xbf16>
    %c2 = arith.constant 2 : index
    %c0_8 = arith.constant 0 : index
    %c0_9 = arith.constant 0 : index
    %23 = vector.load %arg2[%c2, %c0_8, %c0_9] : memref<9x1x32xbf16, #tpu.memory_space<vmem>>, vector<1x1x32xbf16>
    %24 = vector.shape_cast %23 : vector<1x1x32xbf16> to vector<1x32xbf16>
    %25 = arith.extf %22 : vector<256x1xbf16> to vector<256x1xf32>
    %26 = arith.extf %24 : vector<1x32xbf16> to vector<1x32xf32>
    %27 = vector.broadcast %25 : vector<256x1xf32> to vector<256x32xf32>
    %28 = vector.broadcast %26 : vector<1x32xf32> to vector<256x32xf32>
    %29 = arith.mulf %27, %28 : vector<256x32xf32>
    %30 = arith.addf %20, %29 : vector<256x32xf32>
    %31 = vector.extract_strided_slice %1 {offsets = [1, 0, 0], sizes = [16, 16, 1], strides = [1, 1, 1]} : vector<18x18x1xbf16> to vector<16x16x1xbf16>
    %32 = vector.shape_cast %31 : vector<16x16x1xbf16> to vector<256x1xbf16>
    %c3 = arith.constant 3 : index
    %c0_10 = arith.constant 0 : index
    %c0_11 = arith.constant 0 : index
    %33 = vector.load %arg2[%c3, %c0_10, %c0_11] : memref<9x1x32xbf16, #tpu.memory_space<vmem>>, vector<1x1x32xbf16>
    %34 = vector.shape_cast %33 : vector<1x1x32xbf16> to vector<1x32xbf16>
    %35 = arith.extf %32 : vector<256x1xbf16> to vector<256x1xf32>
    %36 = arith.extf %34 : vector<1x32xbf16> to vector<1x32xf32>
    %37 = vector.broadcast %35 : vector<256x1xf32> to vector<256x32xf32>
    %38 = vector.broadcast %36 : vector<1x32xf32> to vector<256x32xf32>
    %39 = arith.mulf %37, %38 : vector<256x32xf32>
    %40 = arith.addf %30, %39 : vector<256x32xf32>
    %41 = vector.extract_strided_slice %1 {offsets = [1, 1, 0], sizes = [16, 16, 1], strides = [1, 1, 1]} : vector<18x18x1xbf16> to vector<16x16x1xbf16>
    %42 = vector.shape_cast %41 : vector<16x16x1xbf16> to vector<256x1xbf16>
    %c4 = arith.constant 4 : index
    %c0_12 = arith.constant 0 : index
    %c0_13 = arith.constant 0 : index
    %43 = vector.load %arg2[%c4, %c0_12, %c0_13] : memref<9x1x32xbf16, #tpu.memory_space<vmem>>, vector<1x1x32xbf16>
    %44 = vector.shape_cast %43 : vector<1x1x32xbf16> to vector<1x32xbf16>
    %45 = arith.extf %42 : vector<256x1xbf16> to vector<256x1xf32>
    %46 = arith.extf %44 : vector<1x32xbf16> to vector<1x32xf32>
    %47 = vector.broadcast %45 : vector<256x1xf32> to vector<256x32xf32>
    %48 = vector.broadcast %46 : vector<1x32xf32> to vector<256x32xf32>
    %49 = arith.mulf %47, %48 : vector<256x32xf32>
    %50 = arith.addf %40, %49 : vector<256x32xf32>
    %51 = vector.extract_strided_slice %1 {offsets = [1, 2, 0], sizes = [16, 16, 1], strides = [1, 1, 1]} : vector<18x18x1xbf16> to vector<16x16x1xbf16>
    %52 = vector.shape_cast %51 : vector<16x16x1xbf16> to vector<256x1xbf16>
    %c5 = arith.constant 5 : index
    %c0_14 = arith.constant 0 : index
    %c0_15 = arith.constant 0 : index
    %53 = vector.load %arg2[%c5, %c0_14, %c0_15] : memref<9x1x32xbf16, #tpu.memory_space<vmem>>, vector<1x1x32xbf16>
    %54 = vector.shape_cast %53 : vector<1x1x32xbf16> to vector<1x32xbf16>
    %55 = arith.extf %52 : vector<256x1xbf16> to vector<256x1xf32>
    %56 = arith.extf %54 : vector<1x32xbf16> to vector<1x32xf32>
    %57 = vector.broadcast %55 : vector<256x1xf32> to vector<256x32xf32>
    %58 = vector.broadcast %56 : vector<1x32xf32> to vector<256x32xf32>
    %59 = arith.mulf %57, %58 : vector<256x32xf32>
    %60 = arith.addf %50, %59 : vector<256x32xf32>
    %61 = vector.extract_strided_slice %1 {offsets = [2, 0, 0], sizes = [16, 16, 1], strides = [1, 1, 1]} : vector<18x18x1xbf16> to vector<16x16x1xbf16>
    %62 = vector.shape_cast %61 : vector<16x16x1xbf16> to vector<256x1xbf16>
    %c6 = arith.constant 6 : index
    %c0_16 = arith.constant 0 : index
    %c0_17 = arith.constant 0 : index
    %63 = vector.load %arg2[%c6, %c0_16, %c0_17] : memref<9x1x32xbf16, #tpu.memory_space<vmem>>, vector<1x1x32xbf16>
    %64 = vector.shape_cast %63 : vector<1x1x32xbf16> to vector<1x32xbf16>
    %65 = arith.extf %62 : vector<256x1xbf16> to vector<256x1xf32>
    %66 = arith.extf %64 : vector<1x32xbf16> to vector<1x32xf32>
    %67 = vector.broadcast %65 : vector<256x1xf32> to vector<256x32xf32>
    %68 = vector.broadcast %66 : vector<1x32xf32> to vector<256x32xf32>
    %69 = arith.mulf %67, %68 : vector<256x32xf32>
    %70 = arith.addf %60, %69 : vector<256x32xf32>
    %71 = vector.extract_strided_slice %1 {offsets = [2, 1, 0], sizes = [16, 16, 1], strides = [1, 1, 1]} : vector<18x18x1xbf16> to vector<16x16x1xbf16>
    %72 = vector.shape_cast %71 : vector<16x16x1xbf16> to vector<256x1xbf16>
    %c7 = arith.constant 7 : index
    %c0_18 = arith.constant 0 : index
    %c0_19 = arith.constant 0 : index
    %73 = vector.load %arg2[%c7, %c0_18, %c0_19] : memref<9x1x32xbf16, #tpu.memory_space<vmem>>, vector<1x1x32xbf16>
    %74 = vector.shape_cast %73 : vector<1x1x32xbf16> to vector<1x32xbf16>
    %75 = arith.extf %72 : vector<256x1xbf16> to vector<256x1xf32>
    %76 = arith.extf %74 : vector<1x32xbf16> to vector<1x32xf32>
    %77 = vector.broadcast %75 : vector<256x1xf32> to vector<256x32xf32>
    %78 = vector.broadcast %76 : vector<1x32xf32> to vector<256x32xf32>
    %79 = arith.mulf %77, %78 : vector<256x32xf32>
    %80 = arith.addf %70, %79 : vector<256x32xf32>
    %81 = vector.extract_strided_slice %1 {offsets = [2, 2, 0], sizes = [16, 16, 1], strides = [1, 1, 1]} : vector<18x18x1xbf16> to vector<16x16x1xbf16>
    %82 = vector.shape_cast %81 : vector<16x16x1xbf16> to vector<256x1xbf16>
    %c8 = arith.constant 8 : index
    %c0_20 = arith.constant 0 : index
    %c0_21 = arith.constant 0 : index
    %83 = vector.load %arg2[%c8, %c0_20, %c0_21] : memref<9x1x32xbf16, #tpu.memory_space<vmem>>, vector<1x1x32xbf16>
    %84 = vector.shape_cast %83 : vector<1x1x32xbf16> to vector<1x32xbf16>
    %85 = arith.extf %82 : vector<256x1xbf16> to vector<256x1xf32>
    %86 = arith.extf %84 : vector<1x32xbf16> to vector<1x32xf32>
    %87 = vector.broadcast %85 : vector<256x1xf32> to vector<256x32xf32>
    %88 = vector.broadcast %86 : vector<1x32xf32> to vector<256x32xf32>
    %89 = arith.mulf %87, %88 : vector<256x32xf32>
    %90 = arith.addf %80, %89 : vector<256x32xf32>
    %c0_22 = arith.constant 0 : index
    %c0_23 = arith.constant 0 : index
    %91 = vector.load %arg3[%c0_22, %c0_23] : memref<1x32xf32, #tpu.memory_space<vmem>>, vector<1x32xf32>
    %92 = vector.broadcast %91 : vector<1x32xf32> to vector<256x32xf32>
    %93 = arith.addf %90, %92 : vector<256x32xf32>
    %cst = arith.constant 0.000000e+00 : f32
    %94 = vector.broadcast %cst : f32 to vector<256x32xf32>
    %95 = arith.maximumf %93, %94 : vector<256x32xf32>
    %96 = vector.shape_cast %95 : vector<256x32xf32> to vector<16x16x32xf32>
    %97 = arith.truncf %96 : vector<16x16x32xf32> to vector<16x16x32xbf16>
    %c0_24 = arith.constant 0 : index
    %c0_25 = arith.constant 0 : index
    %c0_26 = arith.constant 0 : index
    %c0_27 = arith.constant 0 : index
    %98 = vector.load %arg4[%c0_24, %c0_25, %c0_26, %c0_27] : memref<1x16x16x32xbf16, #tpu.memory_space<vmem>>, vector<1x16x16x32xbf16>
    %99 = vector.shape_cast %98 : vector<1x16x16x32xbf16> to vector<16x16x32xbf16>
    %100 = vector.shape_cast %97 : vector<16x16x32xbf16> to vector<1x16x16x32xbf16>
    tpu.vector_store %arg4[%c0_24, %c0_25, %c0_26, %c0_27], %100 {strides = array<i32>} : memref<1x16x16x32xbf16, #tpu.memory_space<vmem>>, vector<1x16x16x32xbf16>,
    return
  }
  func.func @transform_0(%arg0: i32) -> (i32, i32, i32, i32) {
    %c0_i32 = arith.constant 0 : i32
    %c0_i32_0 = arith.constant 0 : i32
    %c0_i32_1 = arith.constant 0 : i32
    %c0_i32_2 = arith.constant 0 : i32
    return %arg0, %c0_i32, %c0_i32_0, %c0_i32_1 : i32, i32, i32, i32
  }
  func.func @transform_1(%arg0: i32) -> (i32, i32, i32) {
    %c0_i32 = arith.constant 0 : i32
    %c0_i32_0 = arith.constant 0 : i32
    %c0_i32_1 = arith.constant 0 : i32
    %c0_i32_2 = arith.constant 0 : i32
    return %c0_i32, %c0_i32_0, %c0_i32_1 : i32, i32, i32
  }
  func.func @transform_2(%arg0: i32) -> (i32, i32) {
    %c0_i32 = arith.constant 0 : i32
    %c0_i32_0 = arith.constant 0 : i32
    %c0_i32_1 = arith.constant 0 : i32
    return %c0_i32, %c0_i32_0 : i32, i32
  }
  func.func @transform_3(%arg0: i32) -> (i32, i32, i32, i32) {
    %c0_i32 = arith.constant 0 : i32
    %c0_i32_0 = arith.constant 0 : i32
    %c0_i32_1 = arith.constant 0 : i32
    %c0_i32_2 = arith.constant 0 : i32
    return %arg0, %c0_i32, %c0_i32_0, %c0_i32_1 : i32, i32, i32, i32
  }
}

module attributes {stable_mosaic.version = 11 : i64} {
  func.func @_fc_softmax_kernel(%arg0: memref<2x1024xbf16, #tpu.memory_space<vmem>>, %arg1: memref<1024x10xbf16, #tpu.memory_space<vmem>>, %arg2: memref<1x10xf32, #tpu.memory_space<vmem>>, %arg3: memref<2x10xf32, #tpu.memory_space<vmem>>) attributes {dimension_semantics = [], scalar_prefetch = 0 : i64, scratch_operands = 0 : i64, tpu.core_type = #tpu.core_type<tc>} {
    %c0 = arith.constant 0 : index
    %c0_0 = arith.constant 0 : index
    %0 = vector.load %arg0[%c0, %c0_0] : memref<2x1024xbf16, #tpu.memory_space<vmem>>, vector<2x1024xbf16>
    %c0_1 = arith.constant 0 : index
    %c0_2 = arith.constant 0 : index
    %1 = vector.load %arg1[%c0_1, %c0_2] : memref<1024x10xbf16, #tpu.memory_space<vmem>>, vector<1024x10xbf16>
    %cst = arith.constant dense<0.000000e+00> : vector<2x10xf32>
    %2 = tpu.matmul %0, %1, %cst {dimension_numbers = #tpu.dot_dimension_numbers<[1], [0], [0], [1], [0, 0, 1, 1], [], []>} : vector<2x1024xbf16>, vector<1024x10xbf16>, vector<2x10xf32> -> vector<2x10xf32>
    %c0_3 = arith.constant 0 : index
    %c0_4 = arith.constant 0 : index
    %3 = vector.load %arg2[%c0_3, %c0_4] : memref<1x10xf32, #tpu.memory_space<vmem>>, vector<1x10xf32>
    %4 = vector.broadcast %3 : vector<1x10xf32> to vector<2x10xf32>
    %5 = arith.addf %2, %4 : vector<2x10xf32>
    %cst_5 = arith.constant dense<0xFF800000> : vector<2xf32>
    %6 = vector.multi_reduction <maximumf>, %5, %cst_5 [1] : vector<2x10xf32> to vector<2xf32>
    %7 = vector.shape_cast %6 : vector<2xf32> to vector<2x1xf32>
    %8 = vector.broadcast %7 : vector<2x1xf32> to vector<2x10xf32>
    %9 = arith.subf %5, %8 : vector<2x10xf32>
    %10 = math.exp %9 : vector<2x10xf32>
    %cst_6 = arith.constant dense<0.000000e+00> : vector<2xf32>
    %11 = vector.multi_reduction <add>, %10, %cst_6 [1] : vector<2x10xf32> to vector<2xf32>
    %12 = vector.shape_cast %11 : vector<2xf32> to vector<2x1xf32>
    %13 = vector.broadcast %12 : vector<2x1xf32> to vector<2x10xf32>
    %14 = arith.divf %10, %13 : vector<2x10xf32>
    %c0_7 = arith.constant 0 : index
    %c0_8 = arith.constant 0 : index
    %15 = vector.load %arg3[%c0_7, %c0_8] : memref<2x10xf32, #tpu.memory_space<vmem>>, vector<2x10xf32>
    tpu.vector_store %arg3[%c0_7, %c0_8], %14 {strides = array<i32>} : memref<2x10xf32, #tpu.memory_space<vmem>>, vector<2x10xf32>,
    return
  }
}

</mosaic_0001>

<llo_original>
// kernel: _lambda_.4
$region0: #{_lambda_.4}
  #allocation0 [shape = 'u32[]', space=smem, size = 0x4, offset = 0x4, fixed_abs, tag = 'smem constant byte address 0x4 - core index']
  #allocation1 [shape = 'u32[144,128]{1,0:T(1,128)}', space=vmem, size = 0x12000, scoped, tag = 'internal scratch']
  %s0 = inlined_call_operand.vmem [shape: bf16[2,10,10,32], index: 0, kind: input, shape index: {}]
  %s1 = inlined_call_operand.vmem [shape: bf16[9,32,64], index: 1, kind: input, shape index: {}]
  %s2 = inlined_call_operand.vmem [shape: f32[1,64], index: 2, kind: input, shape index: {}]
  %s3 = inlined_call_operand.vmem [shape: bf16[2,8,8,64], index: 3, kind: output, shape index: {}]
  %s4 = sld [smem:[#allocation0]]
  $region45: #{_lambda_.4} parent=0
    _
  %s6 = ssub.s32 1, %s4
  %s7 = scalar_select 0, %s6, %s4
  loop: start=0, step=1, limit=4
  $region2: #{_lambda_.4} parent=0 // loop_pre_header
    _
  $region3: #{_lambda_.4} parent=0 // loop_header
    %s9 = sphi 0, %s13
    %p10 = scmp.ge.s32.totalorder %s9, 4
    %s19 = sphi 0, %s21
    %s22 = sphi 0, %s19
    %s23 = sphi 0, %s22
    %s39 = sphi 0, %s23
    %s43 = sphi 0, %s43
    %s45 = sphi 0, %s43
    %s46 = sphi 0, %s45
    %s60 = sphi 0, %s46
    %s64 = sphi 0, %s64
    %s66 = sphi 0, %s64
    %s67 = sphi 0, %s66
    %s81 = sphi 0, %s67
    %s87 = sphi 0, %s89
    %s90 = sphi 0, %s87
    %s91 = sphi 0, %s90
    %s107 = sphi 0, %s91
  $region4: #{_lambda_.4} parent=0 // loop_header_branch
    %12 = sbr.rel (%p10) target = $region8
  $region5: #{_lambda_.4} parent=0 // loop_body
    %s14 = ssub.s32 %s9, 1
    %s15 = ssub.s32 %s9, 2
    %s16 = sadd.s32 %s9, 1
    %s17 = ssub.s32 %s9, %s16
    %p18 = scmp.eq.s32.totalorder %s17, 0
    %s20 = sadd.s32 %s19, 1
    %s21 = scalar_select %p18, %s19, %s20
    %p24 = pneg %p18
    %p25 = scmp.eq.s32.totalorder %s9, 1
    %p26 = por %p24, %p25
    %p27 = scmp.ne.s32.totalorder %s19, %s22
    %p28 = scmp.eq.s32.totalorder %s9, 0
    %p29 = por %p27, %p28
    %p30 = scmp.ne.s32.totalorder %s19, %s22
    %p31 = scmp.eq.s32.totalorder %s14, 1
    %p32 = por %p30, %p31
    %p33 = scmp.ne.s32.totalorder %s22, %s23
    %p34 = scmp.eq.s32.totalorder %s14, 0
    %p35 = por %p33, %p34
    %p36 = scmp.ne.s32.totalorder %s22, %s23
    %p37 = scmp.eq.s32.totalorder %s15, 1
    %p38 = por %p36, %p37
    %p40 = scmp.ne.s32.totalorder %s23, %s39
    %p41 = scmp.eq.s32.totalorder %s15, 0
    %p42 = por %p40, %p41
    %s44 = sadd.s32 %s43, 1
    %p47 = scmp.eq.s32.totalorder %s9, 1
    %p48 = scmp.ne.s32.totalorder %s43, %s45
    %p49 = scmp.eq.s32.totalorder %s9, 0
    %p50 = por %p48, %p49
    %p51 = scmp.ne.s32.totalorder %s43, %s45
    %p52 = scmp.eq.s32.totalorder %s14, 1
    %p53 = por %p51, %p52
    %p54 = scmp.ne.s32.totalorder %s45, %s46
    %p55 = scmp.eq.s32.totalorder %s14, 0
    %p56 = por %p54, %p55
    %p57 = scmp.ne.s32.totalorder %s45, %s46
    %p58 = scmp.eq.s32.totalorder %s15, 1
    %p59 = por %p57, %p58
    %p61 = scmp.ne.s32.totalorder %s46, %s60
    %p62 = scmp.eq.s32.totalorder %s15, 0
    %p63 = por %p61, %p62
    %s65 = sadd.s32 %s64, 1
    %p68 = scmp.eq.s32.totalorder %s9, 1
    %p69 = scmp.ne.s32.totalorder %s64, %s66
    %p70 = scmp.eq.s32.totalorder %s9, 0
    %p71 = por %p69, %p70
    %p72 = scmp.ne.s32.totalorder %s64, %s66
    %p73 = scmp.eq.s32.totalorder %s14, 1
    %p74 = por %p72, %p73
    %p75 = scmp.ne.s32.totalorder %s66, %s67
    %p76 = scmp.eq.s32.totalorder %s14, 0
    %p77 = por %p75, %p76
    %p78 = scmp.ne.s32.totalorder %s66, %s67
    %p79 = scmp.eq.s32.totalorder %s15, 1
    %p80 = por %p78, %p79
    %p82 = scmp.ne.s32.totalorder %s67, %s81
    %p83 = scmp.eq.s32.totalorder %s15, 0
    %p84 = por %p82, %p83
    %s85 = ssub.s32 %s9, %s16
    %p86 = scmp.eq.s32.totalorder %s85, 0
    %s88 = sadd.s32 %s87, 1
    %s89 = scalar_select %p86, %s87, %s88
    %p92 = pneg %p86
    %p93 = scmp.eq.s32.totalorder %s9, 1
    %p94 = por %p92, %p93
    %p95 = scmp.ne.s32.totalorder %s87, %s90
    %p96 = scmp.eq.s32.totalorder %s9, 0
    %p97 = por %p95, %p96
    %p98 = scmp.ne.s32.totalorder %s87, %s90
    %p99 = scmp.eq.s32.totalorder %s14, 1
    %p100 = por %p98, %p99
    %p101 = scmp.ne.s32.totalorder %s90, %s91
    %p102 = scmp.eq.s32.totalorder %s14, 0
    %p103 = por %p101, %p102
    %p104 = scmp.ne.s32.totalorder %s90, %s91
    %p105 = scmp.eq.s32.totalorder %s15, 1
    %p106 = por %p104, %p105
    %p108 = scmp.ne.s32.totalorder %s91, %s107
    %p109 = scmp.eq.s32.totalorder %s15, 0
    %p110 = por %p108, %p109
    %p111 = scmp.le.s32.totalorder 1, %s9
    %p112 = scmp.lt.s32.totalorder %s9, 3
    %p113 = pnand %p111, %p112
    %p114 = pneg %p113
    // Predicated region
    $region9: #{_lambda_.4} parent=5 // pred_check
      _
    $region10: #{_lambda_.4} parent=5 // pred_check_branch
      %116 = sbr.rel (%p113) target = $region12
    $region11: #{_lambda_.4} parent=5 // pred_region
      %s117 = ssub.s32 %s9, 1
      // Predicated region
      $region13: #{_lambda_.4} parent=11 // pred_check
        %p118 = pneg %p56
      $region14: #{_lambda_.4} parent=11 // pred_check_branch
        %120 = sbr.rel (%p118) target = $region16
      $region15: #{_lambda_.4} parent=11 // pred_region
        _
      $region16: #{_lambda_.4} parent=11 // pred_fallthru
        _
      // Predicated region
      $region17: #{_lambda_.4} parent=11 // pred_check
        %p121 = pneg %p77
      $region18: #{_lambda_.4} parent=11 // pred_check_branch
        %123 = sbr.rel (%p121) target = $region20
      $region19: #{_lambda_.4} parent=11 // pred_region
        _
      $region20: #{_lambda_.4} parent=11 // pred_fallthru
        _
    $region12: #{_lambda_.4} parent=5 // pred_fallthru
      _
    %p124 = scmp.lt.s32.totalorder %s9, 2
    // Predicated region
    $region21: #{_lambda_.4} parent=5 // pred_check
      %p125 = pneg %p124
    $region22: #{_lambda_.4} parent=5 // pred_check_branch
      %127 = sbr.rel (%p125) target = $region24
    $region23: #{_lambda_.4} parent=5 // pred_region
      // Predicated region
      $region25: #{_lambda_.4} parent=23 // pred_check
        %p128 = pneg %p29
      $region26: #{_lambda_.4} parent=23 // pred_check_branch
        %130 = sbr.rel (%p128) target = $region28
      $region27: #{_lambda_.4} parent=23 // pred_region
        %p131 = scmp.lt.s32.totalorder %s9, 1
        %s132 = scalar_select %p131, %s9, 1
        %s133 = smul.addr %s132, 20
        %s134 = smul.addr %s133, 4
        %s135 = scalar_lea.vmem %s0, %s134
      $region28: #{_lambda_.4} parent=23 // pred_fallthru
        _
    $region24: #{_lambda_.4} parent=5 // pred_fallthru
      _
    %p136 = scmp.le.s32.totalorder 1, %s9
    %p137 = scmp.lt.s32.totalorder %s9, 3
    %p138 = pnand %p136, %p137
    %p139 = pneg %p138
    // Predicated region
    $region29: #{_lambda_.4} parent=5 // pred_check
      _
    $region30: #{_lambda_.4} parent=5 // pred_check_branch
      %141 = sbr.rel (%p138) target = $region32
    $region31: #{_lambda_.4} parent=5 // pred_region
      %s142 = ssub.s32 %s9, 1
      %p143 = scmp.lt.s32.totalorder %s14, 1
      %s144 = scalar_select %p143, %s14, 1
      %s145 = smul.addr %s144, 20
      %s146 = smul.addr %s145, 4
      %s147 = scalar_lea.vmem %s0, %s146
      %p148 = pneg %p35
      %p149 = pneg %p32
      %p150 = pneg %p56
      %p151 = pneg %p53
      %p152 = pneg %p77
      %p153 = pneg %p74
      %p154 = pneg %p103
      %p155 = pneg %p100
      %p156 = scmp.lt.s32.totalorder %s14, 1
      %s157 = scalar_select %p156, %s14, 1
      %s158 = smul.addr %s157, 8
      %s159 = smul.addr %s158, 4
      %s160 = scalar_lea.vmem %s3, %s159
      %p161 = scmp.lt.s32.totalorder %s14, 1
      %s162 = scalar_select %p161, %s14, 1
      %s163 = smul.addr %s162, 20
      %s164 = smul.addr %s163, 4
      %s165 = scalar_lea.vmem %s0, %s164
      %p166 = scmp.lt.s32.totalorder %s14, 1
      %s167 = scalar_select %p166, %s14, 1
      %s168 = smul.addr %s167, 8
      %s169 = smul.addr %s168, 4
      %s170 = scalar_lea.vmem %s3, %s169
      %v172 = vld [vmem:[%s165] sm:$0xf]
      %v173 = vld [vmem:[%s165 + $0x4] sm:$0x1]
      %v174 = vld [vmem:[%s165 + $0x8] sm:$0xf]
      %v175 = vld [vmem:[%s165 + $0xc] sm:$0x1]
      %v176 = vld [vmem:[%s165 + $0x10] sm:$0xf]
      %v177 = vld [vmem:[%s165 + $0x14] sm:$0x1]
      %v178 = vld [vmem:[%s165 + $0x18] sm:$0xf]
      %v179 = vld [vmem:[%s165 + $0x1c] sm:$0x1]
      %v180 = vld [vmem:[%s165 + $0x20] sm:$0xf]
      %v181 = vld [vmem:[%s165 + $0x24] sm:$0x1]
      %v182 = vld [vmem:[%s165 + $0x28] sm:$0xf]
      %v183 = vld [vmem:[%s165 + $0x2c] sm:$0x1]
      %v184 = vld [vmem:[%s165 + $0x30] sm:$0xf]
      %v185 = vld [vmem:[%s165 + $0x34] sm:$0x1]
      %v186 = vld [vmem:[%s165 + $0x38] sm:$0xf]
      %v187 = vld [vmem:[%s165 + $0x3c] sm:$0x1]
      %v188 = vld [vmem:[%s165 + $0x40] sm:$0xf]
      %v189 = vld [vmem:[%s165 + $0x44] sm:$0x1]
      %v190 = vld [vmem:[%s165 + $0x48] sm:$0xf]
      %v191 = vld [vmem:[%s165 + $0x4c] sm:$0x1]
      %v192 = vld [vmem:[%s1] sm:$0xf]
      %v193 = vld [vmem:[%s1 + $0x4] sm:$0xf]
      %v194 = vld [vmem:[%s1 + $0x8] sm:$0xf]
      %v195 = vld [vmem:[%s1 + $0xc] sm:$0xf]
      %vm196 = vsmask.f32 3328
      %vm197 = vsmask.f32 7440
      %vm198 = vmor %vm196, %vm197
      %v200 = vshrl.u32 %v172, 16
      %v202 = vrot.slane %v200, 4
      %v203 = vshll.u32 %v172, 16
      %v205 = vrot.slane %v203, 5
      %v206 = vor.u32 %v202, %v205
      %v207 = vrot.slane %v206, 4
      %v209 = vshll.u32 %v173, 16
      %v211 = vrot.slane %v209, 5
      %v212 = vsel %vm198, %v207, %v211
      %v214 = vshrl.u32 %v174, 16
      %v216 = vrot.slane %v214, 4
      %v217 = vshll.u32 %v174, 16
      %v219 = vrot.slane %v217, 5
      %v220 = vor.u32 %v216, %v219
      %v221 = vrot.slane %v220, 4
      %v223 = vshll.u32 %v175, 16
      %v225 = vrot.slane %v223, 5
      %v226 = vsel %vm198, %v221, %v225
      %v228 = vshrl.u32 %v176, 16
      %v230 = vrot.slane %v228, 4
      %v231 = vshll.u32 %v176, 16
      %v233 = vrot.slane %v231, 5
      %v234 = vor.u32 %v230, %v233
      %v235 = vrot.slane %v234, 4
      %v237 = vshll.u32 %v177, 16
      %v239 = vrot.slane %v237, 5
      %v240 = vsel %vm198, %v235, %v239
      %v242 = vshrl.u32 %v178, 16
      %v244 = vrot.slane %v242, 4
      %v245 = vshll.u32 %v178, 16
      %v247 = vrot.slane %v245, 5
      %v248 = vor.u32 %v244, %v247
      %v249 = vrot.slane %v248, 4
      %v251 = vshll.u32 %v179, 16
      %v253 = vrot.slane %v251, 5
      %v254 = vsel %vm198, %v249, %v253
      %v256 = vshrl.u32 %v180, 16
      %v258 = vrot.slane %v256, 4
      %v259 = vshll.u32 %v180, 16
      %v261 = vrot.slane %v259, 5
      %v262 = vor.u32 %v258, %v261
      %v263 = vrot.slane %v262, 4
      %v265 = vshll.u32 %v181, 16
      %v267 = vrot.slane %v265, 5
      %v268 = vsel %vm198, %v263, %v267
      %v270 = vshrl.u32 %v182, 16
      %v272 = vrot.slane %v270, 4
      %v273 = vshll.u32 %v182, 16
      %v275 = vrot.slane %v273, 5
      %v276 = vor.u32 %v272, %v275
      %v277 = vrot.slane %v276, 4
      %v279 = vshll.u32 %v183, 16
      %v281 = vrot.slane %v279, 5
      %v282 = vsel %vm198, %v277, %v281
      %v284 = vshrl.u32 %v184, 16
      %v286 = vrot.slane %v284, 4
      %v287 = vshll.u32 %v184, 16
      %v289 = vrot.slane %v287, 5
      %v290 = vor.u32 %v286, %v289
      %v291 = vrot.slane %v290, 4
      %v293 = vshll.u32 %v185, 16
      %v295 = vrot.slane %v293, 5
      %v296 = vsel %vm198, %v291, %v295
      %v298 = vshrl.u32 %v186, 16
      %v300 = vrot.slane %v298, 4
      %v301 = vshll.u32 %v186, 16
      %v303 = vrot.slane %v301, 5
      %v304 = vor.u32 %v300, %v303
      %v305 = vrot.slane %v304, 4
      %v307 = vshll.u32 %v187, 16
      %v309 = vrot.slane %v307, 5
      %v310 = vsel %vm198, %v305, %v309
      %s311 = scalar_lea.vmem %s1, 16
      %v312 = vld [vmem:[%s311] sm:$0xf]
      %v313 = vld [vmem:[%s311 + $0x4] sm:$0xf]
      %v314 = vld [vmem:[%s311 + $0x8] sm:$0xf]
      %v315 = vld [vmem:[%s311 + $0xc] sm:$0xf]
      %v316 = vunpack.c.l.b16 %v212
      %v317 = vunpack.c.l.b16 %v226
      %v318 = vunpack.c.l.b16 %v240
      %v319 = vunpack.c.l.b16 %v254
      %v320 = vunpack.c.l.b16 %v268
      %v321 = vunpack.c.l.b16 %v282
      %v322 = vunpack.c.l.b16 %v296
      %v323 = vunpack.c.l.b16 %v310
      %v324 = vpack.c.b16 %v317, %v316
      %v325 = vpack.c.b16 %v319, %v318
      %v326 = vpack.c.b16 %v321, %v320
      %v327 = vpack.c.b16 %v323, %v322
      %v332 = vunpack.c.l.b16 %v312
      %v333 = vunpack.c.l.b16 %v313
      %v334 = vunpack.c.l.b16 %v314
      %v335 = vunpack.c.l.b16 %v315
      %v336 = vpack.c.b16 %v333, %v332
      %v337 = vpack.c.b16 %v335, %v334
      %vm340 = vcmask 261120
      %v342 = vsel %vm340, %v324, 0
      %v345 = vsel %vm340, %v325, 0
      %v348 = vsel %vm340, %v326, 0
      %v351 = vsel %vm340, %v327, 0
      %353 = vmatprep.subr.bf16.mxu0 0
      %354 = vmatpush1.bf16.msra.mxu0 %v336
      %355 = vmatprep.subr.bf16.mxu0 0
      %356 = vmatpush1.bf16.msra.mxu0 %v337
      %357 = vmatprep.subr.bf16.mxu0 0
      %358 = vmatpush1.bf16.msra.mxu0 0
      %359 = vmatprep.subr.bf16.mxu0 0
      %360 = vmatpush1.bf16.msra.mxu0 0
      %361 = vmatprep.subr.bf16.mxu0 0
      %362 = vmatpush1.bf16.msra.mxu0 0
      %363 = vmatprep.subr.bf16.mxu0 0
      %364 = vmatpush1.bf16.msra.mxu0 0
      %365 = vmatprep.subr.bf16.mxu0 0
      %366 = vmatpush1.bf16.msra.mxu0 0
      %367 = vmatprep.subr.bf16.mxu0 0
      %368 = vmatpush1.bf16.msra.mxu0 0
      %369 = vmatprep.subr.bf16.mxu0 0
      %370 = vmatpush1.bf16.msra.mxu0 0
      %371 = vmatprep.subr.bf16.mxu0 0
      %372 = vmatpush1.bf16.msra.mxu0 0
      %373 = vmatprep.subr.bf16.mxu0 0
      %374 = vmatpush1.bf16.msra.mxu0 0
      %375 = vmatprep.subr.bf16.mxu0 0
      %376 = vmatpush1.bf16.msra.mxu0 0
      %377 = vmatprep.subr.bf16.mxu0 0
      %378 = vmatpush1.bf16.msra.mxu0 0
      %379 = vmatprep.subr.bf16.mxu0 0
      %380 = vmatpush1.bf16.msra.mxu0 0
      %381 = vmatprep.subr.bf16.mxu0 0
      %382 = vmatpush1.bf16.msra.mxu0 0
      %383 = vmatprep.subr.bf16.mxu0 0
      %384 = vmatpush1.bf16.msra.mxu0 0
      %385 = vmatprep.mubr.bf16.mxu0 0
      %386 = vmatmul.mubr.bf16.gmra.mrb[0].mxu0 %v342
      %v387 = vpop.f32.mrb[0].mxu0
      %v388 = vadd.f32 0.0, %v387
      %v389 = vpop.f32.mrb[0].mxu0
      %v390 = vpop.f32.mrb[0].mxu0
      %v391 = vadd.f32 0.0, %v390
      %v392 = vpop.f32.mrb[0].mxu0
      %393 = vmatprep.mubr.bf16.mxu0 0
      %394 = vmatmul.mubr.bf16.gmra.mrb[0].mxu0 %v345
      %v395 = vpop.f32.mrb[0].mxu0
      %v396 = vadd.f32 0.0, %v395
      %v397 = vpop.f32.mrb[0].mxu0
      %v398 = vpop.f32.mrb[0].mxu0
      %v399 = vadd.f32 0.0, %v398
      %v400 = vpop.f32.mrb[0].mxu0
      %401 = vmatprep.mubr.bf16.mxu0 0
      %402 = vmatmul.mubr.bf16.gmra.mrb[0].mxu0 %v348
      %v403 = vpop.f32.mrb[0].mxu0
      %v404 = vadd.f32 0.0, %v403
      %v405 = vpop.f32.mrb[0].mxu0
      %v406 = vpop.f32.mrb[0].mxu0
      %v407 = vadd.f32 0.0, %v406
      %v408 = vpop.f32.mrb[0].mxu0
      %409 = vmatprep.mubr.bf16.mxu0 0
      %410 = vmatmul.mubr.bf16.gmra.mrb[0].mxu0 %v351
      %v411 = vpop.f32.mrb[0].mxu0
      %v412 = vadd.f32 0.0, %v411
      %v413 = vpop.f32.mrb[0].mxu0
      %v414 = vpop.f32.mrb[0].mxu0
      %v415 = vadd.f32 0.0, %v414
      %v416 = vpop.f32.mrb[0].mxu0
      %417 = vdwg.mxu0
      %v426 = vunpack.c.l.b16 %v172
      %v427 = vunpack.c.l.b16 %v174
      %v428 = vunpack.c.l.b16 %v176
      %v429 = vunpack.c.l.b16 %v178
      %v430 = vunpack.c.l.b16 %v180
      %v431 = vunpack.c.l.b16 %v182
      %v432 = vunpack.c.l.b16 %v184
      %v433 = vunpack.c.l.b16 %v186
      %v434 = vpack.c.b16 %v427, %v426
      %v435 = vpack.c.b16 %v429, %v428
      %v436 = vpack.c.b16 %v431, %v430
      %v437 = vpack.c.b16 %v433, %v432
      %v442 = vunpack.c.l.b16 %v192
      %v443 = vunpack.c.l.b16 %v193
      %v444 = vunpack.c.l.b16 %v194
      %v445 = vunpack.c.l.b16 %v195
      %v446 = vpack.c.b16 %v443, %v442
      %v447 = vpack.c.b16 %v445, %v444
      %v451 = vsel %vm340, %v434, 0
      %v454 = vsel %vm340, %v435, 0
      %v457 = vsel %vm340, %v436, 0
      %v460 = vsel %vm340, %v437, 0
      %462 = vmatprep.subr.bf16.mxu0 0
      %463 = vmatpush1.bf16.msra.mxu0 %v446
      %464 = vmatprep.subr.bf16.mxu0 0
      %465 = vmatpush1.bf16.msra.mxu0 %v447
      %466 = vmatprep.subr.bf16.mxu0 0
      %467 = vmatpush1.bf16.msra.mxu0 0
      %468 = vmatprep.subr.bf16.mxu0 0
      %469 = vmatpush1.bf16.msra.mxu0 0
      %470 = vmatprep.subr.bf16.mxu0 0
      %471 = vmatpush1.bf16.msra.mxu0 0
      %472 = vmatprep.subr.bf16.mxu0 0
      %473 = vmatpush1.bf16.msra.mxu0 0
      %474 = vmatprep.subr.bf16.mxu0 0
      %475 = vmatpush1.bf16.msra.mxu0 0
      %476 = vmatprep.subr.bf16.mxu0 0
      %477 = vmatpush1.bf16.msra.mxu0 0
      %478 = vmatprep.subr.bf16.mxu0 0
      %479 = vmatpush1.bf16.msra.mxu0 0
      %480 = vmatprep.subr.bf16.mxu0 0
      %481 = vmatpush1.bf16.msra.mxu0 0
      %482 = vmatprep.subr.bf16.mxu0 0
      %483 = vmatpush1.bf16.msra.mxu0 0
      %484 = vmatprep.subr.bf16.mxu0 0
      %485 = vmatpush1.bf16.msra.mxu0 0
      %486 = vmatprep.subr.bf16.mxu0 0
      %487 = vmatpush1.bf16.msra.mxu0 0
      %488 = vmatprep.subr.bf16.mxu0 0
      %489 = vmatpush1.bf16.msra.mxu0 0
      %490 = vmatprep.subr.bf16.mxu0 0
      %491 = vmatpush1.bf16.msra.mxu0 0
      %492 = vmatprep.subr.bf16.mxu0 0
      %493 = vmatpush1.bf16.msra.mxu0 0
      %494 = vmatprep.mubr.bf16.mxu0 0
      %495 = vmatmul.mubr.bf16.gmra.mrb[0].mxu0 %v451
      %v496 = vpop.f32.mrb[0].mxu0
      %v497 = vadd.f32 %v388, %v496
      %v498 = vpop.f32.mrb[0].mxu0
      %v499 = vpop.f32.mrb[0].mxu0
      %v500 = vadd.f32 %v391, %v499
      %v501 = vpop.f32.mrb[0].mxu0
      %502 = vmatprep.mubr.bf16.mxu0 0
      %503 = vmatmul.mubr.bf16.gmra.mrb[0].mxu0 %v454
      %v504 = vpop.f32.mrb[0].mxu0
      %v505 = vadd.f32 %v396, %v504
      %v506 = vpop.f32.mrb[0].mxu0
      %v507 = vpop.f32.mrb[0].mxu0
      %v508 = vadd.f32 %v399, %v507
      %v509 = vpop.f32.mrb[0].mxu0
      %510 = vmatprep.mubr.bf16.mxu0 0
      %511 = vmatmul.mubr.bf16.gmra.mrb[0].mxu0 %v457
      %v512 = vpop.f32.mrb[0].mxu0
      %v513 = vadd.f32 %v404, %v512
      %v514 = vpop.f32.mrb[0].mxu0
      %v515 = vpop.f32.mrb[0].mxu0
      %v516 = vadd.f32 %v407, %v515
      %v517 = vpop.f32.mrb[0].mxu0
      %518 = vmatprep.mubr.bf16.mxu0 0
      %519 = vmatmul.mubr.bf16.gmra.mrb[0].mxu0 %v460
      %v520 = vpop.f32.mrb[0].mxu0
      %v521 = vadd.f32 %v412, %v520
      %v522 = vpop.f32.mrb[0].mxu0
      %v523 = vpop.f32.mrb[0].mxu0
      %v524 = vadd.f32 %v415, %v523
      %v525 = vpop.f32.mrb[0].mxu0
      %526 = vdwg.mxu0
      %vm535 = vcmask 1042432
      %vm536 = vcmask 1046532
      %vm537 = vmor %vm535, %vm536
      %v538 = vrot.slane %v172, 5
      %v539 = vrot.slane %v538, 4
      %v540 = vrot.slane %v173, 5
      %v541 = vsel %vm537, %v539, %v540
      %v542 = vrot.slane %v174, 5
      %v543 = vrot.slane %v542, 4
      %v544 = vrot.slane %v175, 5
      %v545 = vsel %vm537, %v543, %v544
      %v546 = vrot.slane %v176, 5
      %v547 = vrot.slane %v546, 4
      %v548 = vrot.slane %v177, 5
      %v549 = vsel %vm537, %v547, %v548
      %v550 = vrot.slane %v178, 5
      %v551 = vrot.slane %v550, 4
      %v552 = vrot.slane %v179, 5
      %v553 = vsel %vm537, %v551, %v552
      %v554 = vrot.slane %v180, 5
      %v555 = vrot.slane %v554, 4
      %v556 = vrot.slane %v181, 5
      %v557 = vsel %vm537, %v555, %v556
      %v558 = vrot.slane %v182, 5
      %v559 = vrot.slane %v558, 4
      %v560 = vrot.slane %v183, 5
      %v561 = vsel %vm537, %v559, %v560
      %v562 = vrot.slane %v184, 5
      %v563 = vrot.slane %v562, 4
      %v564 = vrot.slane %v185, 5
      %v565 = vsel %vm537, %v563, %v564
      %v566 = vrot.slane %v186, 5
      %v567 = vrot.slane %v566, 4
      %v568 = vrot.slane %v187, 5
      %v569 = vsel %vm537, %v567, %v568
      %s570 = scalar_lea.vmem %s1, 32
      %v571 = vld [vmem:[%s570] sm:$0xf]
      %v572 = vld [vmem:[%s570 + $0x4] sm:$0xf]
      %v573 = vld [vmem:[%s570 + $0x8] sm:$0xf]
      %v574 = vld [vmem:[%s570 + $0xc] sm:$0xf]
      %v575 = vunpack.c.l.b16 %v541
      %v576 = vunpack.c.l.b16 %v545
      %v577 = vunpack.c.l.b16 %v549
      %v578 = vunpack.c.l.b16 %v553
      %v579 = vunpack.c.l.b16 %v557
      %v580 = vunpack.c.l.b16 %v561
      %v581 = vunpack.c.l.b16 %v565
      %v582 = vunpack.c.l.b16 %v569
      %v583 = vpack.c.b16 %v576, %v575
      %v584 = vpack.c.b16 %v578, %v577
      %v585 = vpack.c.b16 %v580, %v579
      %v586 = vpack.c.b16 %v582, %v581
      %v591 = vunpack.c.l.b16 %v571
      %v592 = vunpack.c.l.b16 %v572
      %v593 = vunpack.c.l.b16 %v573
      %v594 = vunpack.c.l.b16 %v574
      %v595 = vpack.c.b16 %v592, %v591
      %v596 = vpack.c.b16 %v594, %v593
      %v600 = vsel %vm340, %v583, 0
      %v603 = vsel %vm340, %v584, 0
      %v606 = vsel %vm340, %v585, 0
      %v609 = vsel %vm340, %v586, 0
      %611 = vmatprep.subr.bf16.mxu0 0
      %612 = vmatpush1.bf16.msra.mxu0 %v595
      %613 = vmatprep.subr.bf16.mxu0 0
      %614 = vmatpush1.bf16.msra.mxu0 %v596
      %615 = vmatprep.subr.bf16.mxu0 0
      %616 = vmatpush1.bf16.msra.mxu0 0
      %617 = vmatprep.subr.bf16.mxu0 0
      %618 = vmatpush1.bf16.msra.mxu0 0
      %619 = vmatprep.subr.bf16.mxu0 0
      %620 = vmatpush1.bf16.msra.mxu0 0
      %621 = vmatprep.subr.bf16.mxu0 0
      %622 = vmatpush1.bf16.msra.mxu0 0
      %623 = vmatprep.subr.bf16.mxu0 0
      %624 = vmatpush1.bf16.msra.mxu0 0
      %625 = vmatprep.subr.bf16.mxu0 0
      %626 = vmatpush1.bf16.msra.mxu0 0
      %627 = vmatprep.subr.bf16.mxu0 0
      %628 = vmatpush1.bf16.msra.mxu0 0
      %629 = vmatprep.subr.bf16.mxu0 0
      %630 = vmatpush1.bf16.msra.mxu0 0
      %631 = vmatprep.subr.bf16.mxu0 0
      %632 = vmatpush1.bf16.msra.mxu0 0
      %633 = vmatprep.subr.bf16.mxu0 0
      %634 = vmatpush1.bf16.msra.mxu0 0
      %635 = vmatprep.subr.bf16.mxu0 0
      %636 = vmatpush1.bf16.msra.mxu0 0
      %637 = vmatprep.subr.bf16.mxu0 0
      %638 = vmatpush1.bf16.msra.mxu0 0
      %639 = vmatprep.subr.bf16.mxu0 0
      %640 = vmatpush1.bf16.msra.mxu0 0
      %641 = vmatprep.subr.bf16.mxu0 0
      %642 = vmatpush1.bf16.msra.mxu0 0
      %643 = vmatprep.mubr.bf16.mxu0 0
      %644 = vmatmul.mubr.bf16.gmra.mrb[0].mxu0 %v600
      %v645 = vpop.f32.mrb[0].mxu0
      %v646 = vadd.f32 0.0, %v645
      %v647 = vpop.f32.mrb[0].mxu0
      %v648 = vpop.f32.mrb[0].mxu0
      %v649 = vadd.f32 0.0, %v648
      %v650 = vpop.f32.mrb[0].mxu0
      %651 = vmatprep.mubr.bf16.mxu0 0
      %652 = vmatmul.mubr.bf16.gmra.mrb[0].mxu0 %v603
      %v653 = vpop.f32.mrb[0].mxu0
      %v654 = vadd.f32 0.0, %v653
      %v655 = vpop.f32.mrb[0].mxu0
      %v656 = vpop.f32.mrb[0].mxu0
      %v657 = vadd.f32 0.0, %v656
      %v658 = vpop.f32.mrb[0].mxu0
      %659 = vmatprep.mubr.bf16.mxu0 0
      %660 = vmatmul.mubr.bf16.gmra.mrb[0].mxu0 %v606
      %v661 = vpop.f32.mrb[0].mxu0
      %v662 = vadd.f32 0.0, %v661
      %v663 = vpop.f32.mrb[0].mxu0
      %v664 = vpop.f32.mrb[0].mxu0
      %v665 = vadd.f32 0.0, %v664
      %v666 = vpop.f32.mrb[0].mxu0
      %667 = vmatprep.mubr.bf16.mxu0 0
      %668 = vmatmul.mubr.bf16.gmra.mrb[0].mxu0 %v609
      %v669 = vpop.f32.mrb[0].mxu0
      %v670 = vadd.f32 0.0, %v669
      %v671 = vpop.f32.mrb[0].mxu0
      %v672 = vpop.f32.mrb[0].mxu0
      %v673 = vadd.f32 0.0, %v672
      %v674 = vpop.f32.mrb[0].mxu0
      %675 = vdwg.mxu0
      %v676 = vadd.f32 %v497, %v646
      %v677 = vadd.f32 %v500, %v649
      %v678 = vadd.f32 %v505, %v654
      %v679 = vadd.f32 %v508, %v657
      %v680 = vadd.f32 %v513, %v662
      %v681 = vadd.f32 %v516, %v665
      %v682 = vadd.f32 %v521, %v670
      %v683 = vadd.f32 %v524, %v673
      %s684 = scalar_lea.vmem %s1, 48
      %v685 = vld [vmem:[%s684] sm:$0xf]
      %v686 = vld [vmem:[%s684 + $0x4] sm:$0xf]
      %v687 = vld [vmem:[%s684 + $0x8] sm:$0xf]
      %v688 = vld [vmem:[%s684 + $0xc] sm:$0xf]
      %v690 = vunpack.c.l.b16 %v188
      %v691 = vpack.c.b16 %v428, %v427
      %v692 = vpack.c.b16 %v430, %v429
      %v693 = vpack.c.b16 %v432, %v431
      %v694 = vpack.c.b16 %v690, %v433
      %v699 = vunpack.c.l.b16 %v685
      %v700 = vunpack.c.l.b16 %v686
      %v701 = vunpack.c.l.b16 %v687
      %v702 = vunpack.c.l.b16 %v688
      %v703 = vpack.c.b16 %v700, %v699
      %v704 = vpack.c.b16 %v702, %v701
      %v708 = vsel %vm340, %v691, 0
      %v711 = vsel %vm340, %v692, 0
      %v714 = vsel %vm340, %v693, 0
      %v717 = vsel %vm340, %v694, 0
      %719 = vmatprep.subr.bf16.mxu0 0
      %720 = vmatpush1.bf16.msra.mxu0 %v703
      %721 = vmatprep.subr.bf16.mxu0 0
      %722 = vmatpush1.bf16.msra.mxu0 %v704
      %723 = vmatprep.subr.bf16.mxu0 0
      %724 = vmatpush1.bf16.msra.mxu0 0
      %725 = vmatprep.subr.bf16.mxu0 0
      %726 = vmatpush1.bf16.msra.mxu0 0
      %727 = vmatprep.subr.bf16.mxu0 0
      %728 = vmatpush1.bf16.msra.mxu0 0
      %729 = vmatprep.subr.bf16.mxu0 0
      %730 = vmatpush1.bf16.msra.mxu0 0
      %731 = vmatprep.subr.bf16.mxu0 0
      %732 = vmatpush1.bf16.msra.mxu0 0
      %733 = vmatprep.subr.bf16.mxu0 0
      %734 = vmatpush1.bf16.msra.mxu0 0
      %735 = vmatprep.subr.bf16.mxu0 0
      %736 = vmatpush1.bf16.msra.mxu0 0
      %737 = vmatprep.subr.bf16.mxu0 0
      %738 = vmatpush1.bf16.msra.mxu0 0
      %739 = vmatprep.subr.bf16.mxu0 0
      %740 = vmatpush1.bf16.msra.mxu0 0
      %741 = vmatprep.subr.bf16.mxu0 0
      %742 = vmatpush1.bf16.msra.mxu0 0
      %743 = vmatprep.subr.bf16.mxu0 0
      %744 = vmatpush1.bf16.msra.mxu0 0
      %745 = vmatprep.subr.bf16.mxu0 0
      %746 = vmatpush1.bf16.msra.mxu0 0
      %747 = vmatprep.subr.bf16.mxu0 0
      %748 = vmatpush1.bf16.msra.mxu0 0
      %749 = vmatprep.subr.bf16.mxu0 0
      %750 = vmatpush1.bf16.msra.mxu0 0
      %751 = vmatprep.mubr.bf16.mxu0 0
      %752 = vmatmul.mubr.bf16.gmra.mrb[0].mxu0 %v708
      %v753 = vpop.f32.mrb[0].mxu0
      %v754 = vadd.f32 0.0, %v753
      %v755 = vpop.f32.mrb[0].mxu0
      %v756 = vpop.f32.mrb[0].mxu0
      %v757 = vadd.f32 0.0, %v756
      %v758 = vpop.f32.mrb[0].mxu0
      %759 = vmatprep.mubr.bf16.mxu0 0
      %760 = vmatmul.mubr.bf16.gmra.mrb[0].mxu0 %v711
      %v761 = vpop.f32.mrb[0].mxu0
      %v762 = vadd.f32 0.0, %v761
      %v763 = vpop.f32.mrb[0].mxu0
      %v764 = vpop.f32.mrb[0].mxu0
      %v765 = vadd.f32 0.0, %v764
      %v766 = vpop.f32.mrb[0].mxu0
      %767 = vmatprep.mubr.bf16.mxu0 0
      %768 = vmatmul.mubr.bf16.gmra.mrb[0].mxu0 %v714
      %v769 = vpop.f32.mrb[0].mxu0
      %v770 = vadd.f32 0.0, %v769
      %v771 = vpop.f32.mrb[0].mxu0
      %v772 = vpop.f32.mrb[0].mxu0
      %v773 = vadd.f32 0.0, %v772
      %v774 = vpop.f32.mrb[0].mxu0
      %775 = vmatprep.mubr.bf16.mxu0 0
      %776 = vmatmul.mubr.bf16.gmra.mrb[0].mxu0 %v717
      %v777 = vpop.f32.mrb[0].mxu0
      %v778 = vadd.f32 0.0, %v777
      %v779 = vpop.f32.mrb[0].mxu0
      %v780 = vpop.f32.mrb[0].mxu0
      %v781 = vadd.f32 0.0, %v780
      %v782 = vpop.f32.mrb[0].mxu0
      %783 = vdwg.mxu0
      %v784 = vadd.f32 %v676, %v754
      %v785 = vadd.f32 %v677, %v757
      %v786 = vadd.f32 %v678, %v762
      %v787 = vadd.f32 %v679, %v765
      %v788 = vadd.f32 %v680, %v770
      %v789 = vadd.f32 %v681, %v773
      %v790 = vadd.f32 %v682, %v778
      %v791 = vadd.f32 %v683, %v781
      %v793 = vshrl.u32 %v188, 16
      %v795 = vrot.slane %v793, 4
      %v796 = vshll.u32 %v188, 16
      %v798 = vrot.slane %v796, 5
      %v799 = vor.u32 %v795, %v798
      %v800 = vrot.slane %v799, 4
      %v802 = vshll.u32 %v189, 16
      %v804 = vrot.slane %v802, 5
      %v805 = vsel %vm198, %v800, %v804
      %s806 = scalar_lea.vmem %s1, 64
      %v807 = vld [vmem:[%s806] sm:$0xf]
      %v808 = vld [vmem:[%s806 + $0x4] sm:$0xf]
      %v809 = vld [vmem:[%s806 + $0x8] sm:$0xf]
      %v810 = vld [vmem:[%s806 + $0xc] sm:$0xf]
      %v811 = vunpack.c.l.b16 %v805
      %v812 = vpack.c.b16 %v318, %v317
      %v813 = vpack.c.b16 %v320, %v319
      %v814 = vpack.c.b16 %v322, %v321
      %v815 = vpack.c.b16 %v811, %v323
      %v820 = vunpack.c.l.b16 %v807
      %v821 = vunpack.c.l.b16 %v808
      %v822 = vunpack.c.l.b16 %v809
      %v823 = vunpack.c.l.b16 %v810
      %v824 = vpack.c.b16 %v821, %v820
      %v825 = vpack.c.b16 %v823, %v822
      %v829 = vsel %vm340, %v812, 0
      %v832 = vsel %vm340, %v813, 0
      %v835 = vsel %vm340, %v814, 0
      %v838 = vsel %vm340, %v815, 0
      %840 = vmatprep.subr.bf16.mxu0 0
      %841 = vmatpush1.bf16.msra.mxu0 %v824
      %842 = vmatprep.subr.bf16.mxu0 0
      %843 = vmatpush1.bf16.msra.mxu0 %v825
      %844 = vmatprep.subr.bf16.mxu0 0
      %845 = vmatpush1.bf16.msra.mxu0 0
      %846 = vmatprep.subr.bf16.mxu0 0
      %847 = vmatpush1.bf16.msra.mxu0 0
      %848 = vmatprep.subr.bf16.mxu0 0
      %849 = vmatpush1.bf16.msra.mxu0 0
      %850 = vmatprep.subr.bf16.mxu0 0
      %851 = vmatpush1.bf16.msra.mxu0 0
      %852 = vmatprep.subr.bf16.mxu0 0
      %853 = vmatpush1.bf16.msra.mxu0 0
      %854 = vmatprep.subr.bf16.mxu0 0
      %855 = vmatpush1.bf16.msra.mxu0 0
      %856 = vmatprep.subr.bf16.mxu0 0
      %857 = vmatpush1.bf16.msra.mxu0 0
      %858 = vmatprep.subr.bf16.mxu0 0
      %859 = vmatpush1.bf16.msra.mxu0 0
      %860 = vmatprep.subr.bf16.mxu0 0
      %861 = vmatpush1.bf16.msra.mxu0 0
      %862 = vmatprep.subr.bf16.mxu0 0
      %863 = vmatpush1.bf16.msra.mxu0 0
      %864 = vmatprep.subr.bf16.mxu0 0
      %865 = vmatpush1.bf16.msra.mxu0 0
      %866 = vmatprep.subr.bf16.mxu0 0
      %867 = vmatpush1.bf16.msra.mxu0 0
      %868 = vmatprep.subr.bf16.mxu0 0
      %869 = vmatpush1.bf16.msra.mxu0 0
      %870 = vmatprep.subr.bf16.mxu0 0
      %871 = vmatpush1.bf16.msra.mxu0 0
      %872 = vmatprep.mubr.bf16.mxu0 0
      %873 = vmatmul.mubr.bf16.gmra.mrb[0].mxu0 %v829
      %v874 = vpop.f32.mrb[0].mxu0
      %v875 = vadd.f32 0.0, %v874
      %v876 = vpop.f32.mrb[0].mxu0
      %v877 = vpop.f32.mrb[0].mxu0
      %v878 = vadd.f32 0.0, %v877
      %v879 = vpop.f32.mrb[0].mxu0
      %880 = vmatprep.mubr.bf16.mxu0 0
      %881 = vmatmul.mubr.bf16.gmra.mrb[0].mxu0 %v832
      %v882 = vpop.f32.mrb[0].mxu0
      %v883 = vadd.f32 0.0, %v882
      %v884 = vpop.f32.mrb[0].mxu0
      %v885 = vpop.f32.mrb[0].mxu0
      %v886 = vadd.f32 0.0, %v885
      %v887 = vpop.f32.mrb[0].mxu0
      %888 = vmatprep.mubr.bf16.mxu0 0
      %889 = vmatmul.mubr.bf16.gmra.mrb[0].mxu0 %v835
      %v890 = vpop.f32.mrb[0].mxu0
      %v891 = vadd.f32 0.0, %v890
      %v892 = vpop.f32.mrb[0].mxu0
      %v893 = vpop.f32.mrb[0].mxu0
      %v894 = vadd.f32 0.0, %v893
      %v895 = vpop.f32.mrb[0].mxu0
      %896 = vmatprep.mubr.bf16.mxu0 0
      %897 = vmatmul.mubr.bf16.gmra.mrb[0].mxu0 %v838
      %v898 = vpop.f32.mrb[0].mxu0
      %v899 = vadd.f32 0.0, %v898
      %v900 = vpop.f32.mrb[0].mxu0
      %v901 = vpop.f32.mrb[0].mxu0
      %v902 = vadd.f32 0.0, %v901
      %v903 = vpop.f32.mrb[0].mxu0
      %904 = vdwg.mxu0
      %v905 = vadd.f32 %v784, %v875
      %v906 = vadd.f32 %v785, %v878
      %v907 = vadd.f32 %v786, %v883
      %v908 = vadd.f32 %v787, %v886
      %v909 = vadd.f32 %v788, %v891
      %v910 = vadd.f32 %v789, %v894
      %v911 = vadd.f32 %v790, %v899
      %v912 = vadd.f32 %v791, %v902
      %v914 = vrot.slane %v188, 5
      %v915 = vrot.slane %v914, 4
      %v916 = vrot.slane %v189, 5
      %v917 = vsel %vm537, %v915, %v916
      %s918 = scalar_lea.vmem %s1, 80
      %v919 = vld [vmem:[%s918] sm:$0xf]
      %v920 = vld [vmem:[%s918 + $0x4] sm:$0xf]
      %v921 = vld [vmem:[%s918 + $0x8] sm:$0xf]
      %v922 = vld [vmem:[%s918 + $0xc] sm:$0xf]
      %v923 = vunpack.c.l.b16 %v917
      %v924 = vpack.c.b16 %v577, %v576
      %v925 = vpack.c.b16 %v579, %v578
      %v926 = vpack.c.b16 %v581, %v580
      %v927 = vpack.c.b16 %v923, %v582
      %v932 = vunpack.c.l.b16 %v919
      %v933 = vunpack.c.l.b16 %v920
      %v934 = vunpack.c.l.b16 %v921
      %v935 = vunpack.c.l.b16 %v922
      %v936 = vpack.c.b16 %v933, %v932
      %v937 = vpack.c.b16 %v935, %v934
      %v941 = vsel %vm340, %v924, 0
      %v944 = vsel %vm340, %v925, 0
      %v947 = vsel %vm340, %v926, 0
      %v950 = vsel %vm340, %v927, 0
      %952 = vmatprep.subr.bf16.mxu0 0
      %953 = vmatpush1.bf16.msra.mxu0 %v936
      %954 = vmatprep.subr.bf16.mxu0 0
      %955 = vmatpush1.bf16.msra.mxu0 %v937
      %956 = vmatprep.subr.bf16.mxu0 0
      %957 = vmatpush1.bf16.msra.mxu0 0
      %958 = vmatprep.subr.bf16.mxu0 0
      %959 = vmatpush1.bf16.msra.mxu0 0
      %960 = vmatprep.subr.bf16.mxu0 0
      %961 = vmatpush1.bf16.msra.mxu0 0
      %962 = vmatprep.subr.bf16.mxu0 0
      %963 = vmatpush1.bf16.msra.mxu0 0
      %964 = vmatprep.subr.bf16.mxu0 0
      %965 = vmatpush1.bf16.msra.mxu0 0
      %966 = vmatprep.subr.bf16.mxu0 0
      %967 = vmatpush1.bf16.msra.mxu0 0
      %968 = vmatprep.subr.bf16.mxu0 0
      %969 = vmatpush1.bf16.msra.mxu0 0
      %970 = vmatprep.subr.bf16.mxu0 0
      %971 = vmatpush1.bf16.msra.mxu0 0
      %972 = vmatprep.subr.bf16.mxu0 0
      %973 = vmatpush1.bf16.msra.mxu0 0
      %974 = vmatprep.subr.bf16.mxu0 0
      %975 = vmatpush1.bf16.msra.mxu0 0
      %976 = vmatprep.subr.bf16.mxu0 0
      %977 = vmatpush1.bf16.msra.mxu0 0
      %978 = vmatprep.subr.bf16.mxu0 0
      %979 = vmatpush1.bf16.msra.mxu0 0
      %980 = vmatprep.subr.bf16.mxu0 0
      %981 = vmatpush1.bf16.msra.mxu0 0
      %982 = vmatprep.subr.bf16.mxu0 0
      %983 = vmatpush1.bf16.msra.mxu0 0
      %984 = vmatprep.mubr.bf16.mxu0 0
      %985 = vmatmul.mubr.bf16.gmra.mrb[0].mxu0 %v941
      %v986 = vpop.f32.mrb[0].mxu0
      %v987 = vadd.f32 0.0, %v986
      %v988 = vpop.f32.mrb[0].mxu0
      %v989 = vpop.f32.mrb[0].mxu0
      %v990 = vadd.f32 0.0, %v989
      %v991 = vpop.f32.mrb[0].mxu0
      %992 = vmatprep.mubr.bf16.mxu0 0
      %993 = vmatmul.mubr.bf16.gmra.mrb[0].mxu0 %v944
      %v994 = vpop.f32.mrb[0].mxu0
      %v995 = vadd.f32 0.0, %v994
      %v996 = vpop.f32.mrb[0].mxu0
      %v997 = vpop.f32.mrb[0].mxu0
      %v998 = vadd.f32 0.0, %v997
      %v999 = vpop.f32.mrb[0].mxu0
      %1000 = vmatprep.mubr.bf16.mxu0 0
      %1001 = vmatmul.mubr.bf16.gmra.mrb[0].mxu0 %v947
      %v1002 = vpop.f32.mrb[0].mxu0
      %v1003 = vadd.f32 0.0, %v1002
      %v1004 = vpop.f32.mrb[0].mxu0
      %v1005 = vpop.f32.mrb[0].mxu0
      %v1006 = vadd.f32 0.0, %v1005
      %v1007 = vpop.f32.mrb[0].mxu0
      %1008 = vmatprep.mubr.bf16.mxu0 0
      %1009 = vmatmul.mubr.bf16.gmra.mrb[0].mxu0 %v950
      %v1010 = vpop.f32.mrb[0].mxu0
      %v1011 = vadd.f32 0.0, %v1010
      %v1012 = vpop.f32.mrb[0].mxu0
      %v1013 = vpop.f32.mrb[0].mxu0
      %v1014 = vadd.f32 0.0, %v1013
      %v1015 = vpop.f32.mrb[0].mxu0
      %1016 = vdwg.mxu0
      %v1017 = vadd.f32 %v905, %v987
      %v1018 = vadd.f32 %v906, %v990
      %v1019 = vadd.f32 %v907, %v995
      %v1020 = vadd.f32 %v908, %v998
      %v1021 = vadd.f32 %v909, %v1003
      %v1022 = vadd.f32 %v910, %v1006
      %v1023 = vadd.f32 %v911, %v1011
      %v1024 = vadd.f32 %v912, %v1014
      %s1025 = scalar_lea.vmem %s1, 96
      %v1026 = vld [vmem:[%s1025] sm:$0xf]
      %v1027 = vld [vmem:[%s1025 + $0x4] sm:$0xf]
      %v1028 = vld [vmem:[%s1025 + $0x8] sm:$0xf]
      %v1029 = vld [vmem:[%s1025 + $0xc] sm:$0xf]
      %v1031 = vunpack.c.l.b16 %v190
      %v1032 = vpack.c.b16 %v1031, %v690
      %v1037 = vunpack.c.l.b16 %v1026
      %v1038 = vunpack.c.l.b16 %v1027
      %v1039 = vunpack.c.l.b16 %v1028
      %v1040 = vunpack.c.l.b16 %v1029
      %v1041 = vpack.c.b16 %v1038, %v1037
      %v1042 = vpack.c.b16 %v1040, %v1039
      %v1046 = vsel %vm340, %v1032, 0
      %1048 = vmatprep.subr.bf16.mxu0 0
      %1049 = vmatpush1.bf16.msra.mxu0 %v1041
      %1050 = vmatprep.subr.bf16.mxu0 0
      %1051 = vmatpush1.bf16.msra.mxu0 %v1042
      %1052 = vmatprep.subr.bf16.mxu0 0
      %1053 = vmatpush1.bf16.msra.mxu0 0
      %1054 = vmatprep.subr.bf16.mxu0 0
      %1055 = vmatpush1.bf16.msra.mxu0 0
      %1056 = vmatprep.subr.bf16.mxu0 0
      %1057 = vmatpush1.bf16.msra.mxu0 0
      %1058 = vmatprep.subr.bf16.mxu0 0
      %1059 = vmatpush1.bf16.msra.mxu0 0
      %1060 = vmatprep.subr.bf16.mxu0 0
      %1061 = vmatpush1.bf16.msra.mxu0 0
      %1062 = vmatprep.subr.bf16.mxu0 0
      %1063 = vmatpush1.bf16.msra.mxu0 0
      %1064 = vmatprep.subr.bf16.mxu0 0
      %1065 = vmatpush1.bf16.msra.mxu0 0
      %1066 = vmatprep.subr.bf16.mxu0 0
      %1067 = vmatpush1.bf16.msra.mxu0 0
      %1068 = vmatprep.subr.bf16.mxu0 0
      %1069 = vmatpush1.bf16.msra.mxu0 0
      %1070 = vmatprep.subr.bf16.mxu0 0
      %1071 = vmatpush1.bf16.msra.mxu0 0
      %1072 = vmatprep.subr.bf16.mxu0 0
      %1073 = vmatpush1.bf16.msra.mxu0 0
      %1074 = vmatprep.subr.bf16.mxu0 0
      %1075 = vmatpush1.bf16.msra.mxu0 0
      %1076 = vmatprep.subr.bf16.mxu0 0
      %1077 = vmatpush1.bf16.msra.mxu0 0
      %1078 = vmatprep.subr.bf16.mxu0 0
      %1079 = vmatpush1.bf16.msra.mxu0 0
      %1080 = vmatprep.mubr.bf16.mxu0 0
      %1081 = vmatmul.mubr.bf16.gmra.mrb[0].mxu0 %v454
      %v1082 = vpop.f32.mrb[0].mxu0
      %v1083 = vadd.f32 0.0, %v1082
      %v1084 = vpop.f32.mrb[0].mxu0
      %v1085 = vpop.f32.mrb[0].mxu0
      %v1086 = vadd.f32 0.0, %v1085
      %v1087 = vpop.f32.mrb[0].mxu0
      %1088 = vmatprep.mubr.bf16.mxu0 0
      %1089 = vmatmul.mubr.bf16.gmra.mrb[0].mxu0 %v457
      %v1090 = vpop.f32.mrb[0].mxu0
      %v1091 = vadd.f32 0.0, %v1090
      %v1092 = vpop.f32.mrb[0].mxu0
      %v1093 = vpop.f32.mrb[0].mxu0
      %v1094 = vadd.f32 0.0, %v1093
      %v1095 = vpop.f32.mrb[0].mxu0
      %1096 = vmatprep.mubr.bf16.mxu0 0
      %1097 = vmatmul.mubr.bf16.gmra.mrb[0].mxu0 %v460
      %v1098 = vpop.f32.mrb[0].mxu0
      %v1099 = vadd.f32 0.0, %v1098
      %v1100 = vpop.f32.mrb[0].mxu0
      %v1101 = vpop.f32.mrb[0].mxu0
      %v1102 = vadd.f32 0.0, %v1101
      %v1103 = vpop.f32.mrb[0].mxu0
      %1104 = vmatprep.mubr.bf16.mxu0 0
      %1105 = vmatmul.mubr.bf16.gmra.mrb[0].mxu0 %v1046
      %v1106 = vpop.f32.mrb[0].mxu0
      %v1107 = vadd.f32 0.0, %v1106
      %v1108 = vpop.f32.mrb[0].mxu0
      %v1109 = vpop.f32.mrb[0].mxu0
      %v1110 = vadd.f32 0.0, %v1109
      %v1111 = vpop.f32.mrb[0].mxu0
      %1112 = vdwg.mxu0
      %v1113 = vadd.f32 %v1017, %v1083
      %v1114 = vadd.f32 %v1018, %v1086
      %v1115 = vadd.f32 %v1019, %v1091
      %v1116 = vadd.f32 %v1020, %v1094
      %v1117 = vadd.f32 %v1021, %v1099
      %v1118 = vadd.f32 %v1022, %v1102
      %v1119 = vadd.f32 %v1023, %v1107
      %v1120 = vadd.f32 %v1024, %v1110
      %v1122 = vshrl.u32 %v190, 16
      %v1124 = vrot.slane %v1122, 4
      %v1125 = vshll.u32 %v190, 16
      %v1127 = vrot.slane %v1125, 5
      %v1128 = vor.u32 %v1124, %v1127
      %v1129 = vrot.slane %v1128, 4
      %v1131 = vshll.u32 %v191, 16
      %v1133 = vrot.slane %v1131, 5
      %v1134 = vsel %vm198, %v1129, %v1133
      %s1135 = scalar_lea.vmem %s1, 112
      %v1136 = vld [vmem:[%s1135] sm:$0xf]
      %v1137 = vld [vmem:[%s1135 + $0x4] sm:$0xf]
      %v1138 = vld [vmem:[%s1135 + $0x8] sm:$0xf]
      %v1139 = vld [vmem:[%s1135 + $0xc] sm:$0xf]
      %v1140 = vunpack.c.l.b16 %v1134
      %v1141 = vpack.c.b16 %v1140, %v811
      %v1146 = vunpack.c.l.b16 %v1136
      %v1147 = vunpack.c.l.b16 %v1137
      %v1148 = vunpack.c.l.b16 %v1138
      %v1149 = vunpack.c.l.b16 %v1139
      %v1150 = vpack.c.b16 %v1147, %v1146
      %v1151 = vpack.c.b16 %v1149, %v1148
      %v1155 = vsel %vm340, %v1141, 0
      %1157 = vmatprep.subr.bf16.mxu0 0
      %1158 = vmatpush1.bf16.msra.mxu0 %v1150
      %1159 = vmatprep.subr.bf16.mxu0 0
      %1160 = vmatpush1.bf16.msra.mxu0 %v1151
      %1161 = vmatprep.subr.bf16.mxu0 0
      %1162 = vmatpush1.bf16.msra.mxu0 0
      %1163 = vmatprep.subr.bf16.mxu0 0
      %1164 = vmatpush1.bf16.msra.mxu0 0
      %1165 = vmatprep.subr.bf16.mxu0 0
      %1166 = vmatpush1.bf16.msra.mxu0 0
      %1167 = vmatprep.subr.bf16.mxu0 0
      %1168 = vmatpush1.bf16.msra.mxu0 0
      %1169 = vmatprep.subr.bf16.mxu0 0
      %1170 = vmatpush1.bf16.msra.mxu0 0
      %1171 = vmatprep.subr.bf16.mxu0 0
      %1172 = vmatpush1.bf16.msra.mxu0 0
      %1173 = vmatprep.subr.bf16.mxu0 0
      %1174 = vmatpush1.bf16.msra.mxu0 0
      %1175 = vmatprep.subr.bf16.mxu0 0
      %1176 = vmatpush1.bf16.msra.mxu0 0
      %1177 = vmatprep.subr.bf16.mxu0 0
      %1178 = vmatpush1.bf16.msra.mxu0 0
      %1179 = vmatprep.subr.bf16.mxu0 0
      %1180 = vmatpush1.bf16.msra.mxu0 0
      %1181 = vmatprep.subr.bf16.mxu0 0
      %1182 = vmatpush1.bf16.msra.mxu0 0
      %1183 = vmatprep.subr.bf16.mxu0 0
      %1184 = vmatpush1.bf16.msra.mxu0 0
      %1185 = vmatprep.subr.bf16.mxu0 0
      %1186 = vmatpush1.bf16.msra.mxu0 0
      %1187 = vmatprep.subr.bf16.mxu0 0
      %1188 = vmatpush1.bf16.msra.mxu0 0
      %1189 = vmatprep.mubr.bf16.mxu0 0
      %1190 = vmatmul.mubr.bf16.gmra.mrb[0].mxu0 %v345
      %v1191 = vpop.f32.mrb[0].mxu0
      %v1192 = vadd.f32 0.0, %v1191
      %v1193 = vpop.f32.mrb[0].mxu0
      %v1194 = vpop.f32.mrb[0].mxu0
      %v1195 = vadd.f32 0.0, %v1194
      %v1196 = vpop.f32.mrb[0].mxu0
      %1197 = vmatprep.mubr.bf16.mxu0 0
      %1198 = vmatmul.mubr.bf16.gmra.mrb[0].mxu0 %v348
      %v1199 = vpop.f32.mrb[0].mxu0
      %v1200 = vadd.f32 0.0, %v1199
      %v1201 = vpop.f32.mrb[0].mxu0
      %v1202 = vpop.f32.mrb[0].mxu0
      %v1203 = vadd.f32 0.0, %v1202
      %v1204 = vpop.f32.mrb[0].mxu0
      %1205 = vmatprep.mubr.bf16.mxu0 0
      %1206 = vmatmul.mubr.bf16.gmra.mrb[0].mxu0 %v351
      %v1207 = vpop.f32.mrb[0].mxu0
      %v1208 = vadd.f32 0.0, %v1207
      %v1209 = vpop.f32.mrb[0].mxu0
      %v1210 = vpop.f32.mrb[0].mxu0
      %v1211 = vadd.f32 0.0, %v1210
      %v1212 = vpop.f32.mrb[0].mxu0
      %1213 = vmatprep.mubr.bf16.mxu0 0
      %1214 = vmatmul.mubr.bf16.gmra.mrb[0].mxu0 %v1155
      %v1215 = vpop.f32.mrb[0].mxu0
      %v1216 = vadd.f32 0.0, %v1215
      %v1217 = vpop.f32.mrb[0].mxu0
      %v1218 = vpop.f32.mrb[0].mxu0
      %v1219 = vadd.f32 0.0, %v1218
      %v1220 = vpop.f32.mrb[0].mxu0
      %1221 = vdwg.mxu0
      %v1222 = vadd.f32 %v1113, %v1192
      %v1223 = vadd.f32 %v1114, %v1195
      %v1224 = vadd.f32 %v1115, %v1200
      %v1225 = vadd.f32 %v1116, %v1203
      %v1226 = vadd.f32 %v1117, %v1208
      %v1227 = vadd.f32 %v1118, %v1211
      %v1228 = vadd.f32 %v1119, %v1216
      %v1229 = vadd.f32 %v1120, %v1219
      %v1231 = vrot.slane %v190, 5
      %v1232 = vrot.slane %v1231, 4
      %v1233 = vrot.slane %v191, 5
      %v1234 = vsel %vm537, %v1232, %v1233
      %s1235 = scalar_lea.vmem %s1, 128
      %v1236 = vld [vmem:[%s1235] sm:$0xf]
      %v1237 = vld [vmem:[%s1235 + $0x4] sm:$0xf]
      %v1238 = vld [vmem:[%s1235 + $0x8] sm:$0xf]
      %v1239 = vld [vmem:[%s1235 + $0xc] sm:$0xf]
      %v1240 = vunpack.c.l.b16 %v1234
      %v1241 = vpack.c.b16 %v1240, %v923
      %v1246 = vunpack.c.l.b16 %v1236
      %v1247 = vunpack.c.l.b16 %v1237
      %v1248 = vunpack.c.l.b16 %v1238
      %v1249 = vunpack.c.l.b16 %v1239
      %v1250 = vpack.c.b16 %v1247, %v1246
      %v1251 = vpack.c.b16 %v1249, %v1248
      %v1255 = vsel %vm340, %v1241, 0
      %1257 = vmatprep.subr.bf16.mxu0 0
      %1258 = vmatpush1.bf16.msra.mxu0 %v1250
      %1259 = vmatprep.subr.bf16.mxu0 0
      %1260 = vmatpush1.bf16.msra.mxu0 %v1251
      %1261 = vmatprep.subr.bf16.mxu0 0
      %1262 = vmatpush1.bf16.msra.mxu0 0
      %1263 = vmatprep.subr.bf16.mxu0 0
      %1264 = vmatpush1.bf16.msra.mxu0 0
      %1265 = vmatprep.subr.bf16.mxu0 0
      %1266 = vmatpush1.bf16.msra.mxu0 0
      %1267 = vmatprep.subr.bf16.mxu0 0
      %1268 = vmatpush1.bf16.msra.mxu0 0
      %1269 = vmatprep.subr.bf16.mxu0 0
      %1270 = vmatpush1.bf16.msra.mxu0 0
      %1271 = vmatprep.subr.bf16.mxu0 0
      %1272 = vmatpush1.bf16.msra.mxu0 0
      %1273 = vmatprep.subr.bf16.mxu0 0
      %1274 = vmatpush1.bf16.msra.mxu0 0
      %1275 = vmatprep.subr.bf16.mxu0 0
      %1276 = vmatpush1.bf16.msra.mxu0 0
      %1277 = vmatprep.subr.bf16.mxu0 0
      %1278 = vmatpush1.bf16.msra.mxu0 0
      %1279 = vmatprep.subr.bf16.mxu0 0
      %1280 = vmatpush1.bf16.msra.mxu0 0
      %1281 = vmatprep.subr.bf16.mxu0 0
      %1282 = vmatpush1.bf16.msra.mxu0 0
      %1283 = vmatprep.subr.bf16.mxu0 0
      %1284 = vmatpush1.bf16.msra.mxu0 0
      %1285 = vmatprep.subr.bf16.mxu0 0
      %1286 = vmatpush1.bf16.msra.mxu0 0
      %1287 = vmatprep.subr.bf16.mxu0 0
      %1288 = vmatpush1.bf16.msra.mxu0 0
      %1289 = vmatprep.mubr.bf16.mxu0 0
      %1290 = vmatmul.mubr.bf16.gmra.mrb[0].mxu0 %v603
      %v1291 = vpop.f32.mrb[0].mxu0
      %v1292 = vadd.f32 0.0, %v1291
      %v1293 = vpop.f32.mrb[0].mxu0
      %v1294 = vpop.f32.mrb[0].mxu0
      %v1295 = vadd.f32 0.0, %v1294
      %v1296 = vpop.f32.mrb[0].mxu0
      %1297 = vmatprep.mubr.bf16.mxu0 0
      %1298 = vmatmul.mubr.bf16.gmra.mrb[0].mxu0 %v606
      %v1299 = vpop.f32.mrb[0].mxu0
      %v1300 = vadd.f32 0.0, %v1299
      %v1301 = vpop.f32.mrb[0].mxu0
      %v1302 = vpop.f32.mrb[0].mxu0
      %v1303 = vadd.f32 0.0, %v1302
      %v1304 = vpop.f32.mrb[0].mxu0
      %1305 = vmatprep.mubr.bf16.mxu0 0
      %1306 = vmatmul.mubr.bf16.gmra.mrb[0].mxu0 %v609
      %v1307 = vpop.f32.mrb[0].mxu0
      %v1308 = vadd.f32 0.0, %v1307
      %v1309 = vpop.f32.mrb[0].mxu0
      %v1310 = vpop.f32.mrb[0].mxu0
      %v1311 = vadd.f32 0.0, %v1310
      %v1312 = vpop.f32.mrb[0].mxu0
      %1313 = vmatprep.mubr.bf16.mxu0 0
      %1314 = vmatmul.mubr.bf16.gmra.mrb[0].mxu0 %v1255
      %v1315 = vpop.f32.mrb[0].mxu0
      %v1316 = vadd.f32 0.0, %v1315
      %v1317 = vpop.f32.mrb[0].mxu0
      %v1318 = vpop.f32.mrb[0].mxu0
      %v1319 = vadd.f32 0.0, %v1318
      %v1320 = vpop.f32.mrb[0].mxu0
      %1321 = vdwg.mxu0
      %v1322 = vadd.f32 %v1222, %v1292
      %v1323 = vadd.f32 %v1223, %v1295
      %v1324 = vadd.f32 %v1224, %v1300
      %v1325 = vadd.f32 %v1225, %v1303
      %v1326 = vadd.f32 %v1226, %v1308
      %v1327 = vadd.f32 %v1227, %v1311
      %v1328 = vadd.f32 %v1228, %v1316
      %v1329 = vadd.f32 %v1229, %v1319
      %v1330 = vld [vmem:[%s2] sm:$0x1]
      %v1332 = vlaneseq
      %v1333 = vshrl.u32 %v1332, 7
      %v1334 = vsub.s32 0, %v1333
      %v1335 = vrot.slane %v1330, %v1334
      %v1337 = vadd.f32 %v1322, %v1335
      %v1338 = vadd.f32 %v1323, %v1335
      %v1339 = vadd.f32 %v1324, %v1335
      %v1340 = vadd.f32 %v1325, %v1335
      %v1341 = vadd.f32 %v1326, %v1335
      %v1342 = vadd.f32 %v1327, %v1335
      %v1343 = vadd.f32 %v1328, %v1335
      %v1344 = vadd.f32 %v1329, %v1335
      %v1345 = vmax.f32 %v1337, 0.0
      %v1346 = vmax.f32 %v1338, 0.0
      %v1347 = vmax.f32 %v1339, 0.0
      %v1348 = vmax.f32 %v1340, 0.0
      %v1349 = vmax.f32 %v1341, 0.0
      %v1350 = vmax.f32 %v1342, 0.0
      %v1351 = vmax.f32 %v1343, 0.0
      %v1352 = vmax.f32 %v1344, 0.0
      %v1353 = vpack.c.bf16 %v1345, %v1345
      %v1354 = vpack.c.bf16 %v1346, %v1346
      %v1355 = vpack.c.bf16 %v1347, %v1347
      %v1356 = vpack.c.bf16 %v1348, %v1348
      %v1357 = vpack.c.bf16 %v1349, %v1349
      %v1358 = vpack.c.bf16 %v1350, %v1350
      %v1359 = vpack.c.bf16 %v1351, %v1351
      %v1360 = vpack.c.bf16 %v1352, %v1352
      %vm1361 = vcmask 519168
      %1362 = vst.msk [vmem:[%s170] sm:$0xf] %vm1361, %v1353
      %1363 = vst.msk [vmem:[%s170 + $0x4] sm:$0xf] %vm1361, %v1354
      %1364 = vst.msk [vmem:[%s170 + $0x8] sm:$0xf] %vm1361, %v1355
      %1365 = vst.msk [vmem:[%s170 + $0xc] sm:$0xf] %vm1361, %v1356
      %1366 = vst.msk [vmem:[%s170 + $0x10] sm:$0xf] %vm1361, %v1357
      %1367 = vst.msk [vmem:[%s170 + $0x14] sm:$0xf] %vm1361, %v1358
      %1368 = vst.msk [vmem:[%s170 + $0x18] sm:$0xf] %vm1361, %v1359
      %1369 = vst.msk [vmem:[%s170 + $0x1c] sm:$0xf] %vm1361, %v1360
      %p1370 = scmp.lt.s32.totalorder %s14, 1
      %s1371 = scalar_select %p1370, %s14, 1
      %s1372 = smul.addr %s1371, 8
      %s1373 = smul.addr %s1372, 4
      %s1374 = scalar_lea.vmem %s3, %s1373
      // Predicated region
      $region33: #{_lambda_.4} parent=31 // pred_check
        %p1375 = pneg %p100
      $region34: #{_lambda_.4} parent=31 // pred_check_branch
        %1377 = sbr.rel (%p1375) target = $region36
      $region35: #{_lambda_.4} parent=31 // pred_region
        _
      $region36: #{_lambda_.4} parent=31 // pred_fallthru
        _
    $region32: #{_lambda_.4} parent=5 // pred_fallthru
      _
    %p1378 = scmp.le.s32.totalorder 2, %s9
    // Predicated region
    $region37: #{_lambda_.4} parent=5 // pred_check
      %p1379 = pneg %p1378
    $region38: #{_lambda_.4} parent=5 // pred_check_branch
      %1381 = sbr.rel (%p1379) target = $region40
    $region39: #{_lambda_.4} parent=5 // pred_region
      %s1382 = ssub.s32 %s9, 2
      // Predicated region
      $region41: #{_lambda_.4} parent=39 // pred_check
        %p1383 = pneg %p106
      $region42: #{_lambda_.4} parent=39 // pred_check_branch
        %1385 = sbr.rel (%p1383) target = $region44
      $region43: #{_lambda_.4} parent=39 // pred_region
        %p1386 = scmp.lt.s32.totalorder %s15, 1
        %s1387 = scalar_select %p1386, %s15, 1
        %s1388 = smul.addr %s1387, 8
        %s1389 = smul.addr %s1388, 4
        %s1390 = scalar_lea.vmem %s3, %s1389
      $region44: #{_lambda_.4} parent=39 // pred_fallthru
        _
    $region40: #{_lambda_.4} parent=5 // pred_fallthru
      _
  $region6: #{_lambda_.4} parent=0 // loop_footer
    %s13 = sadd.s32 1, %s9
  $region7: #{_lambda_.4} parent=0 // loop_footer_branch
    %8 = sbr.rel target = $region3
  $region8: #{_lambda_.4} parent=0 // loop_exit
    _

// kernel: _lambda_.3
$region0: #{_lambda_.3}
  #allocation0 [shape = 'u32[]', space=smem, size = 0x4, offset = 0x4, fixed_abs, tag = 'smem constant byte address 0x4 - core index']
  #allocation1 [shape = 'u32[144,128]{1,0:T(1,128)}', space=vmem, size = 0x12000, scoped, tag = 'internal scratch']
  %s0 = inlined_call_operand.vmem [shape: bf16[2,18,18,1], index: 0, kind: input, shape index: {}]
  %s1 = inlined_call_operand.vmem [shape: bf16[9,1,32], index: 1, kind: input, shape index: {}]
  %s2 = inlined_call_operand.vmem [shape: f32[1,32], index: 2, kind: input, shape index: {}]
  %s3 = inlined_call_operand.vmem [shape: bf16[2,16,16,32], index: 3, kind: output, shape index: {}]
  %s4 = sld [smem:[#allocation0]]
  $region45: #{_lambda_.3} parent=0
    _
  %s6 = ssub.s32 1, %s4
  %s7 = scalar_select 0, %s6, %s4
  loop: start=0, step=1, limit=4
  $region2: #{_lambda_.3} parent=0 // loop_pre_header
    _
  $region3: #{_lambda_.3} parent=0 // loop_header
    %s9 = sphi 0, %s13
    %p10 = scmp.ge.s32.totalorder %s9, 4
    %s19 = sphi 0, %s21
    %s22 = sphi 0, %s19
    %s23 = sphi 0, %s22
    %s39 = sphi 0, %s23
    %s43 = sphi 0, %s43
    %s45 = sphi 0, %s43
    %s46 = sphi 0, %s45
    %s60 = sphi 0, %s46
    %s64 = sphi 0, %s64
    %s66 = sphi 0, %s64
    %s67 = sphi 0, %s66
    %s81 = sphi 0, %s67
    %s87 = sphi 0, %s89
    %s90 = sphi 0, %s87
    %s91 = sphi 0, %s90
    %s107 = sphi 0, %s91
  $region4: #{_lambda_.3} parent=0 // loop_header_branch
    %12 = sbr.rel (%p10) target = $region8
  $region5: #{_lambda_.3} parent=0 // loop_body
    %s14 = ssub.s32 %s9, 1
    %s15 = ssub.s32 %s9, 2
    %s16 = sadd.s32 %s9, 1
    %s17 = ssub.s32 %s9, %s16
    %p18 = scmp.eq.s32.totalorder %s17, 0
    %s20 = sadd.s32 %s19, 1
    %s21 = scalar_select %p18, %s19, %s20
    %p24 = pneg %p18
    %p25 = scmp.eq.s32.totalorder %s9, 1
    %p26 = por %p24, %p25
    %p27 = scmp.ne.s32.totalorder %s19, %s22
    %p28 = scmp.eq.s32.totalorder %s9, 0
    %p29 = por %p27, %p28
    %p30 = scmp.ne.s32.totalorder %s19, %s22
    %p31 = scmp.eq.s32.totalorder %s14, 1
    %p32 = por %p30, %p31
    %p33 = scmp.ne.s32.totalorder %s22, %s23
    %p34 = scmp.eq.s32.totalorder %s14, 0
    %p35 = por %p33, %p34
    %p36 = scmp.ne.s32.totalorder %s22, %s23
    %p37 = scmp.eq.s32.totalorder %s15, 1
    %p38 = por %p36, %p37
    %p40 = scmp.ne.s32.totalorder %s23, %s39
    %p41 = scmp.eq.s32.totalorder %s15, 0
    %p42 = por %p40, %p41
    %s44 = sadd.s32 %s43, 1
    %p47 = scmp.eq.s32.totalorder %s9, 1
    %p48 = scmp.ne.s32.totalorder %s43, %s45
    %p49 = scmp.eq.s32.totalorder %s9, 0
    %p50 = por %p48, %p49
    %p51 = scmp.ne.s32.totalorder %s43, %s45
    %p52 = scmp.eq.s32.totalorder %s14, 1
    %p53 = por %p51, %p52
    %p54 = scmp.ne.s32.totalorder %s45, %s46
    %p55 = scmp.eq.s32.totalorder %s14, 0
    %p56 = por %p54, %p55
    %p57 = scmp.ne.s32.totalorder %s45, %s46
    %p58 = scmp.eq.s32.totalorder %s15, 1
    %p59 = por %p57, %p58
    %p61 = scmp.ne.s32.totalorder %s46, %s60
    %p62 = scmp.eq.s32.totalorder %s15, 0
    %p63 = por %p61, %p62
    %s65 = sadd.s32 %s64, 1
    %p68 = scmp.eq.s32.totalorder %s9, 1
    %p69 = scmp.ne.s32.totalorder %s64, %s66
    %p70 = scmp.eq.s32.totalorder %s9, 0
    %p71 = por %p69, %p70
    %p72 = scmp.ne.s32.totalorder %s64, %s66
    %p73 = scmp.eq.s32.totalorder %s14, 1
    %p74 = por %p72, %p73
    %p75 = scmp.ne.s32.totalorder %s66, %s67
    %p76 = scmp.eq.s32.totalorder %s14, 0
    %p77 = por %p75, %p76
    %p78 = scmp.ne.s32.totalorder %s66, %s67
    %p79 = scmp.eq.s32.totalorder %s15, 1
    %p80 = por %p78, %p79
    %p82 = scmp.ne.s32.totalorder %s67, %s81
    %p83 = scmp.eq.s32.totalorder %s15, 0
    %p84 = por %p82, %p83
    %s85 = ssub.s32 %s9, %s16
    %p86 = scmp.eq.s32.totalorder %s85, 0
    %s88 = sadd.s32 %s87, 1
    %s89 = scalar_select %p86, %s87, %s88
    %p92 = pneg %p86
    %p93 = scmp.eq.s32.totalorder %s9, 1
    %p94 = por %p92, %p93
    %p95 = scmp.ne.s32.totalorder %s87, %s90
    %p96 = scmp.eq.s32.totalorder %s9, 0
    %p97 = por %p95, %p96
    %p98 = scmp.ne.s32.totalorder %s87, %s90
    %p99 = scmp.eq.s32.totalorder %s14, 1
    %p100 = por %p98, %p99
    %p101 = scmp.ne.s32.totalorder %s90, %s91
    %p102 = scmp.eq.s32.totalorder %s14, 0
    %p103 = por %p101, %p102
    %p104 = scmp.ne.s32.totalorder %s90, %s91
    %p105 = scmp.eq.s32.totalorder %s15, 1
    %p106 = por %p104, %p105
    %p108 = scmp.ne.s32.totalorder %s91, %s107
    %p109 = scmp.eq.s32.totalorder %s15, 0
    %p110 = por %p108, %p109
    %p111 = scmp.le.s32.totalorder 1, %s9
    %p112 = scmp.lt.s32.totalorder %s9, 3
    %p113 = pnand %p111, %p112
    %p114 = pneg %p113
    // Predicated region
    $region9: #{_lambda_.3} parent=5 // pred_check
      _
    $region10: #{_lambda_.3} parent=5 // pred_check_branch
      %116 = sbr.rel (%p113) target = $region12
    $region11: #{_lambda_.3} parent=5 // pred_region
      %s117 = ssub.s32 %s9, 1
      // Predicated region
      $region13: #{_lambda_.3} parent=11 // pred_check
        %p118 = pneg %p56
      $region14: #{_lambda_.3} parent=11 // pred_check_branch
        %120 = sbr.rel (%p118) target = $region16
      $region15: #{_lambda_.3} parent=11 // pred_region
        _
      $region16: #{_lambda_.3} parent=11 // pred_fallthru
        _
      // Predicated region
      $region17: #{_lambda_.3} parent=11 // pred_check
        %p121 = pneg %p77
      $region18: #{_lambda_.3} parent=11 // pred_check_branch
        %123 = sbr.rel (%p121) target = $region20
      $region19: #{_lambda_.3} parent=11 // pred_region
        _
      $region20: #{_lambda_.3} parent=11 // pred_fallthru
        _
    $region12: #{_lambda_.3} parent=5 // pred_fallthru
      _
    %p124 = scmp.lt.s32.totalorder %s9, 2
    // Predicated region
    $region21: #{_lambda_.3} parent=5 // pred_check
      %p125 = pneg %p124
    $region22: #{_lambda_.3} parent=5 // pred_check_branch
      %127 = sbr.rel (%p125) target = $region24
    $region23: #{_lambda_.3} parent=5 // pred_region
      // Predicated region
      $region25: #{_lambda_.3} parent=23 // pred_check
        %p128 = pneg %p29
      $region26: #{_lambda_.3} parent=23 // pred_check_branch
        %130 = sbr.rel (%p128) target = $region28
      $region27: #{_lambda_.3} parent=23 // pred_region
        %p131 = scmp.lt.s32.totalorder %s9, 1
        %s132 = scalar_select %p131, %s9, 1
        %s133 = smul.addr %s132, 54
        %s134 = smul.addr %s133, 4
        %s135 = scalar_lea.vmem %s0, %s134
      $region28: #{_lambda_.3} parent=23 // pred_fallthru
        _
    $region24: #{_lambda_.3} parent=5 // pred_fallthru
      _
    %p136 = scmp.le.s32.totalorder 1, %s9
    %p137 = scmp.lt.s32.totalorder %s9, 3
    %p138 = pnand %p136, %p137
    %p139 = pneg %p138
    // Predicated region
    $region29: #{_lambda_.3} parent=5 // pred_check
      _
    $region30: #{_lambda_.3} parent=5 // pred_check_branch
      %141 = sbr.rel (%p138) target = $region32
    $region31: #{_lambda_.3} parent=5 // pred_region
      %s142 = ssub.s32 %s9, 1
      %p143 = scmp.lt.s32.totalorder %s14, 1
      %s144 = scalar_select %p143, %s14, 1
      %s145 = smul.addr %s144, 54
      %s146 = smul.addr %s145, 4
      %s147 = scalar_lea.vmem %s0, %s146
      %p148 = pneg %p35
      %p149 = pneg %p32
      %p150 = pneg %p56
      %p151 = pneg %p53
      %p152 = pneg %p77
      %p153 = pneg %p74
      %p154 = pneg %p103
      %p155 = pneg %p100
      %p156 = scmp.lt.s32.totalorder %s14, 1
      %s157 = scalar_select %p156, %s14, 1
      %s158 = smul.addr %s157, 32
      %s159 = smul.addr %s158, 4
      %s160 = scalar_lea.vmem %s3, %s159
      %p161 = scmp.lt.s32.totalorder %s14, 1
      %s162 = scalar_select %p161, %s14, 1
      %s163 = smul.addr %s162, 54
      %s164 = smul.addr %s163, 4
      %s165 = scalar_lea.vmem %s0, %s164
      %p166 = scmp.lt.s32.totalorder %s14, 1
      %s167 = scalar_select %p166, %s14, 1
      %s168 = smul.addr %s167, 32
      %s169 = smul.addr %s168, 4
      %s170 = scalar_lea.vmem %s3, %s169
      %v171 = vld [vmem:[%s165] sm:$0xf]
      %v172 = vld [vmem:[%s165 + $0x4] sm:$0xf]
      %v173 = vld [vmem:[%s165 + $0x8] sm:$0x1]
      %v174 = vld [vmem:[%s165 + $0xc] sm:$0xf]
      %v175 = vld [vmem:[%s165 + $0x10] sm:$0xf]
      %v176 = vld [vmem:[%s165 + $0x14] sm:$0x1]
      %v177 = vld [vmem:[%s165 + $0x18] sm:$0xf]
      %v178 = vld [vmem:[%s165 + $0x1c] sm:$0xf]
      %v179 = vld [vmem:[%s165 + $0x20] sm:$0x1]
      %v180 = vld [vmem:[%s165 + $0x24] sm:$0xf]
      %v181 = vld [vmem:[%s165 + $0x28] sm:$0xf]
      %v182 = vld [vmem:[%s165 + $0x2c] sm:$0x1]
      %v183 = vld [vmem:[%s165 + $0x30] sm:$0xf]
      %v184 = vld [vmem:[%s165 + $0x34] sm:$0xf]
      %v185 = vld [vmem:[%s165 + $0x38] sm:$0x1]
      %v186 = vld [vmem:[%s165 + $0x3c] sm:$0xf]
      %v187 = vld [vmem:[%s165 + $0x40] sm:$0xf]
      %v188 = vld [vmem:[%s165 + $0x44] sm:$0x1]
      %v189 = vld [vmem:[%s165 + $0x48] sm:$0xf]
      %v190 = vld [vmem:[%s165 + $0x4c] sm:$0xf]
      %v191 = vld [vmem:[%s165 + $0x50] sm:$0x1]
      %v192 = vld [vmem:[%s165 + $0x54] sm:$0xf]
      %v193 = vld [vmem:[%s165 + $0x58] sm:$0xf]
      %v194 = vld [vmem:[%s165 + $0x5c] sm:$0x1]
      %v195 = vld [vmem:[%s165 + $0x60] sm:$0xf]
      %v196 = vld [vmem:[%s165 + $0x64] sm:$0xf]
      %v197 = vld [vmem:[%s165 + $0x68] sm:$0x1]
      %v198 = vld [vmem:[%s165 + $0x6c] sm:$0xf]
      %v199 = vld [vmem:[%s165 + $0x70] sm:$0xf]
      %v200 = vld [vmem:[%s165 + $0x74] sm:$0x1]
      %v201 = vld [vmem:[%s165 + $0x78] sm:$0xf]
      %v202 = vld [vmem:[%s165 + $0x7c] sm:$0xf]
      %v203 = vld [vmem:[%s165 + $0x80] sm:$0x1]
      %v204 = vld [vmem:[%s165 + $0x84] sm:$0xf]
      %v205 = vld [vmem:[%s165 + $0x88] sm:$0xf]
      %v206 = vld [vmem:[%s165 + $0x8c] sm:$0x1]
      %v207 = vld [vmem:[%s165 + $0x90] sm:$0xf]
      %v208 = vld [vmem:[%s165 + $0x94] sm:$0xf]
      %v209 = vld [vmem:[%s165 + $0x98] sm:$0x1]
      %v210 = vld [vmem:[%s165 + $0x9c] sm:$0xf]
      %v211 = vld [vmem:[%s165 + $0xa0] sm:$0xf]
      %v212 = vld [vmem:[%s165 + $0xa4] sm:$0x1]
      %v213 = vld [vmem:[%s165 + $0xa8] sm:$0xf]
      %v214 = vld [vmem:[%s165 + $0xac] sm:$0xf]
      %v215 = vld [vmem:[%s165 + $0xb0] sm:$0x1]
      %v216 = vld [vmem:[%s165 + $0xb4] sm:$0xf]
      %v217 = vld [vmem:[%s165 + $0xb8] sm:$0xf]
      %v218 = vld [vmem:[%s165 + $0xbc] sm:$0x1]
      %v219 = vld [vmem:[%s165 + $0xc0] sm:$0xf]
      %v220 = vld [vmem:[%s165 + $0xc4] sm:$0xf]
      %v221 = vld [vmem:[%s165 + $0xc8] sm:$0x1]
      %v222 = vld [vmem:[%s165 + $0xcc] sm:$0xf]
      %v223 = vld [vmem:[%s165 + $0xd0] sm:$0xf]
      %v224 = vld [vmem:[%s165 + $0xd4] sm:$0x1]
      %v225 = vld [vmem:[%s1] sm:$0x1]
      %v226 = vunpack.c.l.bf16 %v171
      %v227 = vunpack.c.l.bf16 %v172
      %v228 = vunpack.c.l.bf16 %v174
      %v229 = vunpack.c.l.bf16 %v175
      %v230 = vunpack.c.l.bf16 %v177
      %v231 = vunpack.c.l.bf16 %v178
      %v232 = vunpack.c.l.bf16 %v180
      %v233 = vunpack.c.l.bf16 %v181
      %v234 = vunpack.c.l.bf16 %v183
      %v235 = vunpack.c.l.bf16 %v184
      %v236 = vunpack.c.l.bf16 %v186
      %v237 = vunpack.c.l.bf16 %v187
      %v238 = vunpack.c.l.bf16 %v189
      %v239 = vunpack.c.l.bf16 %v190
      %v240 = vunpack.c.l.bf16 %v192
      %v241 = vunpack.c.l.bf16 %v193
      %v242 = vunpack.c.l.bf16 %v195
      %v243 = vunpack.c.l.bf16 %v196
      %v244 = vunpack.c.l.bf16 %v198
      %v245 = vunpack.c.l.bf16 %v199
      %v246 = vunpack.c.l.bf16 %v201
      %v247 = vunpack.c.l.bf16 %v202
      %v248 = vunpack.c.l.bf16 %v204
      %v249 = vunpack.c.l.bf16 %v205
      %v250 = vunpack.c.l.bf16 %v207
      %v251 = vunpack.c.l.bf16 %v208
      %v252 = vunpack.c.l.bf16 %v210
      %v253 = vunpack.c.l.bf16 %v211
      %v254 = vunpack.c.l.bf16 %v213
      %v255 = vunpack.c.l.bf16 %v214
      %v256 = vunpack.c.l.bf16 %v216
      %v257 = vunpack.c.l.bf16 %v217
      %v258 = vunpack.c.l.bf16 %v225
      %260 = vset.pattern.permute.xlu0 0
      %261 = vperm.xlu0 %260, %v226
      %v262 = vpop.permute.xlu0 %261
      %265 = vset.pattern.permute.xlu0 0
      %266 = vperm.xlu0 %265, %v227
      %v267 = vpop.permute.xlu0 %266
      %270 = vset.pattern.permute.xlu0 0
      %271 = vperm.xlu0 %270, %v228
      %v272 = vpop.permute.xlu0 %271
      %275 = vset.pattern.permute.xlu0 0
      %276 = vperm.xlu0 %275, %v229
      %v277 = vpop.permute.xlu0 %276
      %280 = vset.pattern.permute.xlu0 0
      %281 = vperm.xlu0 %280, %v230
      %v282 = vpop.permute.xlu0 %281
      %285 = vset.pattern.permute.xlu0 0
      %286 = vperm.xlu0 %285, %v231
      %v287 = vpop.permute.xlu0 %286
      %290 = vset.pattern.permute.xlu0 0
      %291 = vperm.xlu0 %290, %v232
      %v292 = vpop.permute.xlu0 %291
      %295 = vset.pattern.permute.xlu0 0
      %296 = vperm.xlu0 %295, %v233
      %v297 = vpop.permute.xlu0 %296
      %300 = vset.pattern.permute.xlu0 0
      %301 = vperm.xlu0 %300, %v234
      %v302 = vpop.permute.xlu0 %301
      %305 = vset.pattern.permute.xlu0 0
      %306 = vperm.xlu0 %305, %v235
      %v307 = vpop.permute.xlu0 %306
      %310 = vset.pattern.permute.xlu0 0
      %311 = vperm.xlu0 %310, %v236
      %v312 = vpop.permute.xlu0 %311
      %315 = vset.pattern.permute.xlu0 0
      %316 = vperm.xlu0 %315, %v237
      %v317 = vpop.permute.xlu0 %316
      %320 = vset.pattern.permute.xlu0 0
      %321 = vperm.xlu0 %320, %v238
      %v322 = vpop.permute.xlu0 %321
      %325 = vset.pattern.permute.xlu0 0
      %326 = vperm.xlu0 %325, %v239
      %v327 = vpop.permute.xlu0 %326
      %330 = vset.pattern.permute.xlu0 0
      %331 = vperm.xlu0 %330, %v240
      %v332 = vpop.permute.xlu0 %331
      %335 = vset.pattern.permute.xlu0 0
      %336 = vperm.xlu0 %335, %v241
      %v337 = vpop.permute.xlu0 %336
      %340 = vset.pattern.permute.xlu0 0
      %341 = vperm.xlu0 %340, %v242
      %v342 = vpop.permute.xlu0 %341
      %345 = vset.pattern.permute.xlu0 0
      %346 = vperm.xlu0 %345, %v243
      %v347 = vpop.permute.xlu0 %346
      %350 = vset.pattern.permute.xlu0 0
      %351 = vperm.xlu0 %350, %v244
      %v352 = vpop.permute.xlu0 %351
      %355 = vset.pattern.permute.xlu0 0
      %356 = vperm.xlu0 %355, %v245
      %v357 = vpop.permute.xlu0 %356
      %360 = vset.pattern.permute.xlu0 0
      %361 = vperm.xlu0 %360, %v246
      %v362 = vpop.permute.xlu0 %361
      %365 = vset.pattern.permute.xlu0 0
      %366 = vperm.xlu0 %365, %v247
      %v367 = vpop.permute.xlu0 %366
      %370 = vset.pattern.permute.xlu0 0
      %371 = vperm.xlu0 %370, %v248
      %v372 = vpop.permute.xlu0 %371
      %375 = vset.pattern.permute.xlu0 0
      %376 = vperm.xlu0 %375, %v249
      %v377 = vpop.permute.xlu0 %376
      %380 = vset.pattern.permute.xlu0 0
      %381 = vperm.xlu0 %380, %v250
      %v382 = vpop.permute.xlu0 %381
      %385 = vset.pattern.permute.xlu0 0
      %386 = vperm.xlu0 %385, %v251
      %v387 = vpop.permute.xlu0 %386
      %390 = vset.pattern.permute.xlu0 0
      %391 = vperm.xlu0 %390, %v252
      %v392 = vpop.permute.xlu0 %391
      %395 = vset.pattern.permute.xlu0 0
      %396 = vperm.xlu0 %395, %v253
      %v397 = vpop.permute.xlu0 %396
      %400 = vset.pattern.permute.xlu0 0
      %401 = vperm.xlu0 %400, %v254
      %v402 = vpop.permute.xlu0 %401
      %405 = vset.pattern.permute.xlu0 0
      %406 = vperm.xlu0 %405, %v255
      %v407 = vpop.permute.xlu0 %406
      %410 = vset.pattern.permute.xlu0 0
      %411 = vperm.xlu0 %410, %v256
      %v412 = vpop.permute.xlu0 %411
      %415 = vset.pattern.permute.xlu0 0
      %416 = vperm.xlu0 %415, %v257
      %v417 = vpop.permute.xlu0 %416
      %v419 = vlaneseq
      %v420 = vshrl.u32 %v419, 7
      %v421 = vsub.s32 0, %v420
      %v422 = vrot.slane %v258, %v421
      %v423 = vmul.f32 %v262, %v422
      %v424 = vmul.f32 %v267, %v422
      %v425 = vmul.f32 %v272, %v422
      %v426 = vmul.f32 %v277, %v422
      %v427 = vmul.f32 %v282, %v422
      %v428 = vmul.f32 %v287, %v422
      %v429 = vmul.f32 %v292, %v422
      %v430 = vmul.f32 %v297, %v422
      %v431 = vmul.f32 %v302, %v422
      %v432 = vmul.f32 %v307, %v422
      %v433 = vmul.f32 %v312, %v422
      %v434 = vmul.f32 %v317, %v422
      %v435 = vmul.f32 %v322, %v422
      %v436 = vmul.f32 %v327, %v422
      %v437 = vmul.f32 %v332, %v422
      %v438 = vmul.f32 %v337, %v422
      %v439 = vmul.f32 %v342, %v422
      %v440 = vmul.f32 %v347, %v422
      %v441 = vmul.f32 %v352, %v422
      %v442 = vmul.f32 %v357, %v422
      %v443 = vmul.f32 %v362, %v422
      %v444 = vmul.f32 %v367, %v422
      %v445 = vmul.f32 %v372, %v422
      %v446 = vmul.f32 %v377, %v422
      %v447 = vmul.f32 %v382, %v422
      %v448 = vmul.f32 %v387, %v422
      %v449 = vmul.f32 %v392, %v422
      %v450 = vmul.f32 %v397, %v422
      %v451 = vmul.f32 %v402, %v422
      %v452 = vmul.f32 %v407, %v422
      %v453 = vmul.f32 %v412, %v422
      %v454 = vmul.f32 %v417, %v422
      %vm455 = vsmask.f32 3328
      %vm456 = vsmask.f32 7440
      %vm457 = vmor %vm455, %vm456
      %v459 = vshrl.u32 %v171, 16
      %v461 = vrot.slane %v459, 4
      %v462 = vshll.u32 %v171, 16
      %v464 = vrot.slane %v462, 5
      %v465 = vor.u32 %v461, %v464
      %v466 = vrot.slane %v465, 4
      %v468 = vshll.u32 %v172, 16
      %v470 = vrot.slane %v468, 5
      %v471 = vsel %vm457, %v466, %v470
      %v472 = vshrl.u32 %v172, 16
      %v474 = vrot.slane %v472, 4
      %v475 = vor.u32 %v474, %v470
      %v476 = vrot.slane %v475, 4
      %v478 = vshll.u32 %v173, 16
      %v480 = vrot.slane %v478, 5
      %v481 = vsel %vm457, %v476, %v480
      %v483 = vshrl.u32 %v174, 16
      %v485 = vrot.slane %v483, 4
      %v486 = vshll.u32 %v174, 16
      %v488 = vrot.slane %v486, 5
      %v489 = vor.u32 %v485, %v488
      %v490 = vrot.slane %v489, 4
      %v492 = vshll.u32 %v175, 16
      %v494 = vrot.slane %v492, 5
      %v495 = vsel %vm457, %v490, %v494
      %v496 = vshrl.u32 %v175, 16
      %v498 = vrot.slane %v496, 4
      %v499 = vor.u32 %v498, %v494
      %v500 = vrot.slane %v499, 4
      %v502 = vshll.u32 %v176, 16
      %v504 = vrot.slane %v502, 5
      %v505 = vsel %vm457, %v500, %v504
      %v507 = vshrl.u32 %v177, 16
      %v509 = vrot.slane %v507, 4
      %v510 = vshll.u32 %v177, 16
      %v512 = vrot.slane %v510, 5
      %v513 = vor.u32 %v509, %v512
      %v514 = vrot.slane %v513, 4
      %v516 = vshll.u32 %v178, 16
      %v518 = vrot.slane %v516, 5
      %v519 = vsel %vm457, %v514, %v518
      %v520 = vshrl.u32 %v178, 16
      %v522 = vrot.slane %v520, 4
      %v523 = vor.u32 %v522, %v518
      %v524 = vrot.slane %v523, 4
      %v526 = vshll.u32 %v179, 16
      %v528 = vrot.slane %v526, 5
      %v529 = vsel %vm457, %v524, %v528
      %v531 = vshrl.u32 %v180, 16
      %v533 = vrot.slane %v531, 4
      %v534 = vshll.u32 %v180, 16
      %v536 = vrot.slane %v534, 5
      %v537 = vor.u32 %v533, %v536
      %v538 = vrot.slane %v537, 4
      %v540 = vshll.u32 %v181, 16
      %v542 = vrot.slane %v540, 5
      %v543 = vsel %vm457, %v538, %v542
      %v544 = vshrl.u32 %v181, 16
      %v546 = vrot.slane %v544, 4
      %v547 = vor.u32 %v546, %v542
      %v548 = vrot.slane %v547, 4
      %v550 = vshll.u32 %v182, 16
      %v552 = vrot.slane %v550, 5
      %v553 = vsel %vm457, %v548, %v552
      %v555 = vshrl.u32 %v183, 16
      %v557 = vrot.slane %v555, 4
      %v558 = vshll.u32 %v183, 16
      %v560 = vrot.slane %v558, 5
      %v561 = vor.u32 %v557, %v560
      %v562 = vrot.slane %v561, 4
      %v564 = vshll.u32 %v184, 16
      %v566 = vrot.slane %v564, 5
      %v567 = vsel %vm457, %v562, %v566
      %v568 = vshrl.u32 %v184, 16
      %v570 = vrot.slane %v568, 4
      %v571 = vor.u32 %v570, %v566
      %v572 = vrot.slane %v571, 4
      %v574 = vshll.u32 %v185, 16
      %v576 = vrot.slane %v574, 5
      %v577 = vsel %vm457, %v572, %v576
      %v579 = vshrl.u32 %v186, 16
      %v581 = vrot.slane %v579, 4
      %v582 = vshll.u32 %v186, 16
      %v584 = vrot.slane %v582, 5
      %v585 = vor.u32 %v581, %v584
      %v586 = vrot.slane %v585, 4
      %v588 = vshll.u32 %v187, 16
      %v590 = vrot.slane %v588, 5
      %v591 = vsel %vm457, %v586, %v590
      %v592 = vshrl.u32 %v187, 16
      %v594 = vrot.slane %v592, 4
      %v595 = vor.u32 %v594, %v590
      %v596 = vrot.slane %v595, 4
      %v598 = vshll.u32 %v188, 16
      %v600 = vrot.slane %v598, 5
      %v601 = vsel %vm457, %v596, %v600
      %v603 = vshrl.u32 %v189, 16
      %v605 = vrot.slane %v603, 4
      %v606 = vshll.u32 %v189, 16
      %v608 = vrot.slane %v606, 5
      %v609 = vor.u32 %v605, %v608
      %v610 = vrot.slane %v609, 4
      %v612 = vshll.u32 %v190, 16
      %v614 = vrot.slane %v612, 5
      %v615 = vsel %vm457, %v610, %v614
      %v616 = vshrl.u32 %v190, 16
      %v618 = vrot.slane %v616, 4
      %v619 = vor.u32 %v618, %v614
      %v620 = vrot.slane %v619, 4
      %v622 = vshll.u32 %v191, 16
      %v624 = vrot.slane %v622, 5
      %v625 = vsel %vm457, %v620, %v624
      %v627 = vshrl.u32 %v192, 16
      %v629 = vrot.slane %v627, 4
      %v630 = vshll.u32 %v192, 16
      %v632 = vrot.slane %v630, 5
      %v633 = vor.u32 %v629, %v632
      %v634 = vrot.slane %v633, 4
      %v636 = vshll.u32 %v193, 16
      %v638 = vrot.slane %v636, 5
      %v639 = vsel %vm457, %v634, %v638
      %v640 = vshrl.u32 %v193, 16
      %v642 = vrot.slane %v640, 4
      %v643 = vor.u32 %v642, %v638
      %v644 = vrot.slane %v643, 4
      %v646 = vshll.u32 %v194, 16
      %v648 = vrot.slane %v646, 5
      %v649 = vsel %vm457, %v644, %v648
      %v651 = vshrl.u32 %v195, 16
      %v653 = vrot.slane %v651, 4
      %v654 = vshll.u32 %v195, 16
      %v656 = vrot.slane %v654, 5
      %v657 = vor.u32 %v653, %v656
      %v658 = vrot.slane %v657, 4
      %v660 = vshll.u32 %v196, 16
      %v662 = vrot.slane %v660, 5
      %v663 = vsel %vm457, %v658, %v662
      %v664 = vshrl.u32 %v196, 16
      %v666 = vrot.slane %v664, 4
      %v667 = vor.u32 %v666, %v662
      %v668 = vrot.slane %v667, 4
      %v670 = vshll.u32 %v197, 16
      %v672 = vrot.slane %v670, 5
      %v673 = vsel %vm457, %v668, %v672
      %v675 = vshrl.u32 %v198, 16
      %v677 = vrot.slane %v675, 4
      %v678 = vshll.u32 %v198, 16
      %v680 = vrot.slane %v678, 5
      %v681 = vor.u32 %v677, %v680
      %v682 = vrot.slane %v681, 4
      %v684 = vshll.u32 %v199, 16
      %v686 = vrot.slane %v684, 5
      %v687 = vsel %vm457, %v682, %v686
      %v688 = vshrl.u32 %v199, 16
      %v690 = vrot.slane %v688, 4
      %v691 = vor.u32 %v690, %v686
      %v692 = vrot.slane %v691, 4
      %v694 = vshll.u32 %v200, 16
      %v696 = vrot.slane %v694, 5
      %v697 = vsel %vm457, %v692, %v696
      %v699 = vshrl.u32 %v201, 16
      %v701 = vrot.slane %v699, 4
      %v702 = vshll.u32 %v201, 16
      %v704 = vrot.slane %v702, 5
      %v705 = vor.u32 %v701, %v704
      %v706 = vrot.slane %v705, 4
      %v708 = vshll.u32 %v202, 16
      %v710 = vrot.slane %v708, 5
      %v711 = vsel %vm457, %v706, %v710
      %v712 = vshrl.u32 %v202, 16
      %v714 = vrot.slane %v712, 4
      %v715 = vor.u32 %v714, %v710
      %v716 = vrot.slane %v715, 4
      %v718 = vshll.u32 %v203, 16
      %v720 = vrot.slane %v718, 5
      %v721 = vsel %vm457, %v716, %v720
      %v723 = vshrl.u32 %v204, 16
      %v725 = vrot.slane %v723, 4
      %v726 = vshll.u32 %v204, 16
      %v728 = vrot.slane %v726, 5
      %v729 = vor.u32 %v725, %v728
      %v730 = vrot.slane %v729, 4
      %v732 = vshll.u32 %v205, 16
      %v734 = vrot.slane %v732, 5
      %v735 = vsel %vm457, %v730, %v734
      %v736 = vshrl.u32 %v205, 16
      %v738 = vrot.slane %v736, 4
      %v739 = vor.u32 %v738, %v734
      %v740 = vrot.slane %v739, 4
      %v742 = vshll.u32 %v206, 16
      %v744 = vrot.slane %v742, 5
      %v745 = vsel %vm457, %v740, %v744
      %v747 = vshrl.u32 %v207, 16
      %v749 = vrot.slane %v747, 4
      %v750 = vshll.u32 %v207, 16
      %v752 = vrot.slane %v750, 5
      %v753 = vor.u32 %v749, %v752
      %v754 = vrot.slane %v753, 4
      %v756 = vshll.u32 %v208, 16
      %v758 = vrot.slane %v756, 5
      %v759 = vsel %vm457, %v754, %v758
      %v760 = vshrl.u32 %v208, 16
      %v762 = vrot.slane %v760, 4
      %v763 = vor.u32 %v762, %v758
      %v764 = vrot.slane %v763, 4
      %v766 = vshll.u32 %v209, 16
      %v768 = vrot.slane %v766, 5
      %v769 = vsel %vm457, %v764, %v768
      %v771 = vshrl.u32 %v210, 16
      %v773 = vrot.slane %v771, 4
      %v774 = vshll.u32 %v210, 16
      %v776 = vrot.slane %v774, 5
      %v777 = vor.u32 %v773, %v776
      %v778 = vrot.slane %v777, 4
      %v780 = vshll.u32 %v211, 16
      %v782 = vrot.slane %v780, 5
      %v783 = vsel %vm457, %v778, %v782
      %v784 = vshrl.u32 %v211, 16
      %v786 = vrot.slane %v784, 4
      %v787 = vor.u32 %v786, %v782
      %v788 = vrot.slane %v787, 4
      %v790 = vshll.u32 %v212, 16
      %v792 = vrot.slane %v790, 5
      %v793 = vsel %vm457, %v788, %v792
      %v795 = vshrl.u32 %v213, 16
      %v797 = vrot.slane %v795, 4
      %v798 = vshll.u32 %v213, 16
      %v800 = vrot.slane %v798, 5
      %v801 = vor.u32 %v797, %v800
      %v802 = vrot.slane %v801, 4
      %v804 = vshll.u32 %v214, 16
      %v806 = vrot.slane %v804, 5
      %v807 = vsel %vm457, %v802, %v806
      %v808 = vshrl.u32 %v214, 16
      %v810 = vrot.slane %v808, 4
      %v811 = vor.u32 %v810, %v806
      %v812 = vrot.slane %v811, 4
      %v814 = vshll.u32 %v215, 16
      %v816 = vrot.slane %v814, 5
      %v817 = vsel %vm457, %v812, %v816
      %v819 = vshrl.u32 %v216, 16
      %v821 = vrot.slane %v819, 4
      %v822 = vshll.u32 %v216, 16
      %v824 = vrot.slane %v822, 5
      %v825 = vor.u32 %v821, %v824
      %v826 = vrot.slane %v825, 4
      %v828 = vshll.u32 %v217, 16
      %v830 = vrot.slane %v828, 5
      %v831 = vsel %vm457, %v826, %v830
      %v832 = vshrl.u32 %v217, 16
      %v834 = vrot.slane %v832, 4
      %v835 = vor.u32 %v834, %v830
      %v836 = vrot.slane %v835, 4
      %v838 = vshll.u32 %v218, 16
      %v840 = vrot.slane %v838, 5
      %v841 = vsel %vm457, %v836, %v840
      %s874 = scalar_lea.vmem %s1, 1
      %v875 = vld [vmem:[%s874] sm:$0x1]
      %v876 = vunpack.c.l.bf16 %v471
      %v877 = vunpack.c.l.bf16 %v481
      %v878 = vunpack.c.l.bf16 %v495
      %v879 = vunpack.c.l.bf16 %v505
      %v880 = vunpack.c.l.bf16 %v519
      %v881 = vunpack.c.l.bf16 %v529
      %v882 = vunpack.c.l.bf16 %v543
      %v883 = vunpack.c.l.bf16 %v553
      %v884 = vunpack.c.l.bf16 %v567
      %v885 = vunpack.c.l.bf16 %v577
      %v886 = vunpack.c.l.bf16 %v591
      %v887 = vunpack.c.l.bf16 %v601
      %v888 = vunpack.c.l.bf16 %v615
      %v889 = vunpack.c.l.bf16 %v625
      %v890 = vunpack.c.l.bf16 %v639
      %v891 = vunpack.c.l.bf16 %v649
      %v892 = vunpack.c.l.bf16 %v663
      %v893 = vunpack.c.l.bf16 %v673
      %v894 = vunpack.c.l.bf16 %v687
      %v895 = vunpack.c.l.bf16 %v697
      %v896 = vunpack.c.l.bf16 %v711
      %v897 = vunpack.c.l.bf16 %v721
      %v898 = vunpack.c.l.bf16 %v735
      %v899 = vunpack.c.l.bf16 %v745
      %v900 = vunpack.c.l.bf16 %v759
      %v901 = vunpack.c.l.bf16 %v769
      %v902 = vunpack.c.l.bf16 %v783
      %v903 = vunpack.c.l.bf16 %v793
      %v904 = vunpack.c.l.bf16 %v807
      %v905 = vunpack.c.l.bf16 %v817
      %v906 = vunpack.c.l.bf16 %v831
      %v907 = vunpack.c.l.bf16 %v841
      %v908 = vunpack.c.l.bf16 %v875
      %910 = vset.pattern.permute.xlu0 0
      %911 = vperm.xlu0 %910, %v876
      %v912 = vpop.permute.xlu0 %911
      %915 = vset.pattern.permute.xlu0 0
      %916 = vperm.xlu0 %915, %v877
      %v917 = vpop.permute.xlu0 %916
      %920 = vset.pattern.permute.xlu0 0
      %921 = vperm.xlu0 %920, %v878
      %v922 = vpop.permute.xlu0 %921
      %925 = vset.pattern.permute.xlu0 0
      %926 = vperm.xlu0 %925, %v879
      %v927 = vpop.permute.xlu0 %926
      %930 = vset.pattern.permute.xlu0 0
      %931 = vperm.xlu0 %930, %v880
      %v932 = vpop.permute.xlu0 %931
      %935 = vset.pattern.permute.xlu0 0
      %936 = vperm.xlu0 %935, %v881
      %v937 = vpop.permute.xlu0 %936
      %940 = vset.pattern.permute.xlu0 0
      %941 = vperm.xlu0 %940, %v882
      %v942 = vpop.permute.xlu0 %941
      %945 = vset.pattern.permute.xlu0 0
      %946 = vperm.xlu0 %945, %v883
      %v947 = vpop.permute.xlu0 %946
      %950 = vset.pattern.permute.xlu0 0
      %951 = vperm.xlu0 %950, %v884
      %v952 = vpop.permute.xlu0 %951
      %955 = vset.pattern.permute.xlu0 0
      %956 = vperm.xlu0 %955, %v885
      %v957 = vpop.permute.xlu0 %956
      %960 = vset.pattern.permute.xlu0 0
      %961 = vperm.xlu0 %960, %v886
      %v962 = vpop.permute.xlu0 %961
      %965 = vset.pattern.permute.xlu0 0
      %966 = vperm.xlu0 %965, %v887
      %v967 = vpop.permute.xlu0 %966
      %970 = vset.pattern.permute.xlu0 0
      %971 = vperm.xlu0 %970, %v888
      %v972 = vpop.permute.xlu0 %971
      %975 = vset.pattern.permute.xlu0 0
      %976 = vperm.xlu0 %975, %v889
      %v977 = vpop.permute.xlu0 %976
      %980 = vset.pattern.permute.xlu0 0
      %981 = vperm.xlu0 %980, %v890
      %v982 = vpop.permute.xlu0 %981
      %985 = vset.pattern.permute.xlu0 0
      %986 = vperm.xlu0 %985, %v891
      %v987 = vpop.permute.xlu0 %986
      %990 = vset.pattern.permute.xlu0 0
      %991 = vperm.xlu0 %990, %v892
      %v992 = vpop.permute.xlu0 %991
      %995 = vset.pattern.permute.xlu0 0
      %996 = vperm.xlu0 %995, %v893
      %v997 = vpop.permute.xlu0 %996
      %1000 = vset.pattern.permute.xlu0 0
      %1001 = vperm.xlu0 %1000, %v894
      %v1002 = vpop.permute.xlu0 %1001
      %1005 = vset.pattern.permute.xlu0 0
      %1006 = vperm.xlu0 %1005, %v895
      %v1007 = vpop.permute.xlu0 %1006
      %1010 = vset.pattern.permute.xlu0 0
      %1011 = vperm.xlu0 %1010, %v896
      %v1012 = vpop.permute.xlu0 %1011
      %1015 = vset.pattern.permute.xlu0 0
      %1016 = vperm.xlu0 %1015, %v897
      %v1017 = vpop.permute.xlu0 %1016
      %1020 = vset.pattern.permute.xlu0 0
      %1021 = vperm.xlu0 %1020, %v898
      %v1022 = vpop.permute.xlu0 %1021
      %1025 = vset.pattern.permute.xlu0 0
      %1026 = vperm.xlu0 %1025, %v899
      %v1027 = vpop.permute.xlu0 %1026
      %1030 = vset.pattern.permute.xlu0 0
      %1031 = vperm.xlu0 %1030, %v900
      %v1032 = vpop.permute.xlu0 %1031
      %1035 = vset.pattern.permute.xlu0 0
      %1036 = vperm.xlu0 %1035, %v901
      %v1037 = vpop.permute.xlu0 %1036
      %1040 = vset.pattern.permute.xlu0 0
      %1041 = vperm.xlu0 %1040, %v902
      %v1042 = vpop.permute.xlu0 %1041
      %1045 = vset.pattern.permute.xlu0 0
      %1046 = vperm.xlu0 %1045, %v903
      %v1047 = vpop.permute.xlu0 %1046
      %1050 = vset.pattern.permute.xlu0 0
      %1051 = vperm.xlu0 %1050, %v904
      %v1052 = vpop.permute.xlu0 %1051
      %1055 = vset.pattern.permute.xlu0 0
      %1056 = vperm.xlu0 %1055, %v905
      %v1057 = vpop.permute.xlu0 %1056
      %1060 = vset.pattern.permute.xlu0 0
      %1061 = vperm.xlu0 %1060, %v906
      %v1062 = vpop.permute.xlu0 %1061
      %1065 = vset.pattern.permute.xlu0 0
      %1066 = vperm.xlu0 %1065, %v907
      %v1067 = vpop.permute.xlu0 %1066
      %v1069 = vlaneseq
      %v1070 = vshrl.u32 %v1069, 7
      %v1071 = vsub.s32 0, %v1070
      %v1072 = vrot.slane %v908, %v1071
      %v1073 = vmul.f32 %v912, %v1072
      %v1074 = vmul.f32 %v917, %v1072
      %v1075 = vmul.f32 %v922, %v1072
      %v1076 = vmul.f32 %v927, %v1072
      %v1077 = vmul.f32 %v932, %v1072
      %v1078 = vmul.f32 %v937, %v1072
      %v1079 = vmul.f32 %v942, %v1072
      %v1080 = vmul.f32 %v947, %v1072
      %v1081 = vmul.f32 %v952, %v1072
      %v1082 = vmul.f32 %v957, %v1072
      %v1083 = vmul.f32 %v962, %v1072
      %v1084 = vmul.f32 %v967, %v1072
      %v1085 = vmul.f32 %v972, %v1072
      %v1086 = vmul.f32 %v977, %v1072
      %v1087 = vmul.f32 %v982, %v1072
      %v1088 = vmul.f32 %v987, %v1072
      %v1089 = vmul.f32 %v992, %v1072
      %v1090 = vmul.f32 %v997, %v1072
      %v1091 = vmul.f32 %v1002, %v1072
      %v1092 = vmul.f32 %v1007, %v1072
      %v1093 = vmul.f32 %v1012, %v1072
      %v1094 = vmul.f32 %v1017, %v1072
      %v1095 = vmul.f32 %v1022, %v1072
      %v1096 = vmul.f32 %v1027, %v1072
      %v1097 = vmul.f32 %v1032, %v1072
      %v1098 = vmul.f32 %v1037, %v1072
      %v1099 = vmul.f32 %v1042, %v1072
      %v1100 = vmul.f32 %v1047, %v1072
      %v1101 = vmul.f32 %v1052, %v1072
      %v1102 = vmul.f32 %v1057, %v1072
      %v1103 = vmul.f32 %v1062, %v1072
      %v1104 = vmul.f32 %v1067, %v1072
      %v1105 = vadd.f32 %v423, %v1073
      %v1106 = vadd.f32 %v424, %v1074
      %v1107 = vadd.f32 %v425, %v1075
      %v1108 = vadd.f32 %v426, %v1076
      %v1109 = vadd.f32 %v427, %v1077
      %v1110 = vadd.f32 %v428, %v1078
      %v1111 = vadd.f32 %v429, %v1079
      %v1112 = vadd.f32 %v430, %v1080
      %v1113 = vadd.f32 %v431, %v1081
      %v1114 = vadd.f32 %v432, %v1082
      %v1115 = vadd.f32 %v433, %v1083
      %v1116 = vadd.f32 %v434, %v1084
      %v1117 = vadd.f32 %v435, %v1085
      %v1118 = vadd.f32 %v436, %v1086
      %v1119 = vadd.f32 %v437, %v1087
      %v1120 = vadd.f32 %v438, %v1088
      %v1121 = vadd.f32 %v439, %v1089
      %v1122 = vadd.f32 %v440, %v1090
      %v1123 = vadd.f32 %v441, %v1091
      %v1124 = vadd.f32 %v442, %v1092
      %v1125 = vadd.f32 %v443, %v1093
      %v1126 = vadd.f32 %v444, %v1094
      %v1127 = vadd.f32 %v445, %v1095
      %v1128 = vadd.f32 %v446, %v1096
      %v1129 = vadd.f32 %v447, %v1097
      %v1130 = vadd.f32 %v448, %v1098
      %v1131 = vadd.f32 %v449, %v1099
      %v1132 = vadd.f32 %v450, %v1100
      %v1133 = vadd.f32 %v451, %v1101
      %v1134 = vadd.f32 %v452, %v1102
      %v1135 = vadd.f32 %v453, %v1103
      %v1136 = vadd.f32 %v454, %v1104
      %vm1185 = vcmask 1042432
      %vm1186 = vcmask 1046532
      %vm1187 = vmor %vm1185, %vm1186
      %v1188 = vrot.slane %v171, 5
      %v1189 = vrot.slane %v1188, 4
      %v1190 = vrot.slane %v172, 5
      %v1191 = vsel %vm1187, %v1189, %v1190
      %v1192 = vrot.slane %v1190, 4
      %v1193 = vrot.slane %v173, 5
      %v1194 = vsel %vm1187, %v1192, %v1193
      %v1195 = vrot.slane %v174, 5
      %v1196 = vrot.slane %v1195, 4
      %v1197 = vrot.slane %v175, 5
      %v1198 = vsel %vm1187, %v1196, %v1197
      %v1199 = vrot.slane %v1197, 4
      %v1200 = vrot.slane %v176, 5
      %v1201 = vsel %vm1187, %v1199, %v1200
      %v1202 = vrot.slane %v177, 5
      %v1203 = vrot.slane %v1202, 4
      %v1204 = vrot.slane %v178, 5
      %v1205 = vsel %vm1187, %v1203, %v1204
      %v1206 = vrot.slane %v1204, 4
      %v1207 = vrot.slane %v179, 5
      %v1208 = vsel %vm1187, %v1206, %v1207
      %v1209 = vrot.slane %v180, 5
      %v1210 = vrot.slane %v1209, 4
      %v1211 = vrot.slane %v181, 5
      %v1212 = vsel %vm1187, %v1210, %v1211
      %v1213 = vrot.slane %v1211, 4
      %v1214 = vrot.slane %v182, 5
      %v1215 = vsel %vm1187, %v1213, %v1214
      %v1216 = vrot.slane %v183, 5
      %v1217 = vrot.slane %v1216, 4
      %v1218 = vrot.slane %v184, 5
      %v1219 = vsel %vm1187, %v1217, %v1218
      %v1220 = vrot.slane %v1218, 4
      %v1221 = vrot.slane %v185, 5
      %v1222 = vsel %vm1187, %v1220, %v1221
      %v1223 = vrot.slane %v186, 5
      %v1224 = vrot.slane %v1223, 4
      %v1225 = vrot.slane %v187, 5
      %v1226 = vsel %vm1187, %v1224, %v1225
      %v1227 = vrot.slane %v1225, 4
      %v1228 = vrot.slane %v188, 5
      %v1229 = vsel %vm1187, %v1227, %v1228
      %v1230 = vrot.slane %v189, 5
      %v1231 = vrot.slane %v1230, 4
      %v1232 = vrot.slane %v190, 5
      %v1233 = vsel %vm1187, %v1231, %v1232
      %v1234 = vrot.slane %v1232, 4
      %v1235 = vrot.slane %v191, 5
      %v1236 = vsel %vm1187, %v1234, %v1235
      %v1237 = vrot.slane %v192, 5
      %v1238 = vrot.slane %v1237, 4
      %v1239 = vrot.slane %v193, 5
      %v1240 = vsel %vm1187, %v1238, %v1239
      %v1241 = vrot.slane %v1239, 4
      %v1242 = vrot.slane %v194, 5
      %v1243 = vsel %vm1187, %v1241, %v1242
      %v1244 = vrot.slane %v195, 5
      %v1245 = vrot.slane %v1244, 4
      %v1246 = vrot.slane %v196, 5
      %v1247 = vsel %vm1187, %v1245, %v1246
      %v1248 = vrot.slane %v1246, 4
      %v1249 = vrot.slane %v197, 5
      %v1250 = vsel %vm1187, %v1248, %v1249
      %v1251 = vrot.slane %v198, 5
      %v1252 = vrot.slane %v1251, 4
      %v1253 = vrot.slane %v199, 5
      %v1254 = vsel %vm1187, %v1252, %v1253
      %v1255 = vrot.slane %v1253, 4
      %v1256 = vrot.slane %v200, 5
      %v1257 = vsel %vm1187, %v1255, %v1256
      %v1258 = vrot.slane %v201, 5
      %v1259 = vrot.slane %v1258, 4
      %v1260 = vrot.slane %v202, 5
      %v1261 = vsel %vm1187, %v1259, %v1260
      %v1262 = vrot.slane %v1260, 4
      %v1263 = vrot.slane %v203, 5
      %v1264 = vsel %vm1187, %v1262, %v1263
      %v1265 = vrot.slane %v204, 5
      %v1266 = vrot.slane %v1265, 4
      %v1267 = vrot.slane %v205, 5
      %v1268 = vsel %vm1187, %v1266, %v1267
      %v1269 = vrot.slane %v1267, 4
      %v1270 = vrot.slane %v206, 5
      %v1271 = vsel %vm1187, %v1269, %v1270
      %v1272 = vrot.slane %v207, 5
      %v1273 = vrot.slane %v1272, 4
      %v1274 = vrot.slane %v208, 5
      %v1275 = vsel %vm1187, %v1273, %v1274
      %v1276 = vrot.slane %v1274, 4
      %v1277 = vrot.slane %v209, 5
      %v1278 = vsel %vm1187, %v1276, %v1277
      %v1279 = vrot.slane %v210, 5
      %v1280 = vrot.slane %v1279, 4
      %v1281 = vrot.slane %v211, 5
      %v1282 = vsel %vm1187, %v1280, %v1281
      %v1283 = vrot.slane %v1281, 4
      %v1284 = vrot.slane %v212, 5
      %v1285 = vsel %vm1187, %v1283, %v1284
      %v1286 = vrot.slane %v213, 5
      %v1287 = vrot.slane %v1286, 4
      %v1288 = vrot.slane %v214, 5
      %v1289 = vsel %vm1187, %v1287, %v1288
      %v1290 = vrot.slane %v1288, 4
      %v1291 = vrot.slane %v215, 5
      %v1292 = vsel %vm1187, %v1290, %v1291
      %v1293 = vrot.slane %v216, 5
      %v1294 = vrot.slane %v1293, 4
      %v1295 = vrot.slane %v217, 5
      %v1296 = vsel %vm1187, %v1294, %v1295
      %v1297 = vrot.slane %v1295, 4
      %v1298 = vrot.slane %v218, 5
      %v1299 = vsel %vm1187, %v1297, %v1298
      %s1332 = scalar_lea.vmem %s1, 2
      %v1333 = vld [vmem:[%s1332] sm:$0x1]
      %v1334 = vunpack.c.l.bf16 %v1191
      %v1335 = vunpack.c.l.bf16 %v1194
      %v1336 = vunpack.c.l.bf16 %v1198
      %v1337 = vunpack.c.l.bf16 %v1201
      %v1338 = vunpack.c.l.bf16 %v1205
      %v1339 = vunpack.c.l.bf16 %v1208
      %v1340 = vunpack.c.l.bf16 %v1212
      %v1341 = vunpack.c.l.bf16 %v1215
      %v1342 = vunpack.c.l.bf16 %v1219
      %v1343 = vunpack.c.l.bf16 %v1222
      %v1344 = vunpack.c.l.bf16 %v1226
      %v1345 = vunpack.c.l.bf16 %v1229
      %v1346 = vunpack.c.l.bf16 %v1233
      %v1347 = vunpack.c.l.bf16 %v1236
      %v1348 = vunpack.c.l.bf16 %v1240
      %v1349 = vunpack.c.l.bf16 %v1243
      %v1350 = vunpack.c.l.bf16 %v1247
      %v1351 = vunpack.c.l.bf16 %v1250
      %v1352 = vunpack.c.l.bf16 %v1254
      %v1353 = vunpack.c.l.bf16 %v1257
      %v1354 = vunpack.c.l.bf16 %v1261
      %v1355 = vunpack.c.l.bf16 %v1264
      %v1356 = vunpack.c.l.bf16 %v1268
      %v1357 = vunpack.c.l.bf16 %v1271
      %v1358 = vunpack.c.l.bf16 %v1275
      %v1359 = vunpack.c.l.bf16 %v1278
      %v1360 = vunpack.c.l.bf16 %v1282
      %v1361 = vunpack.c.l.bf16 %v1285
      %v1362 = vunpack.c.l.bf16 %v1289
      %v1363 = vunpack.c.l.bf16 %v1292
      %v1364 = vunpack.c.l.bf16 %v1296
      %v1365 = vunpack.c.l.bf16 %v1299
      %v1366 = vunpack.c.l.bf16 %v1333
      %1368 = vset.pattern.permute.xlu0 0
      %1369 = vperm.xlu0 %1368, %v1334
      %v1370 = vpop.permute.xlu0 %1369
      %1373 = vset.pattern.permute.xlu0 0
      %1374 = vperm.xlu0 %1373, %v1335
      %v1375 = vpop.permute.xlu0 %1374
      %1378 = vset.pattern.permute.xlu0 0
      %1379 = vperm.xlu0 %1378, %v1336
      %v1380 = vpop.permute.xlu0 %1379
      %1383 = vset.pattern.permute.xlu0 0
      %1384 = vperm.xlu0 %1383, %v1337
      %v1385 = vpop.permute.xlu0 %1384
      %1388 = vset.pattern.permute.xlu0 0
      %1389 = vperm.xlu0 %1388, %v1338
      %v1390 = vpop.permute.xlu0 %1389
      %1393 = vset.pattern.permute.xlu0 0
      %1394 = vperm.xlu0 %1393, %v1339
      %v1395 = vpop.permute.xlu0 %1394
      %1398 = vset.pattern.permute.xlu0 0
      %1399 = vperm.xlu0 %1398, %v1340
      %v1400 = vpop.permute.xlu0 %1399
      %1403 = vset.pattern.permute.xlu0 0
      %1404 = vperm.xlu0 %1403, %v1341
      %v1405 = vpop.permute.xlu0 %1404
      %1408 = vset.pattern.permute.xlu0 0
      %1409 = vperm.xlu0 %1408, %v1342
      %v1410 = vpop.permute.xlu0 %1409
      %1413 = vset.pattern.permute.xlu0 0
      %1414 = vperm.xlu0 %1413, %v1343
      %v1415 = vpop.permute.xlu0 %1414
      %1418 = vset.pattern.permute.xlu0 0
      %1419 = vperm.xlu0 %1418, %v1344
      %v1420 = vpop.permute.xlu0 %1419
      %1423 = vset.pattern.permute.xlu0 0
      %1424 = vperm.xlu0 %1423, %v1345
      %v1425 = vpop.permute.xlu0 %1424
      %1428 = vset.pattern.permute.xlu0 0
      %1429 = vperm.xlu0 %1428, %v1346
      %v1430 = vpop.permute.xlu0 %1429
      %1433 = vset.pattern.permute.xlu0 0
      %1434 = vperm.xlu0 %1433, %v1347
      %v1435 = vpop.permute.xlu0 %1434
      %1438 = vset.pattern.permute.xlu0 0
      %1439 = vperm.xlu0 %1438, %v1348
      %v1440 = vpop.permute.xlu0 %1439
      %1443 = vset.pattern.permute.xlu0 0
      %1444 = vperm.xlu0 %1443, %v1349
      %v1445 = vpop.permute.xlu0 %1444
      %1448 = vset.pattern.permute.xlu0 0
      %1449 = vperm.xlu0 %1448, %v1350
      %v1450 = vpop.permute.xlu0 %1449
      %1453 = vset.pattern.permute.xlu0 0
      %1454 = vperm.xlu0 %1453, %v1351
      %v1455 = vpop.permute.xlu0 %1454
      %1458 = vset.pattern.permute.xlu0 0
      %1459 = vperm.xlu0 %1458, %v1352
      %v1460 = vpop.permute.xlu0 %1459
      %1463 = vset.pattern.permute.xlu0 0
      %1464 = vperm.xlu0 %1463, %v1353
      %v1465 = vpop.permute.xlu0 %1464
      %1468 = vset.pattern.permute.xlu0 0
      %1469 = vperm.xlu0 %1468, %v1354
      %v1470 = vpop.permute.xlu0 %1469
      %1473 = vset.pattern.permute.xlu0 0
      %1474 = vperm.xlu0 %1473, %v1355
      %v1475 = vpop.permute.xlu0 %1474
      %1478 = vset.pattern.permute.xlu0 0
      %1479 = vperm.xlu0 %1478, %v1356
      %v1480 = vpop.permute.xlu0 %1479
      %1483 = vset.pattern.permute.xlu0 0
      %1484 = vperm.xlu0 %1483, %v1357
      %v1485 = vpop.permute.xlu0 %1484
      %1488 = vset.pattern.permute.xlu0 0
      %1489 = vperm.xlu0 %1488, %v1358
      %v1490 = vpop.permute.xlu0 %1489
      %1493 = vset.pattern.permute.xlu0 0
      %1494 = vperm.xlu0 %1493, %v1359
      %v1495 = vpop.permute.xlu0 %1494
      %1498 = vset.pattern.permute.xlu0 0
      %1499 = vperm.xlu0 %1498, %v1360
      %v1500 = vpop.permute.xlu0 %1499
      %1503 = vset.pattern.permute.xlu0 0
      %1504 = vperm.xlu0 %1503, %v1361
      %v1505 = vpop.permute.xlu0 %1504
      %1508 = vset.pattern.permute.xlu0 0
      %1509 = vperm.xlu0 %1508, %v1362
      %v1510 = vpop.permute.xlu0 %1509
      %1513 = vset.pattern.permute.xlu0 0
      %1514 = vperm.xlu0 %1513, %v1363
      %v1515 = vpop.permute.xlu0 %1514
      %1518 = vset.pattern.permute.xlu0 0
      %1519 = vperm.xlu0 %1518, %v1364
      %v1520 = vpop.permute.xlu0 %1519
      %1523 = vset.pattern.permute.xlu0 0
      %1524 = vperm.xlu0 %1523, %v1365
      %v1525 = vpop.permute.xlu0 %1524
      %v1527 = vlaneseq
      %v1528 = vshrl.u32 %v1527, 7
      %v1529 = vsub.s32 0, %v1528
      %v1530 = vrot.slane %v1366, %v1529
      %v1531 = vmul.f32 %v1370, %v1530
      %v1532 = vmul.f32 %v1375, %v1530
      %v1533 = vmul.f32 %v1380, %v1530
      %v1534 = vmul.f32 %v1385, %v1530
      %v1535 = vmul.f32 %v1390, %v1530
      %v1536 = vmul.f32 %v1395, %v1530
      %v1537 = vmul.f32 %v1400, %v1530
      %v1538 = vmul.f32 %v1405, %v1530
      %v1539 = vmul.f32 %v1410, %v1530
      %v1540 = vmul.f32 %v1415, %v1530
      %v1541 = vmul.f32 %v1420, %v1530
      %v1542 = vmul.f32 %v1425, %v1530
      %v1543 = vmul.f32 %v1430, %v1530
      %v1544 = vmul.f32 %v1435, %v1530
      %v1545 = vmul.f32 %v1440, %v1530
      %v1546 = vmul.f32 %v1445, %v1530
      %v1547 = vmul.f32 %v1450, %v1530
      %v1548 = vmul.f32 %v1455, %v1530
      %v1549 = vmul.f32 %v1460, %v1530
      %v1550 = vmul.f32 %v1465, %v1530
      %v1551 = vmul.f32 %v1470, %v1530
      %v1552 = vmul.f32 %v1475, %v1530
      %v1553 = vmul.f32 %v1480, %v1530
      %v1554 = vmul.f32 %v1485, %v1530
      %v1555 = vmul.f32 %v1490, %v1530
      %v1556 = vmul.f32 %v1495, %v1530
      %v1557 = vmul.f32 %v1500, %v1530
      %v1558 = vmul.f32 %v1505, %v1530
      %v1559 = vmul.f32 %v1510, %v1530
      %v1560 = vmul.f32 %v1515, %v1530
      %v1561 = vmul.f32 %v1520, %v1530
      %v1562 = vmul.f32 %v1525, %v1530
      %v1563 = vadd.f32 %v1105, %v1531
      %v1564 = vadd.f32 %v1106, %v1532
      %v1565 = vadd.f32 %v1107, %v1533
      %v1566 = vadd.f32 %v1108, %v1534
      %v1567 = vadd.f32 %v1109, %v1535
      %v1568 = vadd.f32 %v1110, %v1536
      %v1569 = vadd.f32 %v1111, %v1537
      %v1570 = vadd.f32 %v1112, %v1538
      %v1571 = vadd.f32 %v1113, %v1539
      %v1572 = vadd.f32 %v1114, %v1540
      %v1573 = vadd.f32 %v1115, %v1541
      %v1574 = vadd.f32 %v1116, %v1542
      %v1575 = vadd.f32 %v1117, %v1543
      %v1576 = vadd.f32 %v1118, %v1544
      %v1577 = vadd.f32 %v1119, %v1545
      %v1578 = vadd.f32 %v1120, %v1546
      %v1579 = vadd.f32 %v1121, %v1547
      %v1580 = vadd.f32 %v1122, %v1548
      %v1581 = vadd.f32 %v1123, %v1549
      %v1582 = vadd.f32 %v1124, %v1550
      %v1583 = vadd.f32 %v1125, %v1551
      %v1584 = vadd.f32 %v1126, %v1552
      %v1585 = vadd.f32 %v1127, %v1553
      %v1586 = vadd.f32 %v1128, %v1554
      %v1587 = vadd.f32 %v1129, %v1555
      %v1588 = vadd.f32 %v1130, %v1556
      %v1589 = vadd.f32 %v1131, %v1557
      %v1590 = vadd.f32 %v1132, %v1558
      %v1591 = vadd.f32 %v1133, %v1559
      %v1592 = vadd.f32 %v1134, %v1560
      %v1593 = vadd.f32 %v1135, %v1561
      %v1594 = vadd.f32 %v1136, %v1562
      %s1595 = scalar_lea.vmem %s1, 3
      %v1596 = vld [vmem:[%s1595] sm:$0x1]
      %v1597 = vunpack.c.l.bf16 %v219
      %v1598 = vunpack.c.l.bf16 %v220
      %v1599 = vunpack.c.l.bf16 %v1596
      %1601 = vset.pattern.permute.xlu0 0
      %1602 = vperm.xlu0 %1601, %v1597
      %v1603 = vpop.permute.xlu0 %1602
      %1606 = vset.pattern.permute.xlu0 0
      %1607 = vperm.xlu0 %1606, %v1598
      %v1608 = vpop.permute.xlu0 %1607
      %v1610 = vlaneseq
      %v1611 = vshrl.u32 %v1610, 7
      %v1612 = vsub.s32 0, %v1611
      %v1613 = vrot.slane %v1599, %v1612
      %v1614 = vmul.f32 %v272, %v1613
      %v1615 = vmul.f32 %v277, %v1613
      %v1616 = vmul.f32 %v282, %v1613
      %v1617 = vmul.f32 %v287, %v1613
      %v1618 = vmul.f32 %v292, %v1613
      %v1619 = vmul.f32 %v297, %v1613
      %v1620 = vmul.f32 %v302, %v1613
      %v1621 = vmul.f32 %v307, %v1613
      %v1622 = vmul.f32 %v312, %v1613
      %v1623 = vmul.f32 %v317, %v1613
      %v1624 = vmul.f32 %v322, %v1613
      %v1625 = vmul.f32 %v327, %v1613
      %v1626 = vmul.f32 %v332, %v1613
      %v1627 = vmul.f32 %v337, %v1613
      %v1628 = vmul.f32 %v342, %v1613
      %v1629 = vmul.f32 %v347, %v1613
      %v1630 = vmul.f32 %v352, %v1613
      %v1631 = vmul.f32 %v357, %v1613
      %v1632 = vmul.f32 %v362, %v1613
      %v1633 = vmul.f32 %v367, %v1613
      %v1634 = vmul.f32 %v372, %v1613
      %v1635 = vmul.f32 %v377, %v1613
      %v1636 = vmul.f32 %v382, %v1613
      %v1637 = vmul.f32 %v387, %v1613
      %v1638 = vmul.f32 %v392, %v1613
      %v1639 = vmul.f32 %v397, %v1613
      %v1640 = vmul.f32 %v402, %v1613
      %v1641 = vmul.f32 %v407, %v1613
      %v1642 = vmul.f32 %v412, %v1613
      %v1643 = vmul.f32 %v417, %v1613
      %v1644 = vmul.f32 %v1603, %v1613
      %v1645 = vmul.f32 %v1608, %v1613
      %v1646 = vadd.f32 %v1563, %v1614
      %v1647 = vadd.f32 %v1564, %v1615
      %v1648 = vadd.f32 %v1565, %v1616
      %v1649 = vadd.f32 %v1566, %v1617
      %v1650 = vadd.f32 %v1567, %v1618
      %v1651 = vadd.f32 %v1568, %v1619
      %v1652 = vadd.f32 %v1569, %v1620
      %v1653 = vadd.f32 %v1570, %v1621
      %v1654 = vadd.f32 %v1571, %v1622
      %v1655 = vadd.f32 %v1572, %v1623
      %v1656 = vadd.f32 %v1573, %v1624
      %v1657 = vadd.f32 %v1574, %v1625
      %v1658 = vadd.f32 %v1575, %v1626
      %v1659 = vadd.f32 %v1576, %v1627
      %v1660 = vadd.f32 %v1577, %v1628
      %v1661 = vadd.f32 %v1578, %v1629
      %v1662 = vadd.f32 %v1579, %v1630
      %v1663 = vadd.f32 %v1580, %v1631
      %v1664 = vadd.f32 %v1581, %v1632
      %v1665 = vadd.f32 %v1582, %v1633
      %v1666 = vadd.f32 %v1583, %v1634
      %v1667 = vadd.f32 %v1584, %v1635
      %v1668 = vadd.f32 %v1585, %v1636
      %v1669 = vadd.f32 %v1586, %v1637
      %v1670 = vadd.f32 %v1587, %v1638
      %v1671 = vadd.f32 %v1588, %v1639
      %v1672 = vadd.f32 %v1589, %v1640
      %v1673 = vadd.f32 %v1590, %v1641
      %v1674 = vadd.f32 %v1591, %v1642
      %v1675 = vadd.f32 %v1592, %v1643
      %v1676 = vadd.f32 %v1593, %v1644
      %v1677 = vadd.f32 %v1594, %v1645
      %v1679 = vshrl.u32 %v219, 16
      %v1681 = vrot.slane %v1679, 4
      %v1682 = vshll.u32 %v219, 16
      %v1684 = vrot.slane %v1682, 5
      %v1685 = vor.u32 %v1681, %v1684
      %v1686 = vrot.slane %v1685, 4
      %v1688 = vshll.u32 %v220, 16
      %v1690 = vrot.slane %v1688, 5
      %v1691 = vsel %vm457, %v1686, %v1690
      %v1692 = vshrl.u32 %v220, 16
      %v1694 = vrot.slane %v1692, 4
      %v1695 = vor.u32 %v1694, %v1690
      %v1696 = vrot.slane %v1695, 4
      %v1698 = vshll.u32 %v221, 16
      %v1700 = vrot.slane %v1698, 5
      %v1701 = vsel %vm457, %v1696, %v1700
      %s1704 = scalar_lea.vmem %s1, 4
      %v1705 = vld [vmem:[%s1704] sm:$0x1]
      %v1706 = vunpack.c.l.bf16 %v1691
      %v1707 = vunpack.c.l.bf16 %v1701
      %v1708 = vunpack.c.l.bf16 %v1705
      %1710 = vset.pattern.permute.xlu0 0
      %1711 = vperm.xlu0 %1710, %v1706
      %v1712 = vpop.permute.xlu0 %1711
      %1715 = vset.pattern.permute.xlu0 0
      %1716 = vperm.xlu0 %1715, %v1707
      %v1717 = vpop.permute.xlu0 %1716
      %v1719 = vlaneseq
      %v1720 = vshrl.u32 %v1719, 7
      %v1721 = vsub.s32 0, %v1720
      %v1722 = vrot.slane %v1708, %v1721
      %v1723 = vmul.f32 %v922, %v1722
      %v1724 = vmul.f32 %v927, %v1722
      %v1725 = vmul.f32 %v932, %v1722
      %v1726 = vmul.f32 %v937, %v1722
      %v1727 = vmul.f32 %v942, %v1722
      %v1728 = vmul.f32 %v947, %v1722
      %v1729 = vmul.f32 %v952, %v1722
      %v1730 = vmul.f32 %v957, %v1722
      %v1731 = vmul.f32 %v962, %v1722
      %v1732 = vmul.f32 %v967, %v1722
      %v1733 = vmul.f32 %v972, %v1722
      %v1734 = vmul.f32 %v977, %v1722
      %v1735 = vmul.f32 %v982, %v1722
      %v1736 = vmul.f32 %v987, %v1722
      %v1737 = vmul.f32 %v992, %v1722
      %v1738 = vmul.f32 %v997, %v1722
      %v1739 = vmul.f32 %v1002, %v1722
      %v1740 = vmul.f32 %v1007, %v1722
      %v1741 = vmul.f32 %v1012, %v1722
      %v1742 = vmul.f32 %v1017, %v1722
      %v1743 = vmul.f32 %v1022, %v1722
      %v1744 = vmul.f32 %v1027, %v1722
      %v1745 = vmul.f32 %v1032, %v1722
      %v1746 = vmul.f32 %v1037, %v1722
      %v1747 = vmul.f32 %v1042, %v1722
      %v1748 = vmul.f32 %v1047, %v1722
      %v1749 = vmul.f32 %v1052, %v1722
      %v1750 = vmul.f32 %v1057, %v1722
      %v1751 = vmul.f32 %v1062, %v1722
      %v1752 = vmul.f32 %v1067, %v1722
      %v1753 = vmul.f32 %v1712, %v1722
      %v1754 = vmul.f32 %v1717, %v1722
      %v1755 = vadd.f32 %v1646, %v1723
      %v1756 = vadd.f32 %v1647, %v1724
      %v1757 = vadd.f32 %v1648, %v1725
      %v1758 = vadd.f32 %v1649, %v1726
      %v1759 = vadd.f32 %v1650, %v1727
      %v1760 = vadd.f32 %v1651, %v1728
      %v1761 = vadd.f32 %v1652, %v1729
      %v1762 = vadd.f32 %v1653, %v1730
      %v1763 = vadd.f32 %v1654, %v1731
      %v1764 = vadd.f32 %v1655, %v1732
      %v1765 = vadd.f32 %v1656, %v1733
      %v1766 = vadd.f32 %v1657, %v1734
      %v1767 = vadd.f32 %v1658, %v1735
      %v1768 = vadd.f32 %v1659, %v1736
      %v1769 = vadd.f32 %v1660, %v1737
      %v1770 = vadd.f32 %v1661, %v1738
      %v1771 = vadd.f32 %v1662, %v1739
      %v1772 = vadd.f32 %v1663, %v1740
      %v1773 = vadd.f32 %v1664, %v1741
      %v1774 = vadd.f32 %v1665, %v1742
      %v1775 = vadd.f32 %v1666, %v1743
      %v1776 = vadd.f32 %v1667, %v1744
      %v1777 = vadd.f32 %v1668, %v1745
      %v1778 = vadd.f32 %v1669, %v1746
      %v1779 = vadd.f32 %v1670, %v1747
      %v1780 = vadd.f32 %v1671, %v1748
      %v1781 = vadd.f32 %v1672, %v1749
      %v1782 = vadd.f32 %v1673, %v1750
      %v1783 = vadd.f32 %v1674, %v1751
      %v1784 = vadd.f32 %v1675, %v1752
      %v1785 = vadd.f32 %v1676, %v1753
      %v1786 = vadd.f32 %v1677, %v1754
      %v1790 = vrot.slane %v219, 5
      %v1791 = vrot.slane %v1790, 4
      %v1792 = vrot.slane %v220, 5
      %v1793 = vsel %vm1187, %v1791, %v1792
      %v1794 = vrot.slane %v1792, 4
      %v1795 = vrot.slane %v221, 5
      %v1796 = vsel %vm1187, %v1794, %v1795
      %s1799 = scalar_lea.vmem %s1, 5
      %v1800 = vld [vmem:[%s1799] sm:$0x1]
      %v1801 = vunpack.c.l.bf16 %v1793
      %v1802 = vunpack.c.l.bf16 %v1796
      %v1803 = vunpack.c.l.bf16 %v1800
      %1805 = vset.pattern.permute.xlu0 0
      %1806 = vperm.xlu0 %1805, %v1801
      %v1807 = vpop.permute.xlu0 %1806
      %1810 = vset.pattern.permute.xlu0 0
      %1811 = vperm.xlu0 %1810, %v1802
      %v1812 = vpop.permute.xlu0 %1811
      %v1814 = vlaneseq
      %v1815 = vshrl.u32 %v1814, 7
      %v1816 = vsub.s32 0, %v1815
      %v1817 = vrot.slane %v1803, %v1816
      %v1818 = vmul.f32 %v1380, %v1817
      %v1819 = vmul.f32 %v1385, %v1817
      %v1820 = vmul.f32 %v1390, %v1817
      %v1821 = vmul.f32 %v1395, %v1817
      %v1822 = vmul.f32 %v1400, %v1817
      %v1823 = vmul.f32 %v1405, %v1817
      %v1824 = vmul.f32 %v1410, %v1817
      %v1825 = vmul.f32 %v1415, %v1817
      %v1826 = vmul.f32 %v1420, %v1817
      %v1827 = vmul.f32 %v1425, %v1817
      %v1828 = vmul.f32 %v1430, %v1817
      %v1829 = vmul.f32 %v1435, %v1817
      %v1830 = vmul.f32 %v1440, %v1817
      %v1831 = vmul.f32 %v1445, %v1817
      %v1832 = vmul.f32 %v1450, %v1817
      %v1833 = vmul.f32 %v1455, %v1817
      %v1834 = vmul.f32 %v1460, %v1817
      %v1835 = vmul.f32 %v1465, %v1817
      %v1836 = vmul.f32 %v1470, %v1817
      %v1837 = vmul.f32 %v1475, %v1817
      %v1838 = vmul.f32 %v1480, %v1817
      %v1839 = vmul.f32 %v1485, %v1817
      %v1840 = vmul.f32 %v1490, %v1817
      %v1841 = vmul.f32 %v1495, %v1817
      %v1842 = vmul.f32 %v1500, %v1817
      %v1843 = vmul.f32 %v1505, %v1817
      %v1844 = vmul.f32 %v1510, %v1817
      %v1845 = vmul.f32 %v1515, %v1817
      %v1846 = vmul.f32 %v1520, %v1817
      %v1847 = vmul.f32 %v1525, %v1817
      %v1848 = vmul.f32 %v1807, %v1817
      %v1849 = vmul.f32 %v1812, %v1817
      %v1850 = vadd.f32 %v1755, %v1818
      %v1851 = vadd.f32 %v1756, %v1819
      %v1852 = vadd.f32 %v1757, %v1820
      %v1853 = vadd.f32 %v1758, %v1821
      %v1854 = vadd.f32 %v1759, %v1822
      %v1855 = vadd.f32 %v1760, %v1823
      %v1856 = vadd.f32 %v1761, %v1824
      %v1857 = vadd.f32 %v1762, %v1825
      %v1858 = vadd.f32 %v1763, %v1826
      %v1859 = vadd.f32 %v1764, %v1827
      %v1860 = vadd.f32 %v1765, %v1828
      %v1861 = vadd.f32 %v1766, %v1829
      %v1862 = vadd.f32 %v1767, %v1830
      %v1863 = vadd.f32 %v1768, %v1831
      %v1864 = vadd.f32 %v1769, %v1832
      %v1865 = vadd.f32 %v1770, %v1833
      %v1866 = vadd.f32 %v1771, %v1834
      %v1867 = vadd.f32 %v1772, %v1835
      %v1868 = vadd.f32 %v1773, %v1836
      %v1869 = vadd.f32 %v1774, %v1837
      %v1870 = vadd.f32 %v1775, %v1838
      %v1871 = vadd.f32 %v1776, %v1839
      %v1872 = vadd.f32 %v1777, %v1840
      %v1873 = vadd.f32 %v1778, %v1841
      %v1874 = vadd.f32 %v1779, %v1842
      %v1875 = vadd.f32 %v1780, %v1843
      %v1876 = vadd.f32 %v1781, %v1844
      %v1877 = vadd.f32 %v1782, %v1845
      %v1878 = vadd.f32 %v1783, %v1846
      %v1879 = vadd.f32 %v1784, %v1847
      %v1880 = vadd.f32 %v1785, %v1848
      %v1881 = vadd.f32 %v1786, %v1849
      %s1882 = scalar_lea.vmem %s1, 6
      %v1883 = vld [vmem:[%s1882] sm:$0x1]
      %v1884 = vunpack.c.l.bf16 %v222
      %v1885 = vunpack.c.l.bf16 %v223
      %v1886 = vunpack.c.l.bf16 %v1883
      %1888 = vset.pattern.permute.xlu0 0
      %1889 = vperm.xlu0 %1888, %v1884
      %v1890 = vpop.permute.xlu0 %1889
      %1893 = vset.pattern.permute.xlu0 0
      %1894 = vperm.xlu0 %1893, %v1885
      %v1895 = vpop.permute.xlu0 %1894
      %v1897 = vlaneseq
      %v1898 = vshrl.u32 %v1897, 7
      %v1899 = vsub.s32 0, %v1898
      %v1900 = vrot.slane %v1886, %v1899
      %v1901 = vmul.f32 %v282, %v1900
      %v1902 = vmul.f32 %v287, %v1900
      %v1903 = vmul.f32 %v292, %v1900
      %v1904 = vmul.f32 %v297, %v1900
      %v1905 = vmul.f32 %v302, %v1900
      %v1906 = vmul.f32 %v307, %v1900
      %v1907 = vmul.f32 %v312, %v1900
      %v1908 = vmul.f32 %v317, %v1900
      %v1909 = vmul.f32 %v322, %v1900
      %v1910 = vmul.f32 %v327, %v1900
      %v1911 = vmul.f32 %v332, %v1900
      %v1912 = vmul.f32 %v337, %v1900
      %v1913 = vmul.f32 %v342, %v1900
      %v1914 = vmul.f32 %v347, %v1900
      %v1915 = vmul.f32 %v352, %v1900
      %v1916 = vmul.f32 %v357, %v1900
      %v1917 = vmul.f32 %v362, %v1900
      %v1918 = vmul.f32 %v367, %v1900
      %v1919 = vmul.f32 %v372, %v1900
      %v1920 = vmul.f32 %v377, %v1900
      %v1921 = vmul.f32 %v382, %v1900
      %v1922 = vmul.f32 %v387, %v1900
      %v1923 = vmul.f32 %v392, %v1900
      %v1924 = vmul.f32 %v397, %v1900
      %v1925 = vmul.f32 %v402, %v1900
      %v1926 = vmul.f32 %v407, %v1900
      %v1927 = vmul.f32 %v412, %v1900
      %v1928 = vmul.f32 %v417, %v1900
      %v1929 = vmul.f32 %v1603, %v1900
      %v1930 = vmul.f32 %v1608, %v1900
      %v1931 = vmul.f32 %v1890, %v1900
      %v1932 = vmul.f32 %v1895, %v1900
      %v1933 = vadd.f32 %v1850, %v1901
      %v1934 = vadd.f32 %v1851, %v1902
      %v1935 = vadd.f32 %v1852, %v1903
      %v1936 = vadd.f32 %v1853, %v1904
      %v1937 = vadd.f32 %v1854, %v1905
      %v1938 = vadd.f32 %v1855, %v1906
      %v1939 = vadd.f32 %v1856, %v1907
      %v1940 = vadd.f32 %v1857, %v1908
      %v1941 = vadd.f32 %v1858, %v1909
      %v1942 = vadd.f32 %v1859, %v1910
      %v1943 = vadd.f32 %v1860, %v1911
      %v1944 = vadd.f32 %v1861, %v1912
      %v1945 = vadd.f32 %v1862, %v1913
      %v1946 = vadd.f32 %v1863, %v1914
      %v1947 = vadd.f32 %v1864, %v1915
      %v1948 = vadd.f32 %v1865, %v1916
      %v1949 = vadd.f32 %v1866, %v1917
      %v1950 = vadd.f32 %v1867, %v1918
      %v1951 = vadd.f32 %v1868, %v1919
      %v1952 = vadd.f32 %v1869, %v1920
      %v1953 = vadd.f32 %v1870, %v1921
      %v1954 = vadd.f32 %v1871, %v1922
      %v1955 = vadd.f32 %v1872, %v1923
      %v1956 = vadd.f32 %v1873, %v1924
      %v1957 = vadd.f32 %v1874, %v1925
      %v1958 = vadd.f32 %v1875, %v1926
      %v1959 = vadd.f32 %v1876, %v1927
      %v1960 = vadd.f32 %v1877, %v1928
      %v1961 = vadd.f32 %v1878, %v1929
      %v1962 = vadd.f32 %v1879, %v1930
      %v1963 = vadd.f32 %v1880, %v1931
      %v1964 = vadd.f32 %v1881, %v1932
      %v1966 = vshrl.u32 %v222, 16
      %v1968 = vrot.slane %v1966, 4
      %v1969 = vshll.u32 %v222, 16
      %v1971 = vrot.slane %v1969, 5
      %v1972 = vor.u32 %v1968, %v1971
      %v1973 = vrot.slane %v1972, 4
      %v1975 = vshll.u32 %v223, 16
      %v1977 = vrot.slane %v1975, 5
      %v1978 = vsel %vm457, %v1973, %v1977
      %v1979 = vshrl.u32 %v223, 16
      %v1981 = vrot.slane %v1979, 4
      %v1982 = vor.u32 %v1981, %v1977
      %v1983 = vrot.slane %v1982, 4
      %v1985 = vshll.u32 %v224, 16
      %v1987 = vrot.slane %v1985, 5
      %v1988 = vsel %vm457, %v1983, %v1987
      %s1991 = scalar_lea.vmem %s1, 7
      %v1992 = vld [vmem:[%s1991] sm:$0x1]
      %v1993 = vunpack.c.l.bf16 %v1978
      %v1994 = vunpack.c.l.bf16 %v1988
      %v1995 = vunpack.c.l.bf16 %v1992
      %1997 = vset.pattern.permute.xlu0 0
      %1998 = vperm.xlu0 %1997, %v1993
      %v1999 = vpop.permute.xlu0 %1998
      %2002 = vset.pattern.permute.xlu0 0
      %2003 = vperm.xlu0 %2002, %v1994
      %v2004 = vpop.permute.xlu0 %2003
      %v2006 = vlaneseq
      %v2007 = vshrl.u32 %v2006, 7
      %v2008 = vsub.s32 0, %v2007
      %v2009 = vrot.slane %v1995, %v2008
      %v2010 = vmul.f32 %v932, %v2009
      %v2011 = vmul.f32 %v937, %v2009
      %v2012 = vmul.f32 %v942, %v2009
      %v2013 = vmul.f32 %v947, %v2009
      %v2014 = vmul.f32 %v952, %v2009
      %v2015 = vmul.f32 %v957, %v2009
      %v2016 = vmul.f32 %v962, %v2009
      %v2017 = vmul.f32 %v967, %v2009
      %v2018 = vmul.f32 %v972, %v2009
      %v2019 = vmul.f32 %v977, %v2009
      %v2020 = vmul.f32 %v982, %v2009
      %v2021 = vmul.f32 %v987, %v2009
      %v2022 = vmul.f32 %v992, %v2009
      %v2023 = vmul.f32 %v997, %v2009
      %v2024 = vmul.f32 %v1002, %v2009
      %v2025 = vmul.f32 %v1007, %v2009
      %v2026 = vmul.f32 %v1012, %v2009
      %v2027 = vmul.f32 %v1017, %v2009
      %v2028 = vmul.f32 %v1022, %v2009
      %v2029 = vmul.f32 %v1027, %v2009
      %v2030 = vmul.f32 %v1032, %v2009
      %v2031 = vmul.f32 %v1037, %v2009
      %v2032 = vmul.f32 %v1042, %v2009
      %v2033 = vmul.f32 %v1047, %v2009
      %v2034 = vmul.f32 %v1052, %v2009
      %v2035 = vmul.f32 %v1057, %v2009
      %v2036 = vmul.f32 %v1062, %v2009
      %v2037 = vmul.f32 %v1067, %v2009
      %v2038 = vmul.f32 %v1712, %v2009
      %v2039 = vmul.f32 %v1717, %v2009
      %v2040 = vmul.f32 %v1999, %v2009
      %v2041 = vmul.f32 %v2004, %v2009
      %v2042 = vadd.f32 %v1933, %v2010
      %v2043 = vadd.f32 %v1934, %v2011
      %v2044 = vadd.f32 %v1935, %v2012
      %v2045 = vadd.f32 %v1936, %v2013
      %v2046 = vadd.f32 %v1937, %v2014
      %v2047 = vadd.f32 %v1938, %v2015
      %v2048 = vadd.f32 %v1939, %v2016
      %v2049 = vadd.f32 %v1940, %v2017
      %v2050 = vadd.f32 %v1941, %v2018
      %v2051 = vadd.f32 %v1942, %v2019
      %v2052 = vadd.f32 %v1943, %v2020
      %v2053 = vadd.f32 %v1944, %v2021
      %v2054 = vadd.f32 %v1945, %v2022
      %v2055 = vadd.f32 %v1946, %v2023
      %v2056 = vadd.f32 %v1947, %v2024
      %v2057 = vadd.f32 %v1948, %v2025
      %v2058 = vadd.f32 %v1949, %v2026
      %v2059 = vadd.f32 %v1950, %v2027
      %v2060 = vadd.f32 %v1951, %v2028
      %v2061 = vadd.f32 %v1952, %v2029
      %v2062 = vadd.f32 %v1953, %v2030
      %v2063 = vadd.f32 %v1954, %v2031
      %v2064 = vadd.f32 %v1955, %v2032
      %v2065 = vadd.f32 %v1956, %v2033
      %v2066 = vadd.f32 %v1957, %v2034
      %v2067 = vadd.f32 %v1958, %v2035
      %v2068 = vadd.f32 %v1959, %v2036
      %v2069 = vadd.f32 %v1960, %v2037
      %v2070 = vadd.f32 %v1961, %v2038
      %v2071 = vadd.f32 %v1962, %v2039
      %v2072 = vadd.f32 %v1963, %v2040
      %v2073 = vadd.f32 %v1964, %v2041
      %v2077 = vrot.slane %v222, 5
      %v2078 = vrot.slane %v2077, 4
      %v2079 = vrot.slane %v223, 5
      %v2080 = vsel %vm1187, %v2078, %v2079
      %v2081 = vrot.slane %v2079, 4
      %v2082 = vrot.slane %v224, 5
      %v2083 = vsel %vm1187, %v2081, %v2082
      %s2086 = scalar_lea.vmem %s1, 8
      %v2087 = vld [vmem:[%s2086] sm:$0x1]
      %v2088 = vunpack.c.l.bf16 %v2080
      %v2089 = vunpack.c.l.bf16 %v2083
      %v2090 = vunpack.c.l.bf16 %v2087
      %2092 = vset.pattern.permute.xlu0 0
      %2093 = vperm.xlu0 %2092, %v2088
      %v2094 = vpop.permute.xlu0 %2093
      %2097 = vset.pattern.permute.xlu0 0
      %2098 = vperm.xlu0 %2097, %v2089
      %v2099 = vpop.permute.xlu0 %2098
      %v2101 = vlaneseq
      %v2102 = vshrl.u32 %v2101, 7
      %v2103 = vsub.s32 0, %v2102
      %v2104 = vrot.slane %v2090, %v2103
      %v2105 = vmul.f32 %v1390, %v2104
      %v2106 = vmul.f32 %v1395, %v2104
      %v2107 = vmul.f32 %v1400, %v2104
      %v2108 = vmul.f32 %v1405, %v2104
      %v2109 = vmul.f32 %v1410, %v2104
      %v2110 = vmul.f32 %v1415, %v2104
      %v2111 = vmul.f32 %v1420, %v2104
      %v2112 = vmul.f32 %v1425, %v2104
      %v2113 = vmul.f32 %v1430, %v2104
      %v2114 = vmul.f32 %v1435, %v2104
      %v2115 = vmul.f32 %v1440, %v2104
      %v2116 = vmul.f32 %v1445, %v2104
      %v2117 = vmul.f32 %v1450, %v2104
      %v2118 = vmul.f32 %v1455, %v2104
      %v2119 = vmul.f32 %v1460, %v2104
      %v2120 = vmul.f32 %v1465, %v2104
      %v2121 = vmul.f32 %v1470, %v2104
      %v2122 = vmul.f32 %v1475, %v2104
      %v2123 = vmul.f32 %v1480, %v2104
      %v2124 = vmul.f32 %v1485, %v2104
      %v2125 = vmul.f32 %v1490, %v2104
      %v2126 = vmul.f32 %v1495, %v2104
      %v2127 = vmul.f32 %v1500, %v2104
      %v2128 = vmul.f32 %v1505, %v2104
      %v2129 = vmul.f32 %v1510, %v2104
      %v2130 = vmul.f32 %v1515, %v2104
      %v2131 = vmul.f32 %v1520, %v2104
      %v2132 = vmul.f32 %v1525, %v2104
      %v2133 = vmul.f32 %v1807, %v2104
      %v2134 = vmul.f32 %v1812, %v2104
      %v2135 = vmul.f32 %v2094, %v2104
      %v2136 = vmul.f32 %v2099, %v2104
      %v2137 = vadd.f32 %v2042, %v2105
      %v2138 = vadd.f32 %v2043, %v2106
      %v2139 = vadd.f32 %v2044, %v2107
      %v2140 = vadd.f32 %v2045, %v2108
      %v2141 = vadd.f32 %v2046, %v2109
      %v2142 = vadd.f32 %v2047, %v2110
      %v2143 = vadd.f32 %v2048, %v2111
      %v2144 = vadd.f32 %v2049, %v2112
      %v2145 = vadd.f32 %v2050, %v2113
      %v2146 = vadd.f32 %v2051, %v2114
      %v2147 = vadd.f32 %v2052, %v2115
      %v2148 = vadd.f32 %v2053, %v2116
      %v2149 = vadd.f32 %v2054, %v2117
      %v2150 = vadd.f32 %v2055, %v2118
      %v2151 = vadd.f32 %v2056, %v2119
      %v2152 = vadd.f32 %v2057, %v2120
      %v2153 = vadd.f32 %v2058, %v2121
      %v2154 = vadd.f32 %v2059, %v2122
      %v2155 = vadd.f32 %v2060, %v2123
      %v2156 = vadd.f32 %v2061, %v2124
      %v2157 = vadd.f32 %v2062, %v2125
      %v2158 = vadd.f32 %v2063, %v2126
      %v2159 = vadd.f32 %v2064, %v2127
      %v2160 = vadd.f32 %v2065, %v2128
      %v2161 = vadd.f32 %v2066, %v2129
      %v2162 = vadd.f32 %v2067, %v2130
      %v2163 = vadd.f32 %v2068, %v2131
      %v2164 = vadd.f32 %v2069, %v2132
      %v2165 = vadd.f32 %v2070, %v2133
      %v2166 = vadd.f32 %v2071, %v2134
      %v2167 = vadd.f32 %v2072, %v2135
      %v2168 = vadd.f32 %v2073, %v2136
      %v2169 = vld [vmem:[%s2] sm:$0x1]
      %v2171 = vlaneseq
      %v2172 = vshrl.u32 %v2171, 7
      %v2173 = vsub.s32 0, %v2172
      %v2174 = vrot.slane %v2169, %v2173
      %v2176 = vadd.f32 %v2137, %v2174
      %v2177 = vadd.f32 %v2138, %v2174
      %v2178 = vadd.f32 %v2139, %v2174
      %v2179 = vadd.f32 %v2140, %v2174
      %v2180 = vadd.f32 %v2141, %v2174
      %v2181 = vadd.f32 %v2142, %v2174
      %v2182 = vadd.f32 %v2143, %v2174
      %v2183 = vadd.f32 %v2144, %v2174
      %v2184 = vadd.f32 %v2145, %v2174
      %v2185 = vadd.f32 %v2146, %v2174
      %v2186 = vadd.f32 %v2147, %v2174
      %v2187 = vadd.f32 %v2148, %v2174
      %v2188 = vadd.f32 %v2149, %v2174
      %v2189 = vadd.f32 %v2150, %v2174
      %v2190 = vadd.f32 %v2151, %v2174
      %v2191 = vadd.f32 %v2152, %v2174
      %v2192 = vadd.f32 %v2153, %v2174
      %v2193 = vadd.f32 %v2154, %v2174
      %v2194 = vadd.f32 %v2155, %v2174
      %v2195 = vadd.f32 %v2156, %v2174
      %v2196 = vadd.f32 %v2157, %v2174
      %v2197 = vadd.f32 %v2158, %v2174
      %v2198 = vadd.f32 %v2159, %v2174
      %v2199 = vadd.f32 %v2160, %v2174
      %v2200 = vadd.f32 %v2161, %v2174
      %v2201 = vadd.f32 %v2162, %v2174
      %v2202 = vadd.f32 %v2163, %v2174
      %v2203 = vadd.f32 %v2164, %v2174
      %v2204 = vadd.f32 %v2165, %v2174
      %v2205 = vadd.f32 %v2166, %v2174
      %v2206 = vadd.f32 %v2167, %v2174
      %v2207 = vadd.f32 %v2168, %v2174
      %v2208 = vmax.f32 %v2176, 0.0
      %v2209 = vmax.f32 %v2177, 0.0
      %v2210 = vmax.f32 %v2178, 0.0
      %v2211 = vmax.f32 %v2179, 0.0
      %v2212 = vmax.f32 %v2180, 0.0
      %v2213 = vmax.f32 %v2181, 0.0
      %v2214 = vmax.f32 %v2182, 0.0
      %v2215 = vmax.f32 %v2183, 0.0
      %v2216 = vmax.f32 %v2184, 0.0
      %v2217 = vmax.f32 %v2185, 0.0
      %v2218 = vmax.f32 %v2186, 0.0
      %v2219 = vmax.f32 %v2187, 0.0
      %v2220 = vmax.f32 %v2188, 0.0
      %v2221 = vmax.f32 %v2189, 0.0
      %v2222 = vmax.f32 %v2190, 0.0
      %v2223 = vmax.f32 %v2191, 0.0
      %v2224 = vmax.f32 %v2192, 0.0
      %v2225 = vmax.f32 %v2193, 0.0
      %v2226 = vmax.f32 %v2194, 0.0
      %v2227 = vmax.f32 %v2195, 0.0
      %v2228 = vmax.f32 %v2196, 0.0
      %v2229 = vmax.f32 %v2197, 0.0
      %v2230 = vmax.f32 %v2198, 0.0
      %v2231 = vmax.f32 %v2199, 0.0
      %v2232 = vmax.f32 %v2200, 0.0
      %v2233 = vmax.f32 %v2201, 0.0
      %v2234 = vmax.f32 %v2202, 0.0
      %v2235 = vmax.f32 %v2203, 0.0
      %v2236 = vmax.f32 %v2204, 0.0
      %v2237 = vmax.f32 %v2205, 0.0
      %v2238 = vmax.f32 %v2206, 0.0
      %v2239 = vmax.f32 %v2207, 0.0
      %v2240 = vpack.c.bf16 %v2209, %v2208
      %v2241 = vpack.c.bf16 %v2211, %v2210
      %v2242 = vpack.c.bf16 %v2213, %v2212
      %v2243 = vpack.c.bf16 %v2215, %v2214
      %v2244 = vpack.c.bf16 %v2217, %v2216
      %v2245 = vpack.c.bf16 %v2219, %v2218
      %v2246 = vpack.c.bf16 %v2221, %v2220
      %v2247 = vpack.c.bf16 %v2223, %v2222
      %v2248 = vpack.c.bf16 %v2225, %v2224
      %v2249 = vpack.c.bf16 %v2227, %v2226
      %v2250 = vpack.c.bf16 %v2229, %v2228
      %v2251 = vpack.c.bf16 %v2231, %v2230
      %v2252 = vpack.c.bf16 %v2233, %v2232
      %v2253 = vpack.c.bf16 %v2235, %v2234
      %v2254 = vpack.c.bf16 %v2237, %v2236
      %v2255 = vpack.c.bf16 %v2239, %v2238
      %v2272 = vunpack.c.l.b16 %v2240
      %v2273 = vunpack.c.h.b16 %v2240
      %v2274 = vunpack.c.l.b16 %v2241
      %v2275 = vunpack.c.h.b16 %v2241
      %v2276 = vunpack.c.l.b16 %v2242
      %v2277 = vunpack.c.h.b16 %v2242
      %v2278 = vunpack.c.l.b16 %v2243
      %v2279 = vunpack.c.h.b16 %v2243
      %v2280 = vunpack.c.l.b16 %v2244
      %v2281 = vunpack.c.h.b16 %v2244
      %v2282 = vunpack.c.l.b16 %v2245
      %v2283 = vunpack.c.h.b16 %v2245
      %v2284 = vunpack.c.l.b16 %v2246
      %v2285 = vunpack.c.h.b16 %v2246
      %v2286 = vunpack.c.l.b16 %v2247
      %v2287 = vunpack.c.h.b16 %v2247
      %v2288 = vunpack.c.l.b16 %v2248
      %v2289 = vunpack.c.h.b16 %v2248
      %v2290 = vunpack.c.l.b16 %v2249
      %v2291 = vunpack.c.h.b16 %v2249
      %v2292 = vunpack.c.l.b16 %v2250
      %v2293 = vunpack.c.h.b16 %v2250
      %v2294 = vunpack.c.l.b16 %v2251
      %v2295 = vunpack.c.h.b16 %v2251
      %v2296 = vunpack.c.l.b16 %v2252
      %v2297 = vunpack.c.h.b16 %v2252
      %v2298 = vunpack.c.l.b16 %v2253
      %v2299 = vunpack.c.h.b16 %v2253
      %v2300 = vunpack.c.l.b16 %v2254
      %v2301 = vunpack.c.h.b16 %v2254
      %v2302 = vunpack.c.l.b16 %v2255
      %v2303 = vunpack.c.h.b16 %v2255
      %v2304 = vpack.c.b16 %v2272, %v2272
      %v2305 = vpack.c.b16 %v2273, %v2273
      %v2306 = vpack.c.b16 %v2274, %v2274
      %v2307 = vpack.c.b16 %v2275, %v2275
      %v2308 = vpack.c.b16 %v2276, %v2276
      %v2309 = vpack.c.b16 %v2277, %v2277
      %v2310 = vpack.c.b16 %v2278, %v2278
      %v2311 = vpack.c.b16 %v2279, %v2279
      %v2312 = vpack.c.b16 %v2280, %v2280
      %v2313 = vpack.c.b16 %v2281, %v2281
      %v2314 = vpack.c.b16 %v2282, %v2282
      %v2315 = vpack.c.b16 %v2283, %v2283
      %v2316 = vpack.c.b16 %v2284, %v2284
      %v2317 = vpack.c.b16 %v2285, %v2285
      %v2318 = vpack.c.b16 %v2286, %v2286
      %v2319 = vpack.c.b16 %v2287, %v2287
      %v2320 = vpack.c.b16 %v2288, %v2288
      %v2321 = vpack.c.b16 %v2289, %v2289
      %v2322 = vpack.c.b16 %v2290, %v2290
      %v2323 = vpack.c.b16 %v2291, %v2291
      %v2324 = vpack.c.b16 %v2292, %v2292
      %v2325 = vpack.c.b16 %v2293, %v2293
      %v2326 = vpack.c.b16 %v2294, %v2294
      %v2327 = vpack.c.b16 %v2295, %v2295
      %v2328 = vpack.c.b16 %v2296, %v2296
      %v2329 = vpack.c.b16 %v2297, %v2297
      %v2330 = vpack.c.b16 %v2298, %v2298
      %v2331 = vpack.c.b16 %v2299, %v2299
      %v2332 = vpack.c.b16 %v2300, %v2300
      %v2333 = vpack.c.b16 %v2301, %v2301
      %v2334 = vpack.c.b16 %v2302, %v2302
      %v2335 = vpack.c.b16 %v2303, %v2303
      %vm2368 = vcmask 257024
      %2369 = vst.msk [vmem:[%s170] sm:$0xf] %vm2368, %v2304
      %2370 = vst.msk [vmem:[%s170 + $0x4] sm:$0xf] %vm2368, %v2305
      %2371 = vst.msk [vmem:[%s170 + $0x8] sm:$0xf] %vm2368, %v2306
      %2372 = vst.msk [vmem:[%s170 + $0xc] sm:$0xf] %vm2368, %v2307
      %2373 = vst.msk [vmem:[%s170 + $0x10] sm:$0xf] %vm2368, %v2308
      %2374 = vst.msk [vmem:[%s170 + $0x14] sm:$0xf] %vm2368, %v2309
      %2375 = vst.msk [vmem:[%s170 + $0x18] sm:$0xf] %vm2368, %v2310
      %2376 = vst.msk [vmem:[%s170 + $0x1c] sm:$0xf] %vm2368, %v2311
      %2377 = vst.msk [vmem:[%s170 + $0x20] sm:$0xf] %vm2368, %v2312
      %2378 = vst.msk [vmem:[%s170 + $0x24] sm:$0xf] %vm2368, %v2313
      %2379 = vst.msk [vmem:[%s170 + $0x28] sm:$0xf] %vm2368, %v2314
      %2380 = vst.msk [vmem:[%s170 + $0x2c] sm:$0xf] %vm2368, %v2315
      %2381 = vst.msk [vmem:[%s170 + $0x30] sm:$0xf] %vm2368, %v2316
      %2382 = vst.msk [vmem:[%s170 + $0x34] sm:$0xf] %vm2368, %v2317
      %2383 = vst.msk [vmem:[%s170 + $0x38] sm:$0xf] %vm2368, %v2318
      %2384 = vst.msk [vmem:[%s170 + $0x3c] sm:$0xf] %vm2368, %v2319
      %2385 = vst.msk [vmem:[%s170 + $0x40] sm:$0xf] %vm2368, %v2320
      %2386 = vst.msk [vmem:[%s170 + $0x44] sm:$0xf] %vm2368, %v2321
      %2387 = vst.msk [vmem:[%s170 + $0x48] sm:$0xf] %vm2368, %v2322
      %2388 = vst.msk [vmem:[%s170 + $0x4c] sm:$0xf] %vm2368, %v2323
      %2389 = vst.msk [vmem:[%s170 + $0x50] sm:$0xf] %vm2368, %v2324
      %2390 = vst.msk [vmem:[%s170 + $0x54] sm:$0xf] %vm2368, %v2325
      %2391 = vst.msk [vmem:[%s170 + $0x58] sm:$0xf] %vm2368, %v2326
      %2392 = vst.msk [vmem:[%s170 + $0x5c] sm:$0xf] %vm2368, %v2327
      %2393 = vst.msk [vmem:[%s170 + $0x60] sm:$0xf] %vm2368, %v2328
      %2394 = vst.msk [vmem:[%s170 + $0x64] sm:$0xf] %vm2368, %v2329
      %2395 = vst.msk [vmem:[%s170 + $0x68] sm:$0xf] %vm2368, %v2330
      %2396 = vst.msk [vmem:[%s170 + $0x6c] sm:$0xf] %vm2368, %v2331
      %2397 = vst.msk [vmem:[%s170 + $0x70] sm:$0xf] %vm2368, %v2332
      %2398 = vst.msk [vmem:[%s170 + $0x74] sm:$0xf] %vm2368, %v2333
      %2399 = vst.msk [vmem:[%s170 + $0x78] sm:$0xf] %vm2368, %v2334
      %2400 = vst.msk [vmem:[%s170 + $0x7c] sm:$0xf] %vm2368, %v2335
      %p2401 = scmp.lt.s32.totalorder %s14, 1
      %s2402 = scalar_select %p2401, %s14, 1
      %s2403 = smul.addr %s2402, 32
      %s2404 = smul.addr %s2403, 4
      %s2405 = scalar_lea.vmem %s3, %s2404
      // Predicated region
      $region33: #{_lambda_.3} parent=31 // pred_check
        %p2406 = pneg %p100
      $region34: #{_lambda_.3} parent=31 // pred_check_branch
        %2408 = sbr.rel (%p2406) target = $region36
      $region35: #{_lambda_.3} parent=31 // pred_region
        _
      $region36: #{_lambda_.3} parent=31 // pred_fallthru
        _
    $region32: #{_lambda_.3} parent=5 // pred_fallthru
      _
    %p2409 = scmp.le.s32.totalorder 2, %s9
    // Predicated region
    $region37: #{_lambda_.3} parent=5 // pred_check
      %p2410 = pneg %p2409
    $region38: #{_lambda_.3} parent=5 // pred_check_branch
      %2412 = sbr.rel (%p2410) target = $region40
    $region39: #{_lambda_.3} parent=5 // pred_region
      %s2413 = ssub.s32 %s9, 2
      // Predicated region
      $region41: #{_lambda_.3} parent=39 // pred_check
        %p2414 = pneg %p106
      $region42: #{_lambda_.3} parent=39 // pred_check_branch
        %2416 = sbr.rel (%p2414) target = $region44
      $region43: #{_lambda_.3} parent=39 // pred_region
        %p2417 = scmp.lt.s32.totalorder %s15, 1
        %s2418 = scalar_select %p2417, %s15, 1
        %s2419 = smul.addr %s2418, 32
        %s2420 = smul.addr %s2419, 4
        %s2421 = scalar_lea.vmem %s3, %s2420
      $region44: #{_lambda_.3} parent=39 // pred_fallthru
        _
    $region40: #{_lambda_.3} parent=5 // pred_fallthru
      _
  $region6: #{_lambda_.3} parent=0 // loop_footer
    %s13 = sadd.s32 1, %s9
  $region7: #{_lambda_.3} parent=0 // loop_footer_branch
    %8 = sbr.rel target = $region3
  $region8: #{_lambda_.3} parent=0 // loop_exit
    _

// kernel: _lambda_.5
$region0: #{_lambda_.5}
  #allocation0 [shape = 'u32[]', space=smem, size = 0x4, offset = 0x4, fixed_abs, tag = 'smem constant byte address 0x4 - core index']
  #allocation1 [shape = 'u32[144,128]{1,0:T(1,128)}', space=vmem, size = 0x12000, scoped, tag = 'internal scratch']
  %s0 = inlined_call_operand.vmem [shape: bf16[2,1024], index: 0, kind: input, shape index: {}]
  %s1 = inlined_call_operand.vmem [shape: bf16[1024,10], index: 1, kind: input, shape index: {}]
  %s2 = inlined_call_operand.vmem [shape: f32[1,10], index: 2, kind: input, shape index: {}]
  %s3 = inlined_call_operand.hbm [shape: f32[2,10], index: 3, kind: output, shape index: {}]
  %s4 = sld [smem:[#allocation0]]
  $region22: #{_lambda_.5} parent=0
    _
  %s6 = ssub.s32 1, %s4
  %s7 = scalar_select 0, %s6, %s4
  $region1: #{_lambda_.5} parent=0
    #allocation2 [shape = 'u8[1024]{0}', space=vmem, size = 0x400, scoped, tag = 'output window, operand 0, single buffered']
    #allocation3 [shape = 's32[1]{0}', space=sflag, size = 0x4, scoped, tag = 'scoped memory for _lambda_.5']
    %8 = vsyncpa [#allocation3], 0
    // Predicated region
    $region2: #{_lambda_.5} parent=1 // pred_check
      _
    $region3: #{_lambda_.5} parent=1 // pred_check_branch
      %10 = sbr.rel (0) target = $region5
    $region4: #{_lambda_.5} parent=1 // pred_region
      _
    $region5: #{_lambda_.5} parent=1 // pred_fallthru
      _
    // Predicated region
    $region6: #{_lambda_.5} parent=1 // pred_check
      _
    $region7: #{_lambda_.5} parent=1 // pred_check_branch
      %12 = sbr.rel (0) target = $region9
    $region8: #{_lambda_.5} parent=1 // pred_region
      _
    $region9: #{_lambda_.5} parent=1 // pred_fallthru
      _
    // Predicated region
    $region10: #{_lambda_.5} parent=1 // pred_check
      _
    $region11: #{_lambda_.5} parent=1 // pred_check_branch
      %14 = sbr.rel (0) target = $region13
    $region12: #{_lambda_.5} parent=1 // pred_region
      _
    $region13: #{_lambda_.5} parent=1 // pred_fallthru
      _
    %v16 = vld [vmem:[%s0] sm:$0xff]
    %v17 = vld [vmem:[%s1] sm:$0xf]
    %v18 = vld [vmem:[%s1 + $0x4] sm:$0xf]
    %v19 = vld [vmem:[%s1 + $0x8] sm:$0xf]
    %v20 = vld [vmem:[%s1 + $0xc] sm:$0xf]
    %v21 = vld [vmem:[%s1 + $0x10] sm:$0xf]
    %v22 = vld [vmem:[%s1 + $0x14] sm:$0xf]
    %v23 = vld [vmem:[%s1 + $0x18] sm:$0xf]
    %v24 = vld [vmem:[%s1 + $0x1c] sm:$0xf]
    %v25 = vld [vmem:[%s1 + $0x20] sm:$0xf]
    %v26 = vld [vmem:[%s1 + $0x24] sm:$0xf]
    %v27 = vld [vmem:[%s1 + $0x28] sm:$0xf]
    %v28 = vld [vmem:[%s1 + $0x2c] sm:$0xf]
    %v29 = vld [vmem:[%s1 + $0x30] sm:$0xf]
    %v30 = vld [vmem:[%s1 + $0x34] sm:$0xf]
    %v31 = vld [vmem:[%s1 + $0x38] sm:$0xf]
    %v32 = vld [vmem:[%s1 + $0x3c] sm:$0xf]
    %v33 = vld [vmem:[%s1 + $0x40] sm:$0xf]
    %v34 = vld [vmem:[%s1 + $0x44] sm:$0xf]
    %v35 = vld [vmem:[%s1 + $0x48] sm:$0xf]
    %v36 = vld [vmem:[%s1 + $0x4c] sm:$0xf]
    %v37 = vld [vmem:[%s1 + $0x50] sm:$0xf]
    %v38 = vld [vmem:[%s1 + $0x54] sm:$0xf]
    %v39 = vld [vmem:[%s1 + $0x58] sm:$0xf]
    %v40 = vld [vmem:[%s1 + $0x5c] sm:$0xf]
    %v41 = vld [vmem:[%s1 + $0x60] sm:$0xf]
    %v42 = vld [vmem:[%s1 + $0x64] sm:$0xf]
    %v43 = vld [vmem:[%s1 + $0x68] sm:$0xf]
    %v44 = vld [vmem:[%s1 + $0x6c] sm:$0xf]
    %v45 = vld [vmem:[%s1 + $0x70] sm:$0xf]
    %v46 = vld [vmem:[%s1 + $0x74] sm:$0xf]
    %v47 = vld [vmem:[%s1 + $0x78] sm:$0xf]
    %v48 = vld [vmem:[%s1 + $0x7c] sm:$0xf]
    %v49 = vld [vmem:[%s1 + $0x80] sm:$0xf]
    %v50 = vld [vmem:[%s1 + $0x84] sm:$0xf]
    %v51 = vld [vmem:[%s1 + $0x88] sm:$0xf]
    %v52 = vld [vmem:[%s1 + $0x8c] sm:$0xf]
    %v53 = vld [vmem:[%s1 + $0x90] sm:$0xf]
    %v54 = vld [vmem:[%s1 + $0x94] sm:$0xf]
    %v55 = vld [vmem:[%s1 + $0x98] sm:$0xf]
    %v56 = vld [vmem:[%s1 + $0x9c] sm:$0xf]
    %v57 = vld [vmem:[%s1 + $0xa0] sm:$0xf]
    %v58 = vld [vmem:[%s1 + $0xa4] sm:$0xf]
    %v59 = vld [vmem:[%s1 + $0xa8] sm:$0xf]
    %v60 = vld [vmem:[%s1 + $0xac] sm:$0xf]
    %v61 = vld [vmem:[%s1 + $0xb0] sm:$0xf]
    %v62 = vld [vmem:[%s1 + $0xb4] sm:$0xf]
    %v63 = vld [vmem:[%s1 + $0xb8] sm:$0xf]
    %v64 = vld [vmem:[%s1 + $0xbc] sm:$0xf]
    %v65 = vld [vmem:[%s1 + $0xc0] sm:$0xf]
    %v66 = vld [vmem:[%s1 + $0xc4] sm:$0xf]
    %v67 = vld [vmem:[%s1 + $0xc8] sm:$0xf]
    %v68 = vld [vmem:[%s1 + $0xcc] sm:$0xf]
    %v69 = vld [vmem:[%s1 + $0xd0] sm:$0xf]
    %v70 = vld [vmem:[%s1 + $0xd4] sm:$0xf]
    %v71 = vld [vmem:[%s1 + $0xd8] sm:$0xf]
    %v72 = vld [vmem:[%s1 + $0xdc] sm:$0xf]
    %v73 = vld [vmem:[%s1 + $0xe0] sm:$0xf]
    %v74 = vld [vmem:[%s1 + $0xe4] sm:$0xf]
    %v75 = vld [vmem:[%s1 + $0xe8] sm:$0xf]
    %v76 = vld [vmem:[%s1 + $0xec] sm:$0xf]
    %v77 = vld [vmem:[%s1 + $0xf0] sm:$0xf]
    %v78 = vld [vmem:[%s1 + $0xf4] sm:$0xf]
    %v79 = vld [vmem:[%s1 + $0xf8] sm:$0xf]
    %v80 = vld [vmem:[%s1 + $0xfc] sm:$0xf]
    %v81 = vld [vmem:[%s1 + $0x100] sm:$0xf]
    %v82 = vld [vmem:[%s1 + $0x104] sm:$0xf]
    %v83 = vld [vmem:[%s1 + $0x108] sm:$0xf]
    %v84 = vld [vmem:[%s1 + $0x10c] sm:$0xf]
    %v85 = vld [vmem:[%s1 + $0x110] sm:$0xf]
    %v86 = vld [vmem:[%s1 + $0x114] sm:$0xf]
    %v87 = vld [vmem:[%s1 + $0x118] sm:$0xf]
    %v88 = vld [vmem:[%s1 + $0x11c] sm:$0xf]
    %v89 = vld [vmem:[%s1 + $0x120] sm:$0xf]
    %v90 = vld [vmem:[%s1 + $0x124] sm:$0xf]
    %v91 = vld [vmem:[%s1 + $0x128] sm:$0xf]
    %v92 = vld [vmem:[%s1 + $0x12c] sm:$0xf]
    %v93 = vld [vmem:[%s1 + $0x130] sm:$0xf]
    %v94 = vld [vmem:[%s1 + $0x134] sm:$0xf]
    %v95 = vld [vmem:[%s1 + $0x138] sm:$0xf]
    %v96 = vld [vmem:[%s1 + $0x13c] sm:$0xf]
    %v97 = vld [vmem:[%s1 + $0x140] sm:$0xf]
    %v98 = vld [vmem:[%s1 + $0x144] sm:$0xf]
    %v99 = vld [vmem:[%s1 + $0x148] sm:$0xf]
    %v100 = vld [vmem:[%s1 + $0x14c] sm:$0xf]
    %v101 = vld [vmem:[%s1 + $0x150] sm:$0xf]
    %v102 = vld [vmem:[%s1 + $0x154] sm:$0xf]
    %v103 = vld [vmem:[%s1 + $0x158] sm:$0xf]
    %v104 = vld [vmem:[%s1 + $0x15c] sm:$0xf]
    %v105 = vld [vmem:[%s1 + $0x160] sm:$0xf]
    %v106 = vld [vmem:[%s1 + $0x164] sm:$0xf]
    %v107 = vld [vmem:[%s1 + $0x168] sm:$0xf]
    %v108 = vld [vmem:[%s1 + $0x16c] sm:$0xf]
    %v109 = vld [vmem:[%s1 + $0x170] sm:$0xf]
    %v110 = vld [vmem:[%s1 + $0x174] sm:$0xf]
    %v111 = vld [vmem:[%s1 + $0x178] sm:$0xf]
    %v112 = vld [vmem:[%s1 + $0x17c] sm:$0xf]
    %v113 = vld [vmem:[%s1 + $0x180] sm:$0xf]
    %v114 = vld [vmem:[%s1 + $0x184] sm:$0xf]
    %v115 = vld [vmem:[%s1 + $0x188] sm:$0xf]
    %v116 = vld [vmem:[%s1 + $0x18c] sm:$0xf]
    %v117 = vld [vmem:[%s1 + $0x190] sm:$0xf]
    %v118 = vld [vmem:[%s1 + $0x194] sm:$0xf]
    %v119 = vld [vmem:[%s1 + $0x198] sm:$0xf]
    %v120 = vld [vmem:[%s1 + $0x19c] sm:$0xf]
    %v121 = vld [vmem:[%s1 + $0x1a0] sm:$0xf]
    %v122 = vld [vmem:[%s1 + $0x1a4] sm:$0xf]
    %v123 = vld [vmem:[%s1 + $0x1a8] sm:$0xf]
    %v124 = vld [vmem:[%s1 + $0x1ac] sm:$0xf]
    %v125 = vld [vmem:[%s1 + $0x1b0] sm:$0xf]
    %v126 = vld [vmem:[%s1 + $0x1b4] sm:$0xf]
    %v127 = vld [vmem:[%s1 + $0x1b8] sm:$0xf]
    %v128 = vld [vmem:[%s1 + $0x1bc] sm:$0xf]
    %v129 = vld [vmem:[%s1 + $0x1c0] sm:$0xf]
    %v130 = vld [vmem:[%s1 + $0x1c4] sm:$0xf]
    %v131 = vld [vmem:[%s1 + $0x1c8] sm:$0xf]
    %v132 = vld [vmem:[%s1 + $0x1cc] sm:$0xf]
    %v133 = vld [vmem:[%s1 + $0x1d0] sm:$0xf]
    %v134 = vld [vmem:[%s1 + $0x1d4] sm:$0xf]
    %v135 = vld [vmem:[%s1 + $0x1d8] sm:$0xf]
    %v136 = vld [vmem:[%s1 + $0x1dc] sm:$0xf]
    %v137 = vld [vmem:[%s1 + $0x1e0] sm:$0xf]
    %v138 = vld [vmem:[%s1 + $0x1e4] sm:$0xf]
    %v139 = vld [vmem:[%s1 + $0x1e8] sm:$0xf]
    %v140 = vld [vmem:[%s1 + $0x1ec] sm:$0xf]
    %v141 = vld [vmem:[%s1 + $0x1f0] sm:$0xf]
    %v142 = vld [vmem:[%s1 + $0x1f4] sm:$0xf]
    %v143 = vld [vmem:[%s1 + $0x1f8] sm:$0xf]
    %v144 = vld [vmem:[%s1 + $0x1fc] sm:$0xf]
    %v145 = vld [vmem:[%s2] sm:$0x1]
    %v147 = vlaneseq
    %v148 = vshrl.u32 %v147, 7
    %v149 = vsub.s32 0, %v148
    %v150 = vrot.slane %v145, %v149
    %v153 = vcombine.high %v16, %v16
    %v155 = vunpack.c.l.s4 1966171168
    %v156 = vunpack.c.0.s8 %v155
    %v157 = vlaneseq
    %v158 = vshrl.u32 %v157, 7
    %v159 = vsub.s32 %v156, %v158
    %v160 = vrot.slane %v16, %v159
    %v162 = vunpack.c.l.s4 1966171168
    %v163 = vunpack.c.0.s8 %v162
    %v164 = vlaneseq
    %v165 = vshrl.u32 %v164, 7
    %v166 = vsub.s32 %v163, %v165
    %v167 = vrot.slane %v153, %v166
    %v168 = vcombine.high %v160, %v160
    %v169 = vcombine.high %v167, %v167
    %v171 = vunpack.c.l.s4 1966171168
    %v172 = vunpack.c.0.s8 %v171
    %v173 = vlaneseq
    %v174 = vshrl.u32 %v173, 7
    %v175 = vsub.s32 %v172, %v174
    %v176 = vrot.slane %v160, %v175
    %v178 = vunpack.c.l.s4 1966171168
    %v179 = vunpack.c.0.s8 %v178
    %v180 = vlaneseq
    %v181 = vshrl.u32 %v180, 7
    %v182 = vsub.s32 %v179, %v181
    %v183 = vrot.slane %v167, %v182
    %v185 = vunpack.c.l.s4 1966171168
    %v186 = vunpack.c.0.s8 %v185
    %v187 = vlaneseq
    %v188 = vshrl.u32 %v187, 7
    %v189 = vsub.s32 %v186, %v188
    %v190 = vrot.slane %v168, %v189
    %v192 = vunpack.c.l.s4 1966171168
    %v193 = vunpack.c.0.s8 %v192
    %v194 = vlaneseq
    %v195 = vshrl.u32 %v194, 7
    %v196 = vsub.s32 %v193, %v195
    %v197 = vrot.slane %v169, %v196
    %v198 = vcombine.high %v176, %v176
    %v199 = vcombine.high %v183, %v183
    %v200 = vcombine.high %v190, %v190
    %v201 = vcombine.high %v197, %v197
    %v338 = vunpack.c.l.b16 %v17
    %v339 = vunpack.c.l.b16 %v18
    %v340 = vunpack.c.l.b16 %v19
    %v341 = vunpack.c.l.b16 %v20
    %v342 = vunpack.c.l.b16 %v21
    %v343 = vunpack.c.l.b16 %v22
    %v344 = vunpack.c.l.b16 %v23
    %v345 = vunpack.c.l.b16 %v24
    %v346 = vunpack.c.l.b16 %v25
    %v347 = vunpack.c.l.b16 %v26
    %v348 = vunpack.c.l.b16 %v27
    %v349 = vunpack.c.l.b16 %v28
    %v350 = vunpack.c.l.b16 %v29
    %v351 = vunpack.c.l.b16 %v30
    %v352 = vunpack.c.l.b16 %v31
    %v353 = vunpack.c.l.b16 %v32
    %v354 = vunpack.c.l.b16 %v33
    %v355 = vunpack.c.l.b16 %v34
    %v356 = vunpack.c.l.b16 %v35
    %v357 = vunpack.c.l.b16 %v36
    %v358 = vunpack.c.l.b16 %v37
    %v359 = vunpack.c.l.b16 %v38
    %v360 = vunpack.c.l.b16 %v39
    %v361 = vunpack.c.l.b16 %v40
    %v362 = vunpack.c.l.b16 %v41
    %v363 = vunpack.c.l.b16 %v42
    %v364 = vunpack.c.l.b16 %v43
    %v365 = vunpack.c.l.b16 %v44
    %v366 = vunpack.c.l.b16 %v45
    %v367 = vunpack.c.l.b16 %v46
    %v368 = vunpack.c.l.b16 %v47
    %v369 = vunpack.c.l.b16 %v48
    %v370 = vunpack.c.l.b16 %v49
    %v371 = vunpack.c.l.b16 %v50
    %v372 = vunpack.c.l.b16 %v51
    %v373 = vunpack.c.l.b16 %v52
    %v374 = vunpack.c.l.b16 %v53
    %v375 = vunpack.c.l.b16 %v54
    %v376 = vunpack.c.l.b16 %v55
    %v377 = vunpack.c.l.b16 %v56
    %v378 = vunpack.c.l.b16 %v57
    %v379 = vunpack.c.l.b16 %v58
    %v380 = vunpack.c.l.b16 %v59
    %v381 = vunpack.c.l.b16 %v60
    %v382 = vunpack.c.l.b16 %v61
    %v383 = vunpack.c.l.b16 %v62
    %v384 = vunpack.c.l.b16 %v63
    %v385 = vunpack.c.l.b16 %v64
    %v386 = vunpack.c.l.b16 %v65
    %v387 = vunpack.c.l.b16 %v66
    %v388 = vunpack.c.l.b16 %v67
    %v389 = vunpack.c.l.b16 %v68
    %v390 = vunpack.c.l.b16 %v69
    %v391 = vunpack.c.l.b16 %v70
    %v392 = vunpack.c.l.b16 %v71
    %v393 = vunpack.c.l.b16 %v72
    %v394 = vunpack.c.l.b16 %v73
    %v395 = vunpack.c.l.b16 %v74
    %v396 = vunpack.c.l.b16 %v75
    %v397 = vunpack.c.l.b16 %v76
    %v398 = vunpack.c.l.b16 %v77
    %v399 = vunpack.c.l.b16 %v78
    %v400 = vunpack.c.l.b16 %v79
    %v401 = vunpack.c.l.b16 %v80
    %v402 = vunpack.c.l.b16 %v81
    %v403 = vunpack.c.l.b16 %v82
    %v404 = vunpack.c.l.b16 %v83
    %v405 = vunpack.c.l.b16 %v84
    %v406 = vunpack.c.l.b16 %v85
    %v407 = vunpack.c.l.b16 %v86
    %v408 = vunpack.c.l.b16 %v87
    %v409 = vunpack.c.l.b16 %v88
    %v410 = vunpack.c.l.b16 %v89
    %v411 = vunpack.c.l.b16 %v90
    %v412 = vunpack.c.l.b16 %v91
    %v413 = vunpack.c.l.b16 %v92
    %v414 = vunpack.c.l.b16 %v93
    %v415 = vunpack.c.l.b16 %v94
    %v416 = vunpack.c.l.b16 %v95
    %v417 = vunpack.c.l.b16 %v96
    %v418 = vunpack.c.l.b16 %v97
    %v419 = vunpack.c.l.b16 %v98
    %v420 = vunpack.c.l.b16 %v99
    %v421 = vunpack.c.l.b16 %v100
    %v422 = vunpack.c.l.b16 %v101
    %v423 = vunpack.c.l.b16 %v102
    %v424 = vunpack.c.l.b16 %v103
    %v425 = vunpack.c.l.b16 %v104
    %v426 = vunpack.c.l.b16 %v105
    %v427 = vunpack.c.l.b16 %v106
    %v428 = vunpack.c.l.b16 %v107
    %v429 = vunpack.c.l.b16 %v108
    %v430 = vunpack.c.l.b16 %v109
    %v431 = vunpack.c.l.b16 %v110
    %v432 = vunpack.c.l.b16 %v111
    %v433 = vunpack.c.l.b16 %v112
    %v434 = vunpack.c.l.b16 %v113
    %v435 = vunpack.c.l.b16 %v114
    %v436 = vunpack.c.l.b16 %v115
    %v437 = vunpack.c.l.b16 %v116
    %v438 = vunpack.c.l.b16 %v117
    %v439 = vunpack.c.l.b16 %v118
    %v440 = vunpack.c.l.b16 %v119
    %v441 = vunpack.c.l.b16 %v120
    %v442 = vunpack.c.l.b16 %v121
    %v443 = vunpack.c.l.b16 %v122
    %v444 = vunpack.c.l.b16 %v123
    %v445 = vunpack.c.l.b16 %v124
    %v446 = vunpack.c.l.b16 %v125
    %v447 = vunpack.c.l.b16 %v126
    %v448 = vunpack.c.l.b16 %v127
    %v449 = vunpack.c.l.b16 %v128
    %v450 = vunpack.c.l.b16 %v129
    %v451 = vunpack.c.l.b16 %v130
    %v452 = vunpack.c.l.b16 %v131
    %v453 = vunpack.c.l.b16 %v132
    %v454 = vunpack.c.l.b16 %v133
    %v455 = vunpack.c.l.b16 %v134
    %v456 = vunpack.c.l.b16 %v135
    %v457 = vunpack.c.l.b16 %v136
    %v458 = vunpack.c.l.b16 %v137
    %v459 = vunpack.c.l.b16 %v138
    %v460 = vunpack.c.l.b16 %v139
    %v461 = vunpack.c.l.b16 %v140
    %v462 = vunpack.c.l.b16 %v141
    %v463 = vunpack.c.l.b16 %v142
    %v464 = vunpack.c.l.b16 %v143
    %v465 = vunpack.c.l.b16 %v144
    %v466 = vpack.c.b16 %v339, %v338
    %v467 = vpack.c.b16 %v341, %v340
    %v468 = vpack.c.b16 %v343, %v342
    %v469 = vpack.c.b16 %v345, %v344
    %v470 = vpack.c.b16 %v347, %v346
    %v471 = vpack.c.b16 %v349, %v348
    %v472 = vpack.c.b16 %v351, %v350
    %v473 = vpack.c.b16 %v353, %v352
    %v474 = vpack.c.b16 %v355, %v354
    %v475 = vpack.c.b16 %v357, %v356
    %v476 = vpack.c.b16 %v359, %v358
    %v477 = vpack.c.b16 %v361, %v360
    %v478 = vpack.c.b16 %v363, %v362
    %v479 = vpack.c.b16 %v365, %v364
    %v480 = vpack.c.b16 %v367, %v366
    %v481 = vpack.c.b16 %v369, %v368
    %v482 = vpack.c.b16 %v371, %v370
    %v483 = vpack.c.b16 %v373, %v372
    %v484 = vpack.c.b16 %v375, %v374
    %v485 = vpack.c.b16 %v377, %v376
    %v486 = vpack.c.b16 %v379, %v378
    %v487 = vpack.c.b16 %v381, %v380
    %v488 = vpack.c.b16 %v383, %v382
    %v489 = vpack.c.b16 %v385, %v384
    %v490 = vpack.c.b16 %v387, %v386
    %v491 = vpack.c.b16 %v389, %v388
    %v492 = vpack.c.b16 %v391, %v390
    %v493 = vpack.c.b16 %v393, %v392
    %v494 = vpack.c.b16 %v395, %v394
    %v495 = vpack.c.b16 %v397, %v396
    %v496 = vpack.c.b16 %v399, %v398
    %v497 = vpack.c.b16 %v401, %v400
    %v498 = vpack.c.b16 %v403, %v402
    %v499 = vpack.c.b16 %v405, %v404
    %v500 = vpack.c.b16 %v407, %v406
    %v501 = vpack.c.b16 %v409, %v408
    %v502 = vpack.c.b16 %v411, %v410
    %v503 = vpack.c.b16 %v413, %v412
    %v504 = vpack.c.b16 %v415, %v414
    %v505 = vpack.c.b16 %v417, %v416
    %v506 = vpack.c.b16 %v419, %v418
    %v507 = vpack.c.b16 %v421, %v420
    %v508 = vpack.c.b16 %v423, %v422
    %v509 = vpack.c.b16 %v425, %v424
    %v510 = vpack.c.b16 %v427, %v426
    %v511 = vpack.c.b16 %v429, %v428
    %v512 = vpack.c.b16 %v431, %v430
    %v513 = vpack.c.b16 %v433, %v432
    %v514 = vpack.c.b16 %v435, %v434
    %v515 = vpack.c.b16 %v437, %v436
    %v516 = vpack.c.b16 %v439, %v438
    %v517 = vpack.c.b16 %v441, %v440
    %v518 = vpack.c.b16 %v443, %v442
    %v519 = vpack.c.b16 %v445, %v444
    %v520 = vpack.c.b16 %v447, %v446
    %v521 = vpack.c.b16 %v449, %v448
    %v522 = vpack.c.b16 %v451, %v450
    %v523 = vpack.c.b16 %v453, %v452
    %v524 = vpack.c.b16 %v455, %v454
    %v525 = vpack.c.b16 %v457, %v456
    %v526 = vpack.c.b16 %v459, %v458
    %v527 = vpack.c.b16 %v461, %v460
    %v528 = vpack.c.b16 %v463, %v462
    %v529 = vpack.c.b16 %v465, %v464
    %594 = vmatprep.subr.bf16.mxu0 0
    %595 = vmatpush1.bf16.msra.mxu0 %v466
    %596 = vmatprep.subr.bf16.mxu0 0
    %597 = vmatpush1.bf16.msra.mxu0 %v467
    %598 = vmatprep.subr.bf16.mxu0 0
    %599 = vmatpush1.bf16.msra.mxu0 %v468
    %600 = vmatprep.subr.bf16.mxu0 0
    %601 = vmatpush1.bf16.msra.mxu0 %v469
    %602 = vmatprep.subr.bf16.mxu0 0
    %603 = vmatpush1.bf16.msra.mxu0 %v470
    %604 = vmatprep.subr.bf16.mxu0 0
    %605 = vmatpush1.bf16.msra.mxu0 %v471
    %606 = vmatprep.subr.bf16.mxu0 0
    %607 = vmatpush1.bf16.msra.mxu0 %v472
    %608 = vmatprep.subr.bf16.mxu0 0
    %609 = vmatpush1.bf16.msra.mxu0 %v473
    %610 = vmatprep.subr.bf16.mxu0 0
    %611 = vmatpush1.bf16.msra.mxu0 %v474
    %612 = vmatprep.subr.bf16.mxu0 0
    %613 = vmatpush1.bf16.msra.mxu0 %v475
    %614 = vmatprep.subr.bf16.mxu0 0
    %615 = vmatpush1.bf16.msra.mxu0 %v476
    %616 = vmatprep.subr.bf16.mxu0 0
    %617 = vmatpush1.bf16.msra.mxu0 %v477
    %618 = vmatprep.subr.bf16.mxu0 0
    %619 = vmatpush1.bf16.msra.mxu0 %v478
    %620 = vmatprep.subr.bf16.mxu0 0
    %621 = vmatpush1.bf16.msra.mxu0 %v479
    %622 = vmatprep.subr.bf16.mxu0 0
    %623 = vmatpush1.bf16.msra.mxu0 %v480
    %624 = vmatprep.subr.bf16.mxu0 0
    %625 = vmatpush1.bf16.msra.mxu0 %v481
    %626 = vmatprep.mubr.bf16.mxu0 %v190
    %627 = vmatmul.mubr.bf16.gmra.mrb[0].mxu0 %v176
    %v628 = vpop.f32.mrb[0].mxu0
    %v629 = vadd.f32 %v150, %v628
    %v630 = vpop.f32.mrb[0].mxu0
    %v631 = vpop.f32.mrb[0].mxu0
    %v632 = vpop.f32.mrb[0].mxu0
    %633 = vdwg.mxu0
    %634 = vmatprep.subr.bf16.mxu0 0
    %635 = vmatpush1.bf16.msra.mxu0 %v482
    %636 = vmatprep.subr.bf16.mxu0 0
    %637 = vmatpush1.bf16.msra.mxu0 %v483
    %638 = vmatprep.subr.bf16.mxu0 0
    %639 = vmatpush1.bf16.msra.mxu0 %v484
    %640 = vmatprep.subr.bf16.mxu0 0
    %641 = vmatpush1.bf16.msra.mxu0 %v485
    %642 = vmatprep.subr.bf16.mxu0 0
    %643 = vmatpush1.bf16.msra.mxu0 %v486
    %644 = vmatprep.subr.bf16.mxu0 0
    %645 = vmatpush1.bf16.msra.mxu0 %v487
    %646 = vmatprep.subr.bf16.mxu0 0
    %647 = vmatpush1.bf16.msra.mxu0 %v488
    %648 = vmatprep.subr.bf16.mxu0 0
    %649 = vmatpush1.bf16.msra.mxu0 %v489
    %650 = vmatprep.subr.bf16.mxu0 0
    %651 = vmatpush1.bf16.msra.mxu0 %v490
    %652 = vmatprep.subr.bf16.mxu0 0
    %653 = vmatpush1.bf16.msra.mxu0 %v491
    %654 = vmatprep.subr.bf16.mxu0 0
    %655 = vmatpush1.bf16.msra.mxu0 %v492
    %656 = vmatprep.subr.bf16.mxu0 0
    %657 = vmatpush1.bf16.msra.mxu0 %v493
    %658 = vmatprep.subr.bf16.mxu0 0
    %659 = vmatpush1.bf16.msra.mxu0 %v494
    %660 = vmatprep.subr.bf16.mxu0 0
    %661 = vmatpush1.bf16.msra.mxu0 %v495
    %662 = vmatprep.subr.bf16.mxu0 0
    %663 = vmatpush1.bf16.msra.mxu0 %v496
    %664 = vmatprep.subr.bf16.mxu0 0
    %665 = vmatpush1.bf16.msra.mxu0 %v497
    %666 = vmatprep.mubr.bf16.mxu0 %v200
    %667 = vmatmul.mubr.bf16.gmra.mrb[0].mxu0 %v198
    %v668 = vpop.f32.mrb[0].mxu0
    %v669 = vadd.f32 %v629, %v668
    %v670 = vpop.f32.mrb[0].mxu0
    %v671 = vpop.f32.mrb[0].mxu0
    %v672 = vpop.f32.mrb[0].mxu0
    %673 = vdwg.mxu0
    %674 = vmatprep.subr.bf16.mxu0 0
    %675 = vmatpush1.bf16.msra.mxu0 %v498
    %676 = vmatprep.subr.bf16.mxu0 0
    %677 = vmatpush1.bf16.msra.mxu0 %v499
    %678 = vmatprep.subr.bf16.mxu0 0
    %679 = vmatpush1.bf16.msra.mxu0 %v500
    %680 = vmatprep.subr.bf16.mxu0 0
    %681 = vmatpush1.bf16.msra.mxu0 %v501
    %682 = vmatprep.subr.bf16.mxu0 0
    %683 = vmatpush1.bf16.msra.mxu0 %v502
    %684 = vmatprep.subr.bf16.mxu0 0
    %685 = vmatpush1.bf16.msra.mxu0 %v503
    %686 = vmatprep.subr.bf16.mxu0 0
    %687 = vmatpush1.bf16.msra.mxu0 %v504
    %688 = vmatprep.subr.bf16.mxu0 0
    %689 = vmatpush1.bf16.msra.mxu0 %v505
    %690 = vmatprep.subr.bf16.mxu0 0
    %691 = vmatpush1.bf16.msra.mxu0 %v506
    %692 = vmatprep.subr.bf16.mxu0 0
    %693 = vmatpush1.bf16.msra.mxu0 %v507
    %694 = vmatprep.subr.bf16.mxu0 0
    %695 = vmatpush1.bf16.msra.mxu0 %v508
    %696 = vmatprep.subr.bf16.mxu0 0
    %697 = vmatpush1.bf16.msra.mxu0 %v509
    %698 = vmatprep.subr.bf16.mxu0 0
    %699 = vmatpush1.bf16.msra.mxu0 %v510
    %700 = vmatprep.subr.bf16.mxu0 0
    %701 = vmatpush1.bf16.msra.mxu0 %v511
    %702 = vmatprep.subr.bf16.mxu0 0
    %703 = vmatpush1.bf16.msra.mxu0 %v512
    %704 = vmatprep.subr.bf16.mxu0 0
    %705 = vmatpush1.bf16.msra.mxu0 %v513
    %706 = vmatprep.mubr.bf16.mxu0 %v197
    %707 = vmatmul.mubr.bf16.gmra.mrb[0].mxu0 %v183
    %v708 = vpop.f32.mrb[0].mxu0
    %v709 = vadd.f32 %v669, %v708
    %v710 = vpop.f32.mrb[0].mxu0
    %v711 = vpop.f32.mrb[0].mxu0
    %v712 = vpop.f32.mrb[0].mxu0
    %713 = vdwg.mxu0
    %714 = vmatprep.subr.bf16.mxu0 0
    %715 = vmatpush1.bf16.msra.mxu0 %v514
    %716 = vmatprep.subr.bf16.mxu0 0
    %717 = vmatpush1.bf16.msra.mxu0 %v515
    %718 = vmatprep.subr.bf16.mxu0 0
    %719 = vmatpush1.bf16.msra.mxu0 %v516
    %720 = vmatprep.subr.bf16.mxu0 0
    %721 = vmatpush1.bf16.msra.mxu0 %v517
    %722 = vmatprep.subr.bf16.mxu0 0
    %723 = vmatpush1.bf16.msra.mxu0 %v518
    %724 = vmatprep.subr.bf16.mxu0 0
    %725 = vmatpush1.bf16.msra.mxu0 %v519
    %726 = vmatprep.subr.bf16.mxu0 0
    %727 = vmatpush1.bf16.msra.mxu0 %v520
    %728 = vmatprep.subr.bf16.mxu0 0
    %729 = vmatpush1.bf16.msra.mxu0 %v521
    %730 = vmatprep.subr.bf16.mxu0 0
    %731 = vmatpush1.bf16.msra.mxu0 %v522
    %732 = vmatprep.subr.bf16.mxu0 0
    %733 = vmatpush1.bf16.msra.mxu0 %v523
    %734 = vmatprep.subr.bf16.mxu0 0
    %735 = vmatpush1.bf16.msra.mxu0 %v524
    %736 = vmatprep.subr.bf16.mxu0 0
    %737 = vmatpush1.bf16.msra.mxu0 %v525
    %738 = vmatprep.subr.bf16.mxu0 0
    %739 = vmatpush1.bf16.msra.mxu0 %v526
    %740 = vmatprep.subr.bf16.mxu0 0
    %741 = vmatpush1.bf16.msra.mxu0 %v527
    %742 = vmatprep.subr.bf16.mxu0 0
    %743 = vmatpush1.bf16.msra.mxu0 %v528
    %744 = vmatprep.subr.bf16.mxu0 0
    %745 = vmatpush1.bf16.msra.mxu0 %v529
    %746 = vmatprep.mubr.bf16.mxu0 %v201
    %747 = vmatmul.mubr.bf16.gmra.mrb[0].mxu0 %v199
    %v748 = vpop.f32.mrb[0].mxu0
    %v749 = vadd.f32 %v709, %v748
    %v750 = vpop.f32.mrb[0].mxu0
    %v751 = vpop.f32.mrb[0].mxu0
    %v752 = vpop.f32.mrb[0].mxu0
    %753 = vdwg.mxu0
    %vm754 = vcmask 74752
    %v755 = vsel %vm754, %v749, -inf
    %756 = vmax.xlane.f32.xlu0 %v755
    %v757 = vpop.xlane.xlu0 %756
    %v758 = vsub.f32 %v749, %v757
    %v759 = vmul.f32 %v758, 1.442695
    %v760 = vpow.pop %v759
    %v761 = vsel %vm754, %v760, 0.0
    %762 = vadd.xlane.f32.xlu0 %v761
    %v763 = vpop.xlane.xlu0 %762
    %v764 = vrcp.pop %v763
    %v765 = vmul.f32 %v760, %v764
    %766 = vst.msk [vmem:[#allocation2] sm:$0x3] %vm754, %v765
    // Predicated region
    $region14: #{_lambda_.5} parent=1 // pred_check
      _
    $region15: #{_lambda_.5} parent=1 // pred_check_branch
      %768 = sbr.rel (0) target = $region17
    $region16: #{_lambda_.5} parent=1 // pred_region
      %s770 = ssub.s32 32, 32
      %771 = vsyncadd [#allocation3], %s770
      %s773 = sshll.u32 [#allocation2], 4
      %s774 = int_to_ptr.vmem [resolvable:$true] %s773
      %776 = dma.vmem_to_hbm [thread:$0]  %s774, 32, %s3, [#allocation3]
    $region17: #{_lambda_.5} parent=1 // pred_fallthru
      _
    // Predicated region
    $region18: #{_lambda_.5} parent=1 // pred_check
      _
    $region19: #{_lambda_.5} parent=1 // pred_check_branch
      %778 = sbr.rel (0) target = $region21
    $region20: #{_lambda_.5} parent=1 // pred_region
      %779 = dma.done [#allocation3], 32
    $region21: #{_lambda_.5} parent=1 // pred_fallthru
      _
    %780 = vsyncpa [#allocation3], 1

</llo_original>
